<compile_context>
chip_gen: v7x
topology: tpu7x:2x2x1
jax: 0.10.0
libtpu: 0.0.40
codegen_flags: <defaults>
</compile_context>

<pallas_src>
import jax
import jax.numpy as jnp
from jax import lax
from jax.experimental import pallas as pl
from jax.experimental.pallas import tpu as pltpu

BN_EPS = 1e-5


# ----------------------------- fused UpSampleBlock kernel -----------------------------

def _upsample_block_kernel(x_ref, sv_s_ref, sv_b_ref, m_res_ref, b_res_ref,
                           ah_ref, mw_ref, m_c_ref, b_c_ref, o_ref):
    """Whole UpSampleBlock for one image, in lane-fused (rows, width*channels) layout.

    x_ref     : (1, H, W*Ci)            input activation
    sv_s_ref  : (3, H, H)               0/1 vertical shift matrices (small spatial)
    sv_b_ref  : (3, Ho, Ho)             0/1 vertical shift matrices (upsampled spatial)
    m_res_ref : (4, 3, W*Ci, W*Ci)      banded conv weights for res1.conv1/2, res2.conv1/2
    b_res_ref : (4, 1, W*Ci)            bias rows for the 4 residual-path convs
    ah_ref    : (Ho, H)                 bilinear interpolation matrix (rows)
    mw_ref    : (W*Ci, Wo*Ci)           bilinear interpolation matrix (cols, kron'd with I_Ci)
    m_c_ref   : (3, Wo*Ci, Wo*Co)       banded weights of the final ConvBlock
    b_c_ref   : (1, Wo*Co)              bias row of the final ConvBlock
    o_ref     : (1, Ho, Wo*Co)          output (lane-dense store)
    """
    f32 = jnp.float32

    def conv3x3(x, sv_ref, m_ref, b_row, idx=None):
        # out = sum_dy  Sv[dy] @ (x @ M[dy])  + bias_row
        #   M[dy] encodes the 3 horizontal taps + zero padding (block-banded),
        #   Sv[dy] encodes the vertical tap shift + zero padding (0/1 matrix).
        rows, cols = x.shape[0], m_ref.shape[-1]
        acc = jnp.zeros((rows, cols), f32)
        for dy in range(3):
            m = m_ref[idx, dy] if idx is not None else m_ref[dy]
            p = jnp.dot(x, m, preferred_element_type=f32)                 # (rows, cols)
            acc = acc + jnp.dot(sv_ref[dy], p, preferred_element_type=f32)
        return acc + b_row                                                # folded-BN bias

    def res_block(x, k):
        h = jnp.maximum(conv3x3(x, sv_s_ref, m_res_ref, b_res_ref[2 * k], 2 * k), 0.0)
        # TODO(synk): F.dropout(p=0.1) inside ResBlock modeled as identity.
        y = conv3x3(h, sv_s_ref, m_res_ref, b_res_ref[2 * k + 1], 2 * k + 1) + x
        return jnp.maximum(y, 0.0)

    x = x_ref[0].astype(f32)                                              # (H, W*Ci)
    x = res_block(x, 0)                                                   # ResBlock 1
    # TODO(synk): outer F.dropout(p=0.1) after each ResBlock modeled as identity.
    x = res_block(x, 1)                                                   # ResBlock 2

    # bilinear x2 (align_corners=False) as two matmuls, no transpose needed.
    u = jnp.dot(ah_ref[...], x, preferred_element_type=f32)               # (Ho, W*Ci)
    u = jnp.dot(u, mw_ref[...], preferred_element_type=f32)               # (Ho, Wo*Ci)

    # final ConvBlock(in_c -> out_c, ReLU)
    y = jnp.maximum(conv3x3(u, sv_b_ref, m_c_ref, b_c_ref[...]), 0.0)     # (Ho, Wo*Co)
    o_ref[0] = y.astype(o_ref.dtype)                                      # dense 256-lane store


# ----------------------------- operand preparation (hoisted out of the forward) -----------------------------

def _interp_matrix(out_size, in_size, scale):
    # PyTorch bilinear, align_corners=False: src = max((dst + 0.5)/scale - 0.5, 0), clamped taps.
    i = jnp.arange(out_size, dtype=jnp.float32)
    src = jnp.maximum((i + 0.5) / scale - 0.5, 0.0)
    x0 = jnp.floor(src).astype(jnp.int32)
    x1 = jnp.minimum(x0 + 1, in_size - 1)
    w1 = src - x0.astype(jnp.float32)
    rows = jnp.arange(out_size, dtype=jnp.int32)
    A = jnp.zeros((out_size, in_size), jnp.float32)
    A = A.at[rows, x0].add(1.0 - w1)
    A = A.at[rows, x1].add(w1)
    return A


def _band_weights(p, Wd):
    """Fold the 3 horizontal taps (+ zero padding) of a 3x3 conv into block-banded matrices.

    Returns M (3, Wd*Cin, Wd*Cout) with M[dy][(w+dx-1)*Cin+ci, w*Cout+co] = w[dy,dx,ci,co]
    (out-of-range w+dx-1 dropped == zero padding), and the bias broadcast as a (1, Wd*Cout) row.
    """
    w = p["w"]                                         # (3, 3, Cin, Cout), BN scale folded in
    mats = []
    for dy in range(3):
        m = jnp.zeros((Wd * w.shape[2], Wd * w.shape[3]), jnp.float32)
        for dx in range(3):
            m = m + jnp.kron(jnp.eye(Wd, k=1 - dx, dtype=jnp.float32), w[dy, dx])
        mats.append(m)
    brow = jnp.tile(p["bias"], (Wd,)).reshape(1, Wd * w.shape[3])
    return jnp.stack(mats), brow


def prepare_upsample_block(params, H, W, scale=2):
    """One-time preprocessing of parameters into kernel operands (call outside the hot loop)."""
    Ho, Wo = H * scale, W * scale
    Ci = params["res1"]["conv1"]["w"].shape[2]

    m_list, b_list = [], []
    for rp in (params["res1"], params["res2"]):
        for cp in (rp["conv1"], rp["conv2"]):
            M, brow = _band_weights(cp, W)
            m_list.append(M)
            b_list.append(brow)
    m_res = jnp.stack(m_list)                                  # (4, 3, W*Ci, W*Ci)
    b_res = jnp.stack(b_list)                                  # (4, 1, W*Ci)
    m_c, b_c = _band_weights(params["conv"], Wo)               # (3, Wo*Ci, Wo*Co), (1, Wo*Co)

    # Vertical tap-shift matrices (encode the dy offsets + zero rows of the padding).
    sv_s = jnp.stack([jnp.eye(H, k=dy - 1, dtype=jnp.float32) for dy in range(3)])
    sv_b = jnp.stack([jnp.eye(Ho, k=dy - 1, dtype=jnp.float32) for dy in range(3)])

    # Bilinear x2 interpolation matrices; column one is kron'd with I_Ci for the fused-lane layout.
    ah = _interp_matrix(Ho, H, float(scale))                   # (Ho, H)
    aw = _interp_matrix(Wo, W, float(scale))                   # (Wo, W)
    mw = jnp.kron(aw.T, jnp.eye(Ci, dtype=jnp.float32))        # (W*Ci, Wo*Ci)

    return {"m_res": m_res, "b_res": b_res, "m_c": m_c, "b_c": b_c,
            "sv_s": sv_s, "sv_b": sv_b, "ah": ah, "mw": mw}


# ----------------------------- public forward (single pallas_call) -----------------------------

def upsample_block(x_nchw, ops, scale=2):
    N, Ci, H, W = x_nchw.shape
    Ho, Wo = H * scale, W * scale
    Co = ops["b_c"].shape[1] // Wo

    # NCHW -> lane-fused (N, H, W*Ci). Pure layout plumbing done once at the kernel boundary.
    x = jnp.transpose(x_nchw, (0, 2, 3, 1)).reshape(N, H, W * Ci)

    out = pl.pallas_call(
        _upsample_block_kernel,
        out_shape=jax.ShapeDtypeStruct((N, Ho, Wo * Co), jnp.float32),
        grid=(N,),
        in_specs=[
            pl.BlockSpec((1, H, W * Ci), lambda n: (n, 0, 0)),
            pl.BlockSpec(ops["sv_s"].shape, lambda n: (0, 0, 0)),
            pl.BlockSpec(ops["sv_b"].shape, lambda n: (0, 0, 0)),
            pl.BlockSpec(ops["m_res"].shape, lambda n: (0, 0, 0, 0)),
            pl.BlockSpec(ops["b_res"].shape, lambda n: (0, 0, 0)),
            pl.BlockSpec(ops["ah"].shape, lambda n: (0, 0)),
            pl.BlockSpec(ops["mw"].shape, lambda n: (0, 0)),
            pl.BlockSpec(ops["m_c"].shape, lambda n: (0, 0, 0)),
            pl.BlockSpec(ops["b_c"].shape, lambda n: (0, 0)),
        ],
        out_specs=pl.BlockSpec((1, Ho, Wo * Co), lambda n: (n, 0, 0)),
        compiler_params=pltpu.CompilerParams(dimension_semantics=("parallel",)),
    )(x, ops["sv_s"], ops["sv_b"], ops["m_res"], ops["b_res"],
      ops["ah"], ops["mw"], ops["m_c"], ops["b_c"])

    y = out.reshape(N, Ho, Wo, Co)                 # free row-major split of the fused lane axis
    return jnp.transpose(y, (0, 3, 1, 2))          # back to NCHW


# ----------------------------- parameter init (BN folded, eval mode) -----------------------------

def _init_convblock(key, cin, cout):
    kw, kb, kg, kbe, km, kv = jax.random.split(key, 6)
    w = 0.1 * jax.random.normal(kw, (3, 3, cin, cout), jnp.float32)       # HWIO
    b = 0.1 * jax.random.normal(kb, (cout,), jnp.float32)
    gamma = 1.0 + 0.1 * jax.random.normal(kg, (cout,), jnp.float32)
    beta = 0.1 * jax.random.normal(kbe, (cout,), jnp.float32)
    mean = 0.1 * jax.random.normal(km, (cout,), jnp.float32)
    var = jax.random.uniform(kv, (cout,), jnp.float32, minval=0.5, maxval=1.5)
    scale = gamma / jnp.sqrt(var + BN_EPS)
    # Fold BN (running stats) into the conv:  y = conv_{w*scale}(x) + (scale*(b-mean)+beta)
    return {"w": w * scale[None, None, None, :], "bias": beta + scale * (b - mean)}


def init_upsample_block(key, in_c, out_c):
    keys = jax.random.split(key, 5)
    return {
        "res1": {"conv1": _init_convblock(keys[0], in_c, in_c),
                 "conv2": _init_convblock(keys[1], in_c, in_c)},
        "res2": {"conv1": _init_convblock(keys[2], in_c, in_c),
                 "conv2": _init_convblock(keys[3], in_c, in_c)},
        "conv": _init_convblock(keys[4], in_c, out_c),
    }


# ----------------------------- pure-JAX reference (for correctness check) -----------------------------

def _conv_bn_ref(x_nhwc, p, relu):
    y = lax.conv_general_dilated(x_nhwc, p["w"], window_strides=(1, 1),
                                 padding=((1, 1), (1, 1)),
                                 dimension_numbers=("NHWC", "HWIO", "NHWC"))
    y = y + p["bias"][None, None, None, :]
    return jnp.maximum(y, 0.0) if relu else y


def _res_block_ref(x, rp):
    h = _conv_bn_ref(x, rp["conv1"], True)
    y = _conv_bn_ref(h, rp["conv2"], False) + x
    return jnp.maximum(y, 0.0)


def upsample_block_ref(x_nchw, params, scale=2):
    x = jnp.transpose(x_nchw, (0, 2, 3, 1))
    x = _res_block_ref(x, params["res1"])
    x = _res_block_ref(x, params["res2"])
    _, H, W, _ = x.shape
    ah = _interp_matrix(H * scale, H, float(scale))
    aw = _interp_matrix(W * scale, W, float(scale))
    x = jnp.einsum("oh,nhwc->nowc", ah, x)
    x = jnp.einsum("pw,nowc->nopc", aw, x)
    x = _conv_bn_ref(x, params["conv"], True)
    return jnp.transpose(x, (0, 3, 1, 2))


# ----------------------------- main -----------------------------

if __name__ == "__main__":
    key = jax.random.PRNGKey(0)
    k_x, k_p = jax.random.split(key)

    N, in_c, out_c, H, W, scale = 2, 4, 8, 16, 16, 2
    x = jax.random.normal(k_x, (N, in_c, H, W), jnp.float32)
    params = init_upsample_block(k_p, in_c, out_c)

    # One-time operand preparation (weight banding / interp matrices), hoisted out of the forward.
    ops = prepare_upsample_block(params, H, W, scale)

    fwd = jax.jit(lambda inp, o: upsample_block(inp, o, scale=scale))
    y = jax.block_until_ready(fwd(x, ops))

    assert y.shape == (N, out_c, H * scale, W * scale), y.shape
    assert bool(jnp.all(jnp.isfinite(y)))
    assert bool(jnp.all(y >= 0.0))  # final ReLU

    # Validate against a pure-JAX reference of the same (eval-mode, dropout=identity) semantics.
    y_ref = jax.jit(lambda inp, p: upsample_block_ref(inp, p, scale))(x, params)
    err = float(jnp.max(jnp.abs(y - y_ref)))
    assert err < 1e-3, f"max abs error vs reference: {err}"

    print("KERNEL_OK")
</pallas_src>

<mosaic_0001>
module attributes {stable_mosaic.version = 11 : i64} {
  func.func @_upsample_block_kernel(%arg0: i32, %arg1: memref<1x16x64xf32, #tpu.memory_space<vmem>>, %arg2: memref<3x16x16xf32, #tpu.memory_space<vmem>>, %arg3: memref<3x32x32xf32, #tpu.memory_space<vmem>>, %arg4: memref<4x3x64x64xf32, #tpu.memory_space<vmem>>, %arg5: memref<4x1x64xf32, #tpu.memory_space<vmem>>, %arg6: memref<32x16xf32, #tpu.memory_space<vmem>>, %arg7: memref<64x128xf32, #tpu.memory_space<vmem>>, %arg8: memref<3x128x256xf32, #tpu.memory_space<vmem>>, %arg9: memref<1x256xf32, #tpu.memory_space<vmem>>, %arg10: memref<1x32x256xf32, #tpu.memory_space<vmem>>) attributes {dimension_semantics = [#tpu.dimension_semantics<parallel>], iteration_bounds = array<i64: 2>, scalar_prefetch = 0 : i64, scratch_operands = 0 : i64, tpu.core_type = #tpu.core_type<tc>, window_params = [{transform_indices = @transform_0, window_bounds = array<i64: 1, 16, 64>}, {pipeline_mode = #tpu.pipeline_mode<synchronous>, transform_indices = @transform_1, window_bounds = array<i64: 3, 16, 16>}, {pipeline_mode = #tpu.pipeline_mode<synchronous>, transform_indices = @transform_2, window_bounds = array<i64: 3, 32, 32>}, {pipeline_mode = #tpu.pipeline_mode<synchronous>, transform_indices = @transform_3, window_bounds = array<i64: 4, 3, 64, 64>}, {pipeline_mode = #tpu.pipeline_mode<synchronous>, transform_indices = @transform_4, window_bounds = array<i64: 4, 1, 64>}, {pipeline_mode = #tpu.pipeline_mode<synchronous>, transform_indices = @transform_5, window_bounds = array<i64: 32, 16>}, {pipeline_mode = #tpu.pipeline_mode<synchronous>, transform_indices = @transform_6, window_bounds = array<i64: 64, 128>}, {pipeline_mode = #tpu.pipeline_mode<synchronous>, transform_indices = @transform_7, window_bounds = array<i64: 3, 128, 256>}, {pipeline_mode = #tpu.pipeline_mode<synchronous>, transform_indices = @transform_8, window_bounds = array<i64: 1, 256>}, {transform_indices = @transform_9, window_bounds = array<i64: 1, 32, 256>}]} {
    %c0 = arith.constant 0 : index
    %c0_0 = arith.constant 0 : index
    %c0_1 = arith.constant 0 : index
    %0 = vector.load %arg1[%c0, %c0_0, %c0_1] : memref<1x16x64xf32, #tpu.memory_space<vmem>>, vector<1x16x64xf32>
    %1 = vector.shape_cast %0 : vector<1x16x64xf32> to vector<16x64xf32>
    %c0_2 = arith.constant 0 : index
    %c0_3 = arith.constant 0 : index
    %c0_4 = arith.constant 0 : index
    %2 = vector.load %arg5[%c0_2, %c0_3, %c0_4] : memref<4x1x64xf32, #tpu.memory_space<vmem>>, vector<1x1x64xf32>
    %3 = vector.shape_cast %2 : vector<1x1x64xf32> to vector<1x64xf32>
    %cst = arith.constant 0.000000e+00 : f32
    %4 = vector.broadcast %cst : f32 to vector<16x64xf32>
    %c0_5 = arith.constant 0 : index
    %c0_6 = arith.constant 0 : index
    %c0_7 = arith.constant 0 : index
    %c0_8 = arith.constant 0 : index
    %5 = vector.load %arg4[%c0_5, %c0_6, %c0_7, %c0_8] : memref<4x3x64x64xf32, #tpu.memory_space<vmem>>, vector<1x1x64x64xf32>
    %6 = vector.shape_cast %5 : vector<1x1x64x64xf32> to vector<64x64xf32>
    %cst_9 = arith.constant dense<0.000000e+00> : vector<16x64xf32>
    %7 = tpu.matmul %1, %6, %cst_9 {dimension_numbers = #tpu.dot_dimension_numbers<[1], [0], [0], [1], [0, 0, 1, 1], [], []>} : vector<16x64xf32>, vector<64x64xf32>, vector<16x64xf32> -> vector<16x64xf32>
    %c0_10 = arith.constant 0 : index
    %c0_11 = arith.constant 0 : index
    %c0_12 = arith.constant 0 : index
    %8 = vector.load %arg2[%c0_10, %c0_11, %c0_12] : memref<3x16x16xf32, #tpu.memory_space<vmem>>, vector<1x16x16xf32>
    %9 = vector.shape_cast %8 : vector<1x16x16xf32> to vector<16x16xf32>
    %cst_13 = arith.constant dense<0.000000e+00> : vector<16x64xf32>
    %10 = tpu.matmul %9, %7, %cst_13 {dimension_numbers = #tpu.dot_dimension_numbers<[1], [0], [0], [1], [0, 0, 1, 1], [], []>} : vector<16x16xf32>, vector<16x64xf32>, vector<16x64xf32> -> vector<16x64xf32>
    %11 = arith.addf %4, %10 : vector<16x64xf32>
    %c0_14 = arith.constant 0 : index
    %c1 = arith.constant 1 : index
    %c0_15 = arith.constant 0 : index
    %c0_16 = arith.constant 0 : index
    %12 = vector.load %arg4[%c0_14, %c1, %c0_15, %c0_16] : memref<4x3x64x64xf32, #tpu.memory_space<vmem>>, vector<1x1x64x64xf32>
    %13 = vector.shape_cast %12 : vector<1x1x64x64xf32> to vector<64x64xf32>
    %cst_17 = arith.constant dense<0.000000e+00> : vector<16x64xf32>
    %14 = tpu.matmul %1, %13, %cst_17 {dimension_numbers = #tpu.dot_dimension_numbers<[1], [0], [0], [1], [0, 0, 1, 1], [], []>} : vector<16x64xf32>, vector<64x64xf32>, vector<16x64xf32> -> vector<16x64xf32>
    %c1_18 = arith.constant 1 : index
    %c0_19 = arith.constant 0 : index
    %c0_20 = arith.constant 0 : index
    %15 = vector.load %arg2[%c1_18, %c0_19, %c0_20] : memref<3x16x16xf32, #tpu.memory_space<vmem>>, vector<1x16x16xf32>
    %16 = vector.shape_cast %15 : vector<1x16x16xf32> to vector<16x16xf32>
    %cst_21 = arith.constant dense<0.000000e+00> : vector<16x64xf32>
    %17 = tpu.matmul %16, %14, %cst_21 {dimension_numbers = #tpu.dot_dimension_numbers<[1], [0], [0], [1], [0, 0, 1, 1], [], []>} : vector<16x16xf32>, vector<16x64xf32>, vector<16x64xf32> -> vector<16x64xf32>
    %18 = arith.addf %11, %17 : vector<16x64xf32>
    %c0_22 = arith.constant 0 : index
    %c2 = arith.constant 2 : index
    %c0_23 = arith.constant 0 : index
    %c0_24 = arith.constant 0 : index
    %19 = vector.load %arg4[%c0_22, %c2, %c0_23, %c0_24] : memref<4x3x64x64xf32, #tpu.memory_space<vmem>>, vector<1x1x64x64xf32>
    %20 = vector.shape_cast %19 : vector<1x1x64x64xf32> to vector<64x64xf32>
    %cst_25 = arith.constant dense<0.000000e+00> : vector<16x64xf32>
    %21 = tpu.matmul %1, %20, %cst_25 {dimension_numbers = #tpu.dot_dimension_numbers<[1], [0], [0], [1], [0, 0, 1, 1], [], []>} : vector<16x64xf32>, vector<64x64xf32>, vector<16x64xf32> -> vector<16x64xf32>
    %c2_26 = arith.constant 2 : index
    %c0_27 = arith.constant 0 : index
    %c0_28 = arith.constant 0 : index
    %22 = vector.load %arg2[%c2_26, %c0_27, %c0_28] : memref<3x16x16xf32, #tpu.memory_space<vmem>>, vector<1x16x16xf32>
    %23 = vector.shape_cast %22 : vector<1x16x16xf32> to vector<16x16xf32>
    %cst_29 = arith.constant dense<0.000000e+00> : vector<16x64xf32>
    %24 = tpu.matmul %23, %21, %cst_29 {dimension_numbers = #tpu.dot_dimension_numbers<[1], [0], [0], [1], [0, 0, 1, 1], [], []>} : vector<16x16xf32>, vector<16x64xf32>, vector<16x64xf32> -> vector<16x64xf32>
    %25 = arith.addf %18, %24 : vector<16x64xf32>
    %26 = vector.broadcast %3 : vector<1x64xf32> to vector<16x64xf32>
    %27 = arith.addf %25, %26 : vector<16x64xf32>
    %cst_30 = arith.constant 0.000000e+00 : f32
    %28 = vector.broadcast %cst_30 : f32 to vector<16x64xf32>
    %29 = arith.maximumf %27, %28 : vector<16x64xf32>
    %c1_31 = arith.constant 1 : index
    %c0_32 = arith.constant 0 : index
    %c0_33 = arith.constant 0 : index
    %30 = vector.load %arg5[%c1_31, %c0_32, %c0_33] : memref<4x1x64xf32, #tpu.memory_space<vmem>>, vector<1x1x64xf32>
    %31 = vector.shape_cast %30 : vector<1x1x64xf32> to vector<1x64xf32>
    %cst_34 = arith.constant 0.000000e+00 : f32
    %32 = vector.broadcast %cst_34 : f32 to vector<16x64xf32>
    %c1_35 = arith.constant 1 : index
    %c0_36 = arith.constant 0 : index
    %c0_37 = arith.constant 0 : index
    %c0_38 = arith.constant 0 : index
    %33 = vector.load %arg4[%c1_35, %c0_36, %c0_37, %c0_38] : memref<4x3x64x64xf32, #tpu.memory_space<vmem>>, vector<1x1x64x64xf32>
    %34 = vector.shape_cast %33 : vector<1x1x64x64xf32> to vector<64x64xf32>
    %cst_39 = arith.constant dense<0.000000e+00> : vector<16x64xf32>
    %35 = tpu.matmul %29, %34, %cst_39 {dimension_numbers = #tpu.dot_dimension_numbers<[1], [0], [0], [1], [0, 0, 1, 1], [], []>} : vector<16x64xf32>, vector<64x64xf32>, vector<16x64xf32> -> vector<16x64xf32>
    %c0_40 = arith.constant 0 : index
    %c0_41 = arith.constant 0 : index
    %c0_42 = arith.constant 0 : index
    %36 = vector.load %arg2[%c0_40, %c0_41, %c0_42] : memref<3x16x16xf32, #tpu.memory_space<vmem>>, vector<1x16x16xf32>
    %37 = vector.shape_cast %36 : vector<1x16x16xf32> to vector<16x16xf32>
    %cst_43 = arith.constant dense<0.000000e+00> : vector<16x64xf32>
    %38 = tpu.matmul %37, %35, %cst_43 {dimension_numbers = #tpu.dot_dimension_numbers<[1], [0], [0], [1], [0, 0, 1, 1], [], []>} : vector<16x16xf32>, vector<16x64xf32>, vector<16x64xf32> -> vector<16x64xf32>
    %39 = arith.addf %32, %38 : vector<16x64xf32>
    %c1_44 = arith.constant 1 : index
    %c1_45 = arith.constant 1 : index
    %c0_46 = arith.constant 0 : index
    %c0_47 = arith.constant 0 : index
    %40 = vector.load %arg4[%c1_44, %c1_45, %c0_46, %c0_47] : memref<4x3x64x64xf32, #tpu.memory_space<vmem>>, vector<1x1x64x64xf32>
    %41 = vector.shape_cast %40 : vector<1x1x64x64xf32> to vector<64x64xf32>
    %cst_48 = arith.constant dense<0.000000e+00> : vector<16x64xf32>
    %42 = tpu.matmul %29, %41, %cst_48 {dimension_numbers = #tpu.dot_dimension_numbers<[1], [0], [0], [1], [0, 0, 1, 1], [], []>} : vector<16x64xf32>, vector<64x64xf32>, vector<16x64xf32> -> vector<16x64xf32>
    %c1_49 = arith.constant 1 : index
    %c0_50 = arith.constant 0 : index
    %c0_51 = arith.constant 0 : index
    %43 = vector.load %arg2[%c1_49, %c0_50, %c0_51] : memref<3x16x16xf32, #tpu.memory_space<vmem>>, vector<1x16x16xf32>
    %44 = vector.shape_cast %43 : vector<1x16x16xf32> to vector<16x16xf32>
    %cst_52 = arith.constant dense<0.000000e+00> : vector<16x64xf32>
    %45 = tpu.matmul %44, %42, %cst_52 {dimension_numbers = #tpu.dot_dimension_numbers<[1], [0], [0], [1], [0, 0, 1, 1], [], []>} : vector<16x16xf32>, vector<16x64xf32>, vector<16x64xf32> -> vector<16x64xf32>
    %46 = arith.addf %39, %45 : vector<16x64xf32>
    %c1_53 = arith.constant 1 : index
    %c2_54 = arith.constant 2 : index
    %c0_55 = arith.constant 0 : index
    %c0_56 = arith.constant 0 : index
    %47 = vector.load %arg4[%c1_53, %c2_54, %c0_55, %c0_56] : memref<4x3x64x64xf32, #tpu.memory_space<vmem>>, vector<1x1x64x64xf32>
    %48 = vector.shape_cast %47 : vector<1x1x64x64xf32> to vector<64x64xf32>
    %cst_57 = arith.constant dense<0.000000e+00> : vector<16x64xf32>
    %49 = tpu.matmul %29, %48, %cst_57 {dimension_numbers = #tpu.dot_dimension_numbers<[1], [0], [0], [1], [0, 0, 1, 1], [], []>} : vector<16x64xf32>, vector<64x64xf32>, vector<16x64xf32> -> vector<16x64xf32>
    %c2_58 = arith.constant 2 : index
    %c0_59 = arith.constant 0 : index
    %c0_60 = arith.constant 0 : index
    %50 = vector.load %arg2[%c2_58, %c0_59, %c0_60] : memref<3x16x16xf32, #tpu.memory_space<vmem>>, vector<1x16x16xf32>
    %51 = vector.shape_cast %50 : vector<1x16x16xf32> to vector<16x16xf32>
    %cst_61 = arith.constant dense<0.000000e+00> : vector<16x64xf32>
    %52 = tpu.matmul %51, %49, %cst_61 {dimension_numbers = #tpu.dot_dimension_numbers<[1], [0], [0], [1], [0, 0, 1, 1], [], []>} : vector<16x16xf32>, vector<16x64xf32>, vector<16x64xf32> -> vector<16x64xf32>
    %53 = arith.addf %46, %52 : vector<16x64xf32>
    %54 = vector.broadcast %31 : vector<1x64xf32> to vector<16x64xf32>
    %55 = arith.addf %53, %54 : vector<16x64xf32>
    %56 = arith.addf %55, %1 : vector<16x64xf32>
    %cst_62 = arith.constant 0.000000e+00 : f32
    %57 = vector.broadcast %cst_62 : f32 to vector<16x64xf32>
    %58 = arith.maximumf %56, %57 : vector<16x64xf32>
    %c2_63 = arith.constant 2 : index
    %c0_64 = arith.constant 0 : index
    %c0_65 = arith.constant 0 : index
    %59 = vector.load %arg5[%c2_63, %c0_64, %c0_65] : memref<4x1x64xf32, #tpu.memory_space<vmem>>, vector<1x1x64xf32>
    %60 = vector.shape_cast %59 : vector<1x1x64xf32> to vector<1x64xf32>
    %cst_66 = arith.constant 0.000000e+00 : f32
    %61 = vector.broadcast %cst_66 : f32 to vector<16x64xf32>
    %c2_67 = arith.constant 2 : index
    %c0_68 = arith.constant 0 : index
    %c0_69 = arith.constant 0 : index
    %c0_70 = arith.constant 0 : index
    %62 = vector.load %arg4[%c2_67, %c0_68, %c0_69, %c0_70] : memref<4x3x64x64xf32, #tpu.memory_space<vmem>>, vector<1x1x64x64xf32>
    %63 = vector.shape_cast %62 : vector<1x1x64x64xf32> to vector<64x64xf32>
    %cst_71 = arith.constant dense<0.000000e+00> : vector<16x64xf32>
    %64 = tpu.matmul %58, %63, %cst_71 {dimension_numbers = #tpu.dot_dimension_numbers<[1], [0], [0], [1], [0, 0, 1, 1], [], []>} : vector<16x64xf32>, vector<64x64xf32>, vector<16x64xf32> -> vector<16x64xf32>
    %c0_72 = arith.constant 0 : index
    %c0_73 = arith.constant 0 : index
    %c0_74 = arith.constant 0 : index
    %65 = vector.load %arg2[%c0_72, %c0_73, %c0_74] : memref<3x16x16xf32, #tpu.memory_space<vmem>>, vector<1x16x16xf32>
    %66 = vector.shape_cast %65 : vector<1x16x16xf32> to vector<16x16xf32>
    %cst_75 = arith.constant dense<0.000000e+00> : vector<16x64xf32>
    %67 = tpu.matmul %66, %64, %cst_75 {dimension_numbers = #tpu.dot_dimension_numbers<[1], [0], [0], [1], [0, 0, 1, 1], [], []>} : vector<16x16xf32>, vector<16x64xf32>, vector<16x64xf32> -> vector<16x64xf32>
    %68 = arith.addf %61, %67 : vector<16x64xf32>
    %c2_76 = arith.constant 2 : index
    %c1_77 = arith.constant 1 : index
    %c0_78 = arith.constant 0 : index
    %c0_79 = arith.constant 0 : index
    %69 = vector.load %arg4[%c2_76, %c1_77, %c0_78, %c0_79] : memref<4x3x64x64xf32, #tpu.memory_space<vmem>>, vector<1x1x64x64xf32>
    %70 = vector.shape_cast %69 : vector<1x1x64x64xf32> to vector<64x64xf32>
    %cst_80 = arith.constant dense<0.000000e+00> : vector<16x64xf32>
    %71 = tpu.matmul %58, %70, %cst_80 {dimension_numbers = #tpu.dot_dimension_numbers<[1], [0], [0], [1], [0, 0, 1, 1], [], []>} : vector<16x64xf32>, vector<64x64xf32>, vector<16x64xf32> -> vector<16x64xf32>
    %c1_81 = arith.constant 1 : index
    %c0_82 = arith.constant 0 : index
    %c0_83 = arith.constant 0 : index
    %72 = vector.load %arg2[%c1_81, %c0_82, %c0_83] : memref<3x16x16xf32, #tpu.memory_space<vmem>>, vector<1x16x16xf32>
    %73 = vector.shape_cast %72 : vector<1x16x16xf32> to vector<16x16xf32>
    %cst_84 = arith.constant dense<0.000000e+00> : vector<16x64xf32>
    %74 = tpu.matmul %73, %71, %cst_84 {dimension_numbers = #tpu.dot_dimension_numbers<[1], [0], [0], [1], [0, 0, 1, 1], [], []>} : vector<16x16xf32>, vector<16x64xf32>, vector<16x64xf32> -> vector<16x64xf32>
    %75 = arith.addf %68, %74 : vector<16x64xf32>
    %c2_85 = arith.constant 2 : index
    %c2_86 = arith.constant 2 : index
    %c0_87 = arith.constant 0 : index
    %c0_88 = arith.constant 0 : index
    %76 = vector.load %arg4[%c2_85, %c2_86, %c0_87, %c0_88] : memref<4x3x64x64xf32, #tpu.memory_space<vmem>>, vector<1x1x64x64xf32>
    %77 = vector.shape_cast %76 : vector<1x1x64x64xf32> to vector<64x64xf32>
    %cst_89 = arith.constant dense<0.000000e+00> : vector<16x64xf32>
    %78 = tpu.matmul %58, %77, %cst_89 {dimension_numbers = #tpu.dot_dimension_numbers<[1], [0], [0], [1], [0, 0, 1, 1], [], []>} : vector<16x64xf32>, vector<64x64xf32>, vector<16x64xf32> -> vector<16x64xf32>
    %c2_90 = arith.constant 2 : index
    %c0_91 = arith.constant 0 : index
    %c0_92 = arith.constant 0 : index
    %79 = vector.load %arg2[%c2_90, %c0_91, %c0_92] : memref<3x16x16xf32, #tpu.memory_space<vmem>>, vector<1x16x16xf32>
    %80 = vector.shape_cast %79 : vector<1x16x16xf32> to vector<16x16xf32>
    %cst_93 = arith.constant dense<0.000000e+00> : vector<16x64xf32>
    %81 = tpu.matmul %80, %78, %cst_93 {dimension_numbers = #tpu.dot_dimension_numbers<[1], [0], [0], [1], [0, 0, 1, 1], [], []>} : vector<16x16xf32>, vector<16x64xf32>, vector<16x64xf32> -> vector<16x64xf32>
    %82 = arith.addf %75, %81 : vector<16x64xf32>
    %83 = vector.broadcast %60 : vector<1x64xf32> to vector<16x64xf32>
    %84 = arith.addf %82, %83 : vector<16x64xf32>
    %cst_94 = arith.constant 0.000000e+00 : f32
    %85 = vector.broadcast %cst_94 : f32 to vector<16x64xf32>
    %86 = arith.maximumf %84, %85 : vector<16x64xf32>
    %c3 = arith.constant 3 : index
    %c0_95 = arith.constant 0 : index
    %c0_96 = arith.constant 0 : index
    %87 = vector.load %arg5[%c3, %c0_95, %c0_96] : memref<4x1x64xf32, #tpu.memory_space<vmem>>, vector<1x1x64xf32>
    %88 = vector.shape_cast %87 : vector<1x1x64xf32> to vector<1x64xf32>
    %cst_97 = arith.constant 0.000000e+00 : f32
    %89 = vector.broadcast %cst_97 : f32 to vector<16x64xf32>
    %c3_98 = arith.constant 3 : index
    %c0_99 = arith.constant 0 : index
    %c0_100 = arith.constant 0 : index
    %c0_101 = arith.constant 0 : index
    %90 = vector.load %arg4[%c3_98, %c0_99, %c0_100, %c0_101] : memref<4x3x64x64xf32, #tpu.memory_space<vmem>>, vector<1x1x64x64xf32>
    %91 = vector.shape_cast %90 : vector<1x1x64x64xf32> to vector<64x64xf32>
    %cst_102 = arith.constant dense<0.000000e+00> : vector<16x64xf32>
    %92 = tpu.matmul %86, %91, %cst_102 {dimension_numbers = #tpu.dot_dimension_numbers<[1], [0], [0], [1], [0, 0, 1, 1], [], []>} : vector<16x64xf32>, vector<64x64xf32>, vector<16x64xf32> -> vector<16x64xf32>
    %c0_103 = arith.constant 0 : index
    %c0_104 = arith.constant 0 : index
    %c0_105 = arith.constant 0 : index
    %93 = vector.load %arg2[%c0_103, %c0_104, %c0_105] : memref<3x16x16xf32, #tpu.memory_space<vmem>>, vector<1x16x16xf32>
    %94 = vector.shape_cast %93 : vector<1x16x16xf32> to vector<16x16xf32>
    %cst_106 = arith.constant dense<0.000000e+00> : vector<16x64xf32>
    %95 = tpu.matmul %94, %92, %cst_106 {dimension_numbers = #tpu.dot_dimension_numbers<[1], [0], [0], [1], [0, 0, 1, 1], [], []>} : vector<16x16xf32>, vector<16x64xf32>, vector<16x64xf32> -> vector<16x64xf32>
    %96 = arith.addf %89, %95 : vector<16x64xf32>
    %c3_107 = arith.constant 3 : index
    %c1_108 = arith.constant 1 : index
    %c0_109 = arith.constant 0 : index
    %c0_110 = arith.constant 0 : index
    %97 = vector.load %arg4[%c3_107, %c1_108, %c0_109, %c0_110] : memref<4x3x64x64xf32, #tpu.memory_space<vmem>>, vector<1x1x64x64xf32>
    %98 = vector.shape_cast %97 : vector<1x1x64x64xf32> to vector<64x64xf32>
    %cst_111 = arith.constant dense<0.000000e+00> : vector<16x64xf32>
    %99 = tpu.matmul %86, %98, %cst_111 {dimension_numbers = #tpu.dot_dimension_numbers<[1], [0], [0], [1], [0, 0, 1, 1], [], []>} : vector<16x64xf32>, vector<64x64xf32>, vector<16x64xf32> -> vector<16x64xf32>
    %c1_112 = arith.constant 1 : index
    %c0_113 = arith.constant 0 : index
    %c0_114 = arith.constant 0 : index
    %100 = vector.load %arg2[%c1_112, %c0_113, %c0_114] : memref<3x16x16xf32, #tpu.memory_space<vmem>>, vector<1x16x16xf32>
    %101 = vector.shape_cast %100 : vector<1x16x16xf32> to vector<16x16xf32>
    %cst_115 = arith.constant dense<0.000000e+00> : vector<16x64xf32>
    %102 = tpu.matmul %101, %99, %cst_115 {dimension_numbers = #tpu.dot_dimension_numbers<[1], [0], [0], [1], [0, 0, 1, 1], [], []>} : vector<16x16xf32>, vector<16x64xf32>, vector<16x64xf32> -> vector<16x64xf32>
    %103 = arith.addf %96, %102 : vector<16x64xf32>
    %c3_116 = arith.constant 3 : index
    %c2_117 = arith.constant 2 : index
    %c0_118 = arith.constant 0 : index
    %c0_119 = arith.constant 0 : index
    %104 = vector.load %arg4[%c3_116, %c2_117, %c0_118, %c0_119] : memref<4x3x64x64xf32, #tpu.memory_space<vmem>>, vector<1x1x64x64xf32>
    %105 = vector.shape_cast %104 : vector<1x1x64x64xf32> to vector<64x64xf32>
    %cst_120 = arith.constant dense<0.000000e+00> : vector<16x64xf32>
    %106 = tpu.matmul %86, %105, %cst_120 {dimension_numbers = #tpu.dot_dimension_numbers<[1], [0], [0], [1], [0, 0, 1, 1], [], []>} : vector<16x64xf32>, vector<64x64xf32>, vector<16x64xf32> -> vector<16x64xf32>
    %c2_121 = arith.constant 2 : index
    %c0_122 = arith.constant 0 : index
    %c0_123 = arith.constant 0 : index
    %107 = vector.load %arg2[%c2_121, %c0_122, %c0_123] : memref<3x16x16xf32, #tpu.memory_space<vmem>>, vector<1x16x16xf32>
    %108 = vector.shape_cast %107 : vector<1x16x16xf32> to vector<16x16xf32>
    %cst_124 = arith.constant dense<0.000000e+00> : vector<16x64xf32>
    %109 = tpu.matmul %108, %106, %cst_124 {dimension_numbers = #tpu.dot_dimension_numbers<[1], [0], [0], [1], [0, 0, 1, 1], [], []>} : vector<16x16xf32>, vector<16x64xf32>, vector<16x64xf32> -> vector<16x64xf32>
    %110 = arith.addf %103, %109 : vector<16x64xf32>
    %111 = vector.broadcast %88 : vector<1x64xf32> to vector<16x64xf32>
    %112 = arith.addf %110, %111 : vector<16x64xf32>
    %113 = arith.addf %112, %58 : vector<16x64xf32>
    %cst_125 = arith.constant 0.000000e+00 : f32
    %114 = vector.broadcast %cst_125 : f32 to vector<16x64xf32>
    %115 = arith.maximumf %113, %114 : vector<16x64xf32>
    %c0_126 = arith.constant 0 : index
    %c0_127 = arith.constant 0 : index
    %116 = vector.load %arg6[%c0_126, %c0_127] : memref<32x16xf32, #tpu.memory_space<vmem>>, vector<32x16xf32>
    %cst_128 = arith.constant dense<0.000000e+00> : vector<32x64xf32>
    %117 = tpu.matmul %116, %115, %cst_128 {dimension_numbers = #tpu.dot_dimension_numbers<[1], [0], [0], [1], [0, 0, 1, 1], [], []>} : vector<32x16xf32>, vector<16x64xf32>, vector<32x64xf32> -> vector<32x64xf32>
    %c0_129 = arith.constant 0 : index
    %c0_130 = arith.constant 0 : index
    %118 = vector.load %arg7[%c0_129, %c0_130] : memref<64x128xf32, #tpu.memory_space<vmem>>, vector<64x128xf32>
    %cst_131 = arith.constant dense<0.000000e+00> : vector<32x128xf32>
    %119 = tpu.matmul %117, %118, %cst_131 {dimension_numbers = #tpu.dot_dimension_numbers<[1], [0], [0], [1], [0, 0, 1, 1], [], []>} : vector<32x64xf32>, vector<64x128xf32>, vector<32x128xf32> -> vector<32x128xf32>
    %c0_132 = arith.constant 0 : index
    %c0_133 = arith.constant 0 : index
    %120 = vector.load %arg9[%c0_132, %c0_133] : memref<1x256xf32, #tpu.memory_space<vmem>>, vector<1x256xf32>
    %cst_134 = arith.constant 0.000000e+00 : f32
    %121 = vector.broadcast %cst_134 : f32 to vector<32x256xf32>
    %c0_135 = arith.constant 0 : index
    %c0_136 = arith.constant 0 : index
    %c0_137 = arith.constant 0 : index
    %122 = vector.load %arg8[%c0_135, %c0_136, %c0_137] : memref<3x128x256xf32, #tpu.memory_space<vmem>>, vector<1x128x256xf32>
    %123 = vector.shape_cast %122 : vector<1x128x256xf32> to vector<128x256xf32>
    %cst_138 = arith.constant dense<0.000000e+00> : vector<32x256xf32>
    %124 = tpu.matmul %119, %123, %cst_138 {dimension_numbers = #tpu.dot_dimension_numbers<[1], [0], [0], [1], [0, 0, 1, 1], [], []>} : vector<32x128xf32>, vector<128x256xf32>, vector<32x256xf32> -> vector<32x256xf32>
    %c0_139 = arith.constant 0 : index
    %c0_140 = arith.constant 0 : index
    %c0_141 = arith.constant 0 : index
    %125 = vector.load %arg3[%c0_139, %c0_140, %c0_141] : memref<3x32x32xf32, #tpu.memory_space<vmem>>, vector<1x32x32xf32>
    %126 = vector.shape_cast %125 : vector<1x32x32xf32> to vector<32x32xf32>
    %cst_142 = arith.constant dense<0.000000e+00> : vector<32x256xf32>
    %127 = tpu.matmul %126, %124, %cst_142 {dimension_numbers = #tpu.dot_dimension_numbers<[1], [0], [0], [1], [0, 0, 1, 1], [], []>} : vector<32x32xf32>, vector<32x256xf32>, vector<32x256xf32> -> vector<32x256xf32>
    %128 = arith.addf %121, %127 : vector<32x256xf32>
    %c1_143 = arith.constant 1 : index
    %c0_144 = arith.constant 0 : index
    %c0_145 = arith.constant 0 : index
    %129 = vector.load %arg8[%c1_143, %c0_144, %c0_145] : memref<3x128x256xf32, #tpu.memory_space<vmem>>, vector<1x128x256xf32>
    %130 = vector.shape_cast %129 : vector<1x128x256xf32> to vector<128x256xf32>
    %cst_146 = arith.constant dense<0.000000e+00> : vector<32x256xf32>
    %131 = tpu.matmul %119, %130, %cst_146 {dimension_numbers = #tpu.dot_dimension_numbers<[1], [0], [0], [1], [0, 0, 1, 1], [], []>} : vector<32x128xf32>, vector<128x256xf32>, vector<32x256xf32> -> vector<32x256xf32>
    %c1_147 = arith.constant 1 : index
    %c0_148 = arith.constant 0 : index
    %c0_149 = arith.constant 0 : index
    %132 = vector.load %arg3[%c1_147, %c0_148, %c0_149] : memref<3x32x32xf32, #tpu.memory_space<vmem>>, vector<1x32x32xf32>
    %133 = vector.shape_cast %132 : vector<1x32x32xf32> to vector<32x32xf32>
    %cst_150 = arith.constant dense<0.000000e+00> : vector<32x256xf32>
    %134 = tpu.matmul %133, %131, %cst_150 {dimension_numbers = #tpu.dot_dimension_numbers<[1], [0], [0], [1], [0, 0, 1, 1], [], []>} : vector<32x32xf32>, vector<32x256xf32>, vector<32x256xf32> -> vector<32x256xf32>
    %135 = arith.addf %128, %134 : vector<32x256xf32>
    %c2_151 = arith.constant 2 : index
    %c0_152 = arith.constant 0 : index
    %c0_153 = arith.constant 0 : index
    %136 = vector.load %arg8[%c2_151, %c0_152, %c0_153] : memref<3x128x256xf32, #tpu.memory_space<vmem>>, vector<1x128x256xf32>
    %137 = vector.shape_cast %136 : vector<1x128x256xf32> to vector<128x256xf32>
    %cst_154 = arith.constant dense<0.000000e+00> : vector<32x256xf32>
    %138 = tpu.matmul %119, %137, %cst_154 {dimension_numbers = #tpu.dot_dimension_numbers<[1], [0], [0], [1], [0, 0, 1, 1], [], []>} : vector<32x128xf32>, vector<128x256xf32>, vector<32x256xf32> -> vector<32x256xf32>
    %c2_155 = arith.constant 2 : index
    %c0_156 = arith.constant 0 : index
    %c0_157 = arith.constant 0 : index
    %139 = vector.load %arg3[%c2_155, %c0_156, %c0_157] : memref<3x32x32xf32, #tpu.memory_space<vmem>>, vector<1x32x32xf32>
    %140 = vector.shape_cast %139 : vector<1x32x32xf32> to vector<32x32xf32>
    %cst_158 = arith.constant dense<0.000000e+00> : vector<32x256xf32>
    %141 = tpu.matmul %140, %138, %cst_158 {dimension_numbers = #tpu.dot_dimension_numbers<[1], [0], [0], [1], [0, 0, 1, 1], [], []>} : vector<32x32xf32>, vector<32x256xf32>, vector<32x256xf32> -> vector<32x256xf32>
    %142 = arith.addf %135, %141 : vector<32x256xf32>
    %143 = vector.broadcast %120 : vector<1x256xf32> to vector<32x256xf32>
    %144 = arith.addf %142, %143 : vector<32x256xf32>
    %cst_159 = arith.constant 0.000000e+00 : f32
    %145 = vector.broadcast %cst_159 : f32 to vector<32x256xf32>
    %146 = arith.maximumf %144, %145 : vector<32x256xf32>
    %c0_160 = arith.constant 0 : index
    %c0_161 = arith.constant 0 : index
    %c0_162 = arith.constant 0 : index
    %147 = vector.load %arg10[%c0_160, %c0_161, %c0_162] : memref<1x32x256xf32, #tpu.memory_space<vmem>>, vector<1x32x256xf32>
    %148 = vector.shape_cast %147 : vector<1x32x256xf32> to vector<32x256xf32>
    %149 = vector.shape_cast %146 : vector<32x256xf32> to vector<1x32x256xf32>
    tpu.vector_store %arg10[%c0_160, %c0_161, %c0_162], %149 {strides = array<i32>} : memref<1x32x256xf32, #tpu.memory_space<vmem>>, vector<1x32x256xf32>,
    return
  }
  func.func @transform_0(%arg0: i32) -> (i32, i32, i32) {
    %c0_i32 = arith.constant 0 : i32
    %c0_i32_0 = arith.constant 0 : i32
    %c0_i32_1 = arith.constant 0 : i32
    return %arg0, %c0_i32, %c0_i32_0 : i32, i32, i32
  }
  func.func @transform_1(%arg0: i32) -> (i32, i32, i32) {
    %c0_i32 = arith.constant 0 : i32
    %c0_i32_0 = arith.constant 0 : i32
    %c0_i32_1 = arith.constant 0 : i32
    %c0_i32_2 = arith.constant 0 : i32
    return %c0_i32, %c0_i32_0, %c0_i32_1 : i32, i32, i32
  }
  func.func @transform_2(%arg0: i32) -> (i32, i32, i32) {
    %c0_i32 = arith.constant 0 : i32
    %c0_i32_0 = arith.constant 0 : i32
    %c0_i32_1 = arith.constant 0 : i32
    %c0_i32_2 = arith.constant 0 : i32
    return %c0_i32, %c0_i32_0, %c0_i32_1 : i32, i32, i32
  }
  func.func @transform_3(%arg0: i32) -> (i32, i32, i32, i32) {
    %c0_i32 = arith.constant 0 : i32
    %c0_i32_0 = arith.constant 0 : i32
    %c0_i32_1 = arith.constant 0 : i32
    %c0_i32_2 = arith.constant 0 : i32
    %c0_i32_3 = arith.constant 0 : i32
    return %c0_i32, %c0_i32_0, %c0_i32_1, %c0_i32_2 : i32, i32, i32, i32
  }
  func.func @transform_4(%arg0: i32) -> (i32, i32, i32) {
    %c0_i32 = arith.constant 0 : i32
    %c0_i32_0 = arith.constant 0 : i32
    %c0_i32_1 = arith.constant 0 : i32
    %c0_i32_2 = arith.constant 0 : i32
    return %c0_i32, %c0_i32_0, %c0_i32_1 : i32, i32, i32
  }
  func.func @transform_5(%arg0: i32) -> (i32, i32) {
    %c0_i32 = arith.constant 0 : i32
    %c0_i32_0 = arith.constant 0 : i32
    %c0_i32_1 = arith.constant 0 : i32
    return %c0_i32, %c0_i32_0 : i32, i32
  }
  func.func @transform_6(%arg0: i32) -> (i32, i32) {
    %c0_i32 = arith.constant 0 : i32
    %c0_i32_0 = arith.constant 0 : i32
    %c0_i32_1 = arith.constant 0 : i32
    return %c0_i32, %c0_i32_0 : i32, i32
  }
  func.func @transform_7(%arg0: i32) -> (i32, i32, i32) {
    %c0_i32 = arith.constant 0 : i32
    %c0_i32_0 = arith.constant 0 : i32
    %c0_i32_1 = arith.constant 0 : i32
    %c0_i32_2 = arith.constant 0 : i32
    return %c0_i32, %c0_i32_0, %c0_i32_1 : i32, i32, i32
  }
  func.func @transform_8(%arg0: i32) -> (i32, i32) {
    %c0_i32 = arith.constant 0 : i32
    %c0_i32_0 = arith.constant 0 : i32
    %c0_i32_1 = arith.constant 0 : i32
    return %c0_i32, %c0_i32_0 : i32, i32
  }
  func.func @transform_9(%arg0: i32) -> (i32, i32, i32) {
    %c0_i32 = arith.constant 0 : i32
    %c0_i32_0 = arith.constant 0 : i32
    %c0_i32_1 = arith.constant 0 : i32
    return %arg0, %c0_i32, %c0_i32_0 : i32, i32, i32
  }
}

</mosaic_0001>

<llo_original>
// kernel: _lambda_.1
$region0: #{_lambda_.1}
  #allocation0 [shape = 'u32[]', space=smem, size = 0x4, offset = 0x4, fixed_abs, tag = 'smem constant byte address 0x4 - core index']
  #allocation1 [shape = 'u32[144,128]{1,0:T(1,128)}', space=vmem, size = 0x12000, scoped, tag = 'internal scratch']
  %s0 = inlined_call_operand.vmem [shape: f32[2,16,64], index: 0, kind: input, shape index: {}]
  %s1 = inlined_call_operand.vmem [shape: f32[3,16,16], index: 1, kind: input, shape index: {}]
  %s2 = inlined_call_operand.vmem [shape: f32[3,32,32], index: 2, kind: input, shape index: {}]
  %s3 = inlined_call_operand.hbm [shape: f32[4,3,64,64], index: 3, kind: input, shape index: {}]
  %s4 = inlined_call_operand.vmem [shape: f32[4,1,64], index: 4, kind: input, shape index: {}]
  %s5 = inlined_call_operand.vmem [shape: f32[32,16], index: 5, kind: input, shape index: {}]
  %s6 = inlined_call_operand.vmem [shape: f32[64,128], index: 6, kind: input, shape index: {}]
  %s7 = inlined_call_operand.hbm [shape: f32[3,128,256], index: 7, kind: input, shape index: {}]
  %s8 = inlined_call_operand.vmem [shape: f32[1,256], index: 8, kind: input, shape index: {}]
  %s9 = inlined_call_operand.vmem [shape: f32[2,32,256], index: 9, kind: output, shape index: {}]
  %s10 = sld [smem:[#allocation0]]
  $region77: #{_lambda_.1} parent=0
    _
  %s12 = ssub.s32 1, %s10
  %s13 = scalar_select 0, %s12, %s10
  $region1: #{_lambda_.1} parent=0
    #allocation2 [shape = 'u8[393216]{0}', space=vmem, size = 0x60000, scoped, tag = 'input window, operand 3, single buffered']
    #allocation3 [shape = 's32[2]{0}', space=sflag, size = 0x8, scoped, tag = 'scoped memory for _lambda_.1']
    #allocation4 [shape = 'u8[393216]{0}', space=vmem, size = 0x60000, scoped, tag = 'input window, operand 7, single buffered']
    #allocation5 [shape = 's32[1]{0}', space=sflag, size = 0x4, scoped, tag = 'scoped memory for _lambda_.1']
    %14 = vsyncpa [#allocation3], 0
    %15 = vsyncpa [#allocation5], 0
    loop: start=0, step=1, limit=4
    $region2: #{_lambda_.1} parent=1 // loop_pre_header
      _
    $region3: #{_lambda_.1} parent=1 // loop_header
      %s17 = sphi 0, %s21
      %p18 = scmp.ge.s32.totalorder %s17, 4
      %s27 = sphi 0, %s29
      %s30 = sphi 0, %s27
      %s31 = sphi 0, %s30
      %s47 = sphi 0, %s31
      %s51 = sphi 0, %s51
      %s53 = sphi 0, %s51
      %s54 = sphi 0, %s53
      %s68 = sphi 0, %s54
      %s72 = sphi 0, %s72
      %s74 = sphi 0, %s72
      %s75 = sphi 0, %s74
      %s89 = sphi 0, %s75
      %s93 = sphi 0, %s93
      %s95 = sphi 0, %s93
      %s96 = sphi 0, %s95
      %s110 = sphi 0, %s96
      %s114 = sphi 0, %s114
      %s116 = sphi 0, %s114
      %s117 = sphi 0, %s116
      %s131 = sphi 0, %s117
      %s135 = sphi 0, %s135
      %s137 = sphi 0, %s135
      %s138 = sphi 0, %s137
      %s152 = sphi 0, %s138
      %s156 = sphi 0, %s156
      %s158 = sphi 0, %s156
      %s159 = sphi 0, %s158
      %s173 = sphi 0, %s159
      %s177 = sphi 0, %s177
      %s179 = sphi 0, %s177
      %s180 = sphi 0, %s179
      %s194 = sphi 0, %s180
      %s198 = sphi 0, %s198
      %s200 = sphi 0, %s198
      %s201 = sphi 0, %s200
      %s215 = sphi 0, %s201
      %s221 = sphi 0, %s223
      %s224 = sphi 0, %s221
      %s225 = sphi 0, %s224
      %s241 = sphi 0, %s225
    $region4: #{_lambda_.1} parent=1 // loop_header_branch
      %20 = sbr.rel (%p18) target = $region8
    $region5: #{_lambda_.1} parent=1 // loop_body
      %s22 = ssub.s32 %s17, 1
      %s23 = ssub.s32 %s17, 2
      %s24 = sadd.s32 %s17, 1
      %s25 = ssub.s32 %s17, %s24
      %p26 = scmp.eq.s32.totalorder %s25, 0
      %s28 = sadd.s32 %s27, 1
      %s29 = scalar_select %p26, %s27, %s28
      %p32 = pneg %p26
      %p33 = scmp.eq.s32.totalorder %s17, 1
      %p34 = por %p32, %p33
      %p35 = scmp.ne.s32.totalorder %s27, %s30
      %p36 = scmp.eq.s32.totalorder %s17, 0
      %p37 = por %p35, %p36
      %p38 = scmp.ne.s32.totalorder %s27, %s30
      %p39 = scmp.eq.s32.totalorder %s22, 1
      %p40 = por %p38, %p39
      %p41 = scmp.ne.s32.totalorder %s30, %s31
      %p42 = scmp.eq.s32.totalorder %s22, 0
      %p43 = por %p41, %p42
      %p44 = scmp.ne.s32.totalorder %s30, %s31
      %p45 = scmp.eq.s32.totalorder %s23, 1
      %p46 = por %p44, %p45
      %p48 = scmp.ne.s32.totalorder %s31, %s47
      %p49 = scmp.eq.s32.totalorder %s23, 0
      %p50 = por %p48, %p49
      %s52 = sadd.s32 %s51, 1
      %p55 = scmp.eq.s32.totalorder %s17, 1
      %p56 = scmp.ne.s32.totalorder %s51, %s53
      %p57 = scmp.eq.s32.totalorder %s17, 0
      %p58 = por %p56, %p57
      %p59 = scmp.ne.s32.totalorder %s51, %s53
      %p60 = scmp.eq.s32.totalorder %s22, 1
      %p61 = por %p59, %p60
      %p62 = scmp.ne.s32.totalorder %s53, %s54
      %p63 = scmp.eq.s32.totalorder %s22, 0
      %p64 = por %p62, %p63
      %p65 = scmp.ne.s32.totalorder %s53, %s54
      %p66 = scmp.eq.s32.totalorder %s23, 1
      %p67 = por %p65, %p66
      %p69 = scmp.ne.s32.totalorder %s54, %s68
      %p70 = scmp.eq.s32.totalorder %s23, 0
      %p71 = por %p69, %p70
      %s73 = sadd.s32 %s72, 1
      %p76 = scmp.eq.s32.totalorder %s17, 1
      %p77 = scmp.ne.s32.totalorder %s72, %s74
      %p78 = scmp.eq.s32.totalorder %s17, 0
      %p79 = por %p77, %p78
      %p80 = scmp.ne.s32.totalorder %s72, %s74
      %p81 = scmp.eq.s32.totalorder %s22, 1
      %p82 = por %p80, %p81
      %p83 = scmp.ne.s32.totalorder %s74, %s75
      %p84 = scmp.eq.s32.totalorder %s22, 0
      %p85 = por %p83, %p84
      %p86 = scmp.ne.s32.totalorder %s74, %s75
      %p87 = scmp.eq.s32.totalorder %s23, 1
      %p88 = por %p86, %p87
      %p90 = scmp.ne.s32.totalorder %s75, %s89
      %p91 = scmp.eq.s32.totalorder %s23, 0
      %p92 = por %p90, %p91
      %s94 = sadd.s32 %s93, 1
      %p97 = scmp.eq.s32.totalorder %s17, 1
      %p98 = scmp.ne.s32.totalorder %s93, %s95
      %p99 = scmp.eq.s32.totalorder %s17, 0
      %p100 = por %p98, %p99
      %p101 = scmp.ne.s32.totalorder %s93, %s95
      %p102 = scmp.eq.s32.totalorder %s22, 1
      %p103 = por %p101, %p102
      %p104 = scmp.ne.s32.totalorder %s95, %s96
      %p105 = scmp.eq.s32.totalorder %s22, 0
      %p106 = por %p104, %p105
      %p107 = scmp.ne.s32.totalorder %s95, %s96
      %p108 = scmp.eq.s32.totalorder %s23, 1
      %p109 = por %p107, %p108
      %p111 = scmp.ne.s32.totalorder %s96, %s110
      %p112 = scmp.eq.s32.totalorder %s23, 0
      %p113 = por %p111, %p112
      %s115 = sadd.s32 %s114, 1
      %p118 = scmp.eq.s32.totalorder %s17, 1
      %p119 = scmp.ne.s32.totalorder %s114, %s116
      %p120 = scmp.eq.s32.totalorder %s17, 0
      %p121 = por %p119, %p120
      %p122 = scmp.ne.s32.totalorder %s114, %s116
      %p123 = scmp.eq.s32.totalorder %s22, 1
      %p124 = por %p122, %p123
      %p125 = scmp.ne.s32.totalorder %s116, %s117
      %p126 = scmp.eq.s32.totalorder %s22, 0
      %p127 = por %p125, %p126
      %p128 = scmp.ne.s32.totalorder %s116, %s117
      %p129 = scmp.eq.s32.totalorder %s23, 1
      %p130 = por %p128, %p129
      %p132 = scmp.ne.s32.totalorder %s117, %s131
      %p133 = scmp.eq.s32.totalorder %s23, 0
      %p134 = por %p132, %p133
      %s136 = sadd.s32 %s135, 1
      %p139 = scmp.eq.s32.totalorder %s17, 1
      %p140 = scmp.ne.s32.totalorder %s135, %s137
      %p141 = scmp.eq.s32.totalorder %s17, 0
      %p142 = por %p140, %p141
      %p143 = scmp.ne.s32.totalorder %s135, %s137
      %p144 = scmp.eq.s32.totalorder %s22, 1
      %p145 = por %p143, %p144
      %p146 = scmp.ne.s32.totalorder %s137, %s138
      %p147 = scmp.eq.s32.totalorder %s22, 0
      %p148 = por %p146, %p147
      %p149 = scmp.ne.s32.totalorder %s137, %s138
      %p150 = scmp.eq.s32.totalorder %s23, 1
      %p151 = por %p149, %p150
      %p153 = scmp.ne.s32.totalorder %s138, %s152
      %p154 = scmp.eq.s32.totalorder %s23, 0
      %p155 = por %p153, %p154
      %s157 = sadd.s32 %s156, 1
      %p160 = scmp.eq.s32.totalorder %s17, 1
      %p161 = scmp.ne.s32.totalorder %s156, %s158
      %p162 = scmp.eq.s32.totalorder %s17, 0
      %p163 = por %p161, %p162
      %p164 = scmp.ne.s32.totalorder %s156, %s158
      %p165 = scmp.eq.s32.totalorder %s22, 1
      %p166 = por %p164, %p165
      %p167 = scmp.ne.s32.totalorder %s158, %s159
      %p168 = scmp.eq.s32.totalorder %s22, 0
      %p169 = por %p167, %p168
      %p170 = scmp.ne.s32.totalorder %s158, %s159
      %p171 = scmp.eq.s32.totalorder %s23, 1
      %p172 = por %p170, %p171
      %p174 = scmp.ne.s32.totalorder %s159, %s173
      %p175 = scmp.eq.s32.totalorder %s23, 0
      %p176 = por %p174, %p175
      %s178 = sadd.s32 %s177, 1
      %p181 = scmp.eq.s32.totalorder %s17, 1
      %p182 = scmp.ne.s32.totalorder %s177, %s179
      %p183 = scmp.eq.s32.totalorder %s17, 0
      %p184 = por %p182, %p183
      %p185 = scmp.ne.s32.totalorder %s177, %s179
      %p186 = scmp.eq.s32.totalorder %s22, 1
      %p187 = por %p185, %p186
      %p188 = scmp.ne.s32.totalorder %s179, %s180
      %p189 = scmp.eq.s32.totalorder %s22, 0
      %p190 = por %p188, %p189
      %p191 = scmp.ne.s32.totalorder %s179, %s180
      %p192 = scmp.eq.s32.totalorder %s23, 1
      %p193 = por %p191, %p192
      %p195 = scmp.ne.s32.totalorder %s180, %s194
      %p196 = scmp.eq.s32.totalorder %s23, 0
      %p197 = por %p195, %p196
      %s199 = sadd.s32 %s198, 1
      %p202 = scmp.eq.s32.totalorder %s17, 1
      %p203 = scmp.ne.s32.totalorder %s198, %s200
      %p204 = scmp.eq.s32.totalorder %s17, 0
      %p205 = por %p203, %p204
      %p206 = scmp.ne.s32.totalorder %s198, %s200
      %p207 = scmp.eq.s32.totalorder %s22, 1
      %p208 = por %p206, %p207
      %p209 = scmp.ne.s32.totalorder %s200, %s201
      %p210 = scmp.eq.s32.totalorder %s22, 0
      %p211 = por %p209, %p210
      %p212 = scmp.ne.s32.totalorder %s200, %s201
      %p213 = scmp.eq.s32.totalorder %s23, 1
      %p214 = por %p212, %p213
      %p216 = scmp.ne.s32.totalorder %s201, %s215
      %p217 = scmp.eq.s32.totalorder %s23, 0
      %p218 = por %p216, %p217
      %s219 = ssub.s32 %s17, %s24
      %p220 = scmp.eq.s32.totalorder %s219, 0
      %s222 = sadd.s32 %s221, 1
      %s223 = scalar_select %p220, %s221, %s222
      %p226 = pneg %p220
      %p227 = scmp.eq.s32.totalorder %s17, 1
      %p228 = por %p226, %p227
      %p229 = scmp.ne.s32.totalorder %s221, %s224
      %p230 = scmp.eq.s32.totalorder %s17, 0
      %p231 = por %p229, %p230
      %p232 = scmp.ne.s32.totalorder %s221, %s224
      %p233 = scmp.eq.s32.totalorder %s22, 1
      %p234 = por %p232, %p233
      %p235 = scmp.ne.s32.totalorder %s224, %s225
      %p236 = scmp.eq.s32.totalorder %s22, 0
      %p237 = por %p235, %p236
      %p238 = scmp.ne.s32.totalorder %s224, %s225
      %p239 = scmp.eq.s32.totalorder %s23, 1
      %p240 = por %p238, %p239
      %p242 = scmp.ne.s32.totalorder %s225, %s241
      %p243 = scmp.eq.s32.totalorder %s23, 0
      %p244 = por %p242, %p243
      %p245 = scmp.le.s32.totalorder 1, %s17
      %p246 = scmp.lt.s32.totalorder %s17, 3
      %p247 = pnand %p245, %p246
      %p248 = pneg %p247
      // Predicated region
      $region9: #{_lambda_.1} parent=5 // pred_check
        _
      $region10: #{_lambda_.1} parent=5 // pred_check_branch
        %250 = sbr.rel (%p247) target = $region12
      $region11: #{_lambda_.1} parent=5 // pred_region
        %s251 = ssub.s32 %s17, 1
        // Predicated region
        $region13: #{_lambda_.1} parent=11 // pred_check
          %p252 = pneg %p64
        $region14: #{_lambda_.1} parent=11 // pred_check_branch
          %254 = sbr.rel (%p252) target = $region16
        $region15: #{_lambda_.1} parent=11 // pred_region
          _
        $region16: #{_lambda_.1} parent=11 // pred_fallthru
          _
        // Predicated region
        $region17: #{_lambda_.1} parent=11 // pred_check
          %p255 = pneg %p85
        $region18: #{_lambda_.1} parent=11 // pred_check_branch
          %257 = sbr.rel (%p255) target = $region20
        $region19: #{_lambda_.1} parent=11 // pred_region
          _
        $region20: #{_lambda_.1} parent=11 // pred_fallthru
          _
        // Predicated region
        $region21: #{_lambda_.1} parent=11 // pred_check
          %p258 = pneg %p106
        $region22: #{_lambda_.1} parent=11 // pred_check_branch
          %260 = sbr.rel (%p258) target = $region24
        $region23: #{_lambda_.1} parent=11 // pred_region
          %s262 = ssub.s32 12288, 12288
          %263 = vsyncadd [#allocation3], %s262
          %s264 = sshll.u32 [#allocation2], 4
          %s265 = int_to_ptr.vmem [resolvable:$true] %s264
          %270 = dma.hbm_to_vmem [thread:$0]  %s3, 12288, %s265, [#allocation3], 128, 128, 8
        $region24: #{_lambda_.1} parent=11 // pred_fallthru
          _
        // Predicated region
        $region25: #{_lambda_.1} parent=11 // pred_check
          %p271 = pneg %p127
        $region26: #{_lambda_.1} parent=11 // pred_check_branch
          %273 = sbr.rel (%p271) target = $region28
        $region27: #{_lambda_.1} parent=11 // pred_region
          _
        $region28: #{_lambda_.1} parent=11 // pred_fallthru
          _
        // Predicated region
        $region29: #{_lambda_.1} parent=11 // pred_check
          %p274 = pneg %p148
        $region30: #{_lambda_.1} parent=11 // pred_check_branch
          %276 = sbr.rel (%p274) target = $region32
        $region31: #{_lambda_.1} parent=11 // pred_region
          _
        $region32: #{_lambda_.1} parent=11 // pred_fallthru
          _
        // Predicated region
        $region33: #{_lambda_.1} parent=11 // pred_check
          %p277 = pneg %p169
        $region34: #{_lambda_.1} parent=11 // pred_check_branch
          %279 = sbr.rel (%p277) target = $region36
        $region35: #{_lambda_.1} parent=11 // pred_region
          _
        $region36: #{_lambda_.1} parent=11 // pred_fallthru
          _
        // Predicated region
        $region37: #{_lambda_.1} parent=11 // pred_check
          %p280 = pneg %p190
        $region38: #{_lambda_.1} parent=11 // pred_check_branch
          %282 = sbr.rel (%p280) target = $region40
        $region39: #{_lambda_.1} parent=11 // pred_region
          %s284 = ssub.s32 12288, 12288
          %285 = vsyncadd [#allocation5], %s284
          %s286 = sshll.u32 [#allocation4], 4
          %s287 = int_to_ptr.vmem [resolvable:$true] %s286
          %292 = dma.hbm_to_vmem [thread:$0]  %s7, 12288, %s287, [#allocation5], 256, 256, 16
        $region40: #{_lambda_.1} parent=11 // pred_fallthru
          _
        // Predicated region
        $region41: #{_lambda_.1} parent=11 // pred_check
          %p293 = pneg %p211
        $region42: #{_lambda_.1} parent=11 // pred_check_branch
          %295 = sbr.rel (%p293) target = $region44
        $region43: #{_lambda_.1} parent=11 // pred_region
          _
        $region44: #{_lambda_.1} parent=11 // pred_fallthru
          _
      $region12: #{_lambda_.1} parent=5 // pred_fallthru
        _
      %p296 = scmp.lt.s32.totalorder %s17, 2
      // Predicated region
      $region45: #{_lambda_.1} parent=5 // pred_check
        %p297 = pneg %p296
      $region46: #{_lambda_.1} parent=5 // pred_check_branch
        %299 = sbr.rel (%p297) target = $region48
      $region47: #{_lambda_.1} parent=5 // pred_region
        // Predicated region
        $region49: #{_lambda_.1} parent=47 // pred_check
          %p300 = pneg %p37
        $region50: #{_lambda_.1} parent=47 // pred_check_branch
          %302 = sbr.rel (%p300) target = $region52
        $region51: #{_lambda_.1} parent=47 // pred_region
          %p303 = scmp.lt.s32.totalorder %s17, 1
          %s304 = scalar_select %p303, %s17, 1
          %s305 = smul.addr %s304, 2
          %s306 = smul.addr %s305, 8
          %s307 = scalar_lea.vmem %s0, %s306
        $region52: #{_lambda_.1} parent=47 // pred_fallthru
          _
      $region48: #{_lambda_.1} parent=5 // pred_fallthru
        _
      %p308 = scmp.le.s32.totalorder 1, %s17
      %p309 = scmp.lt.s32.totalorder %s17, 3
      %p310 = pnand %p308, %p309
      %p311 = pneg %p310
      // Predicated region
      $region53: #{_lambda_.1} parent=5 // pred_check
        _
      $region54: #{_lambda_.1} parent=5 // pred_check_branch
        %313 = sbr.rel (%p310) target = $region56
      $region55: #{_lambda_.1} parent=5 // pred_region
        %s314 = ssub.s32 %s17, 1
        // Predicated region
        $region57: #{_lambda_.1} parent=55 // pred_check
          %p315 = pneg %p106
        $region58: #{_lambda_.1} parent=55 // pred_check_branch
          %317 = sbr.rel (%p315) target = $region60
        $region59: #{_lambda_.1} parent=55 // pred_region
          %318 = dma.done [#allocation3], 12288
        $region60: #{_lambda_.1} parent=55 // pred_fallthru
          _
        // Predicated region
        $region61: #{_lambda_.1} parent=55 // pred_check
          %p319 = pneg %p190
        $region62: #{_lambda_.1} parent=55 // pred_check_branch
          %321 = sbr.rel (%p319) target = $region64
        $region63: #{_lambda_.1} parent=55 // pred_region
          %322 = dma.done [#allocation5], 12288
        $region64: #{_lambda_.1} parent=55 // pred_fallthru
          _
        %p323 = scmp.lt.s32.totalorder %s22, 1
        %s324 = scalar_select %p323, %s22, 1
        %s325 = smul.addr %s324, 2
        %s326 = smul.addr %s325, 8
        %s327 = scalar_lea.vmem %s0, %s326
        %p328 = pneg %p43
        %p329 = pneg %p40
        %p330 = pneg %p64
        %p331 = pneg %p61
        %p332 = pneg %p85
        %p333 = pneg %p82
        %p334 = pneg %p106
        %p335 = pneg %p103
        %p336 = pneg %p127
        %p337 = pneg %p124
        %p338 = pneg %p148
        %p339 = pneg %p145
        %p340 = pneg %p169
        %p341 = pneg %p166
        %p342 = pneg %p190
        %p343 = pneg %p187
        %p344 = pneg %p211
        %p345 = pneg %p208
        %p346 = pneg %p237
        %p347 = pneg %p234
        %p348 = scmp.lt.s32.totalorder %s22, 1
        %s349 = scalar_select %p348, %s22, 1
        %s350 = smul.addr %s349, 8
        %s351 = smul.addr %s350, 8
        %s352 = scalar_lea.vmem %s9, %s351
        %p353 = scmp.lt.s32.totalorder %s22, 1
        %s354 = scalar_select %p353, %s22, 1
        %s355 = smul.addr %s354, 2
        %s356 = smul.addr %s355, 8
        %s357 = scalar_lea.vmem %s0, %s356
        %p358 = scmp.lt.s32.totalorder %s22, 1
        %s359 = scalar_select %p358, %s22, 1
        %s360 = smul.addr %s359, 8
        %s361 = smul.addr %s360, 8
        %s362 = scalar_lea.vmem %s9, %s361
        %v363 = vld [vmem:[%s357] sm:$0xff]
        %v364 = vld [vmem:[%s357 + $0x8] sm:$0xff]
        %v365 = vld [vmem:[%s4] sm:$0x1]
        %v366 = vld [vmem:[#allocation2] sm:$0xff]
        %v367 = vld [vmem:[#allocation2 + $0x8] sm:$0xff]
        %v368 = vld [vmem:[#allocation2 + $0x10] sm:$0xff]
        %v369 = vld [vmem:[#allocation2 + $0x18] sm:$0xff]
        %v370 = vld [vmem:[#allocation2 + $0x20] sm:$0xff]
        %v371 = vld [vmem:[#allocation2 + $0x28] sm:$0xff]
        %v372 = vld [vmem:[#allocation2 + $0x30] sm:$0xff]
        %v373 = vld [vmem:[#allocation2 + $0x38] sm:$0xff]
        %vm374 = vcmask 523264
        %v376 = vsel %vm374, %v363, 0
        %v379 = vsel %vm374, %v364, 0
        %381 = vmatprep.subr.mxu0 0.0
        %382 = vmatpush1.msra.mxu0 %v366
        %383 = vmatprep.subr.mxu0 0.0
        %384 = vmatpush1.msra.mxu0 %v367
        %385 = vmatprep.subr.mxu0 0.0
        %386 = vmatpush1.msra.mxu0 %v368
        %387 = vmatprep.subr.mxu0 0.0
        %388 = vmatpush1.msra.mxu0 %v369
        %389 = vmatprep.subr.mxu0 0.0
        %390 = vmatpush1.msra.mxu0 %v370
        %391 = vmatprep.subr.mxu0 0.0
        %392 = vmatpush1.msra.mxu0 %v371
        %393 = vmatprep.subr.mxu0 0.0
        %394 = vmatpush1.msra.mxu0 %v372
        %395 = vmatprep.subr.mxu0 0.0
        %396 = vmatpush1.msra.mxu0 %v373
        %397 = vmatprep.subr.mxu0 0.0
        %398 = vmatpush1.msra.mxu0 0.0
        %399 = vmatprep.subr.mxu0 0.0
        %400 = vmatpush1.msra.mxu0 0.0
        %401 = vmatprep.subr.mxu0 0.0
        %402 = vmatpush1.msra.mxu0 0.0
        %403 = vmatprep.subr.mxu0 0.0
        %404 = vmatpush1.msra.mxu0 0.0
        %405 = vmatprep.subr.mxu0 0.0
        %406 = vmatpush1.msra.mxu0 0.0
        %407 = vmatprep.subr.mxu0 0.0
        %408 = vmatpush1.msra.mxu0 0.0
        %409 = vmatprep.subr.mxu0 0.0
        %410 = vmatpush1.msra.mxu0 0.0
        %411 = vmatprep.subr.mxu0 0.0
        %412 = vmatpush1.msra.mxu0 0.0
        %413 = vmatprep.subr.mxu0 0.0
        %414 = vmatpush1.msra.mxu0 0.0
        %415 = vmatprep.subr.mxu0 0.0
        %416 = vmatpush1.msra.mxu0 0.0
        %417 = vmatprep.subr.mxu0 0.0
        %418 = vmatpush1.msra.mxu0 0.0
        %419 = vmatprep.subr.mxu0 0.0
        %420 = vmatpush1.msra.mxu0 0.0
        %421 = vmatprep.subr.mxu0 0.0
        %422 = vmatpush1.msra.mxu0 0.0
        %423 = vmatprep.subr.mxu0 0.0
        %424 = vmatpush1.msra.mxu0 0.0
        %425 = vmatprep.subr.mxu0 0.0
        %426 = vmatpush1.msra.mxu0 0.0
        %427 = vmatprep.subr.mxu0 0.0
        %428 = vmatpush1.msra.mxu0 0.0
        %429 = vmatprep.subr.mxu0 0.0
        %430 = vmatpush1.msra.mxu0 0.0
        %431 = vmatprep.subr.mxu0 0.0
        %432 = vmatpush1.msra.mxu0 0.0
        %433 = vmatprep.subr.mxu0 0.0
        %434 = vmatpush1.msra.mxu0 0.0
        %435 = vmatprep.subr.mxu0 0.0
        %436 = vmatpush1.msra.mxu0 0.0
        %437 = vmatprep.subr.mxu0 0.0
        %438 = vmatpush1.msra.mxu0 0.0
        %439 = vmatprep.subr.mxu0 0.0
        %440 = vmatpush1.msra.mxu0 0.0
        %441 = vmatprep.subr.mxu0 0.0
        %442 = vmatpush1.msra.mxu0 0.0
        %443 = vmatprep.subr.mxu0 0.0
        %444 = vmatpush1.msra.mxu0 0.0
        %445 = vmatprep.mubr.f32.mxu0 0.0
        %446 = vmatmul.mubr.f32.gmra.mrb[0].mxu0 %v376
        %v447 = vpop.f32.mrb[0].mxu0
        %v448 = vadd.f32 0.0, %v447
        %v449 = vpop.f32.mrb[0].mxu0
        %450 = vmatprep.mubr.f32.mxu0 0.0
        %451 = vmatmul.mubr.f32.gmra.mrb[0].mxu0 %v379
        %v452 = vpop.f32.mrb[0].mxu0
        %v453 = vadd.f32 0.0, %v452
        %v454 = vpop.f32.mrb[0].mxu0
        %455 = vdwg.mxu0
        %v456 = vld [vmem:[%s1] sm:$0xff]
        %v457 = vld [vmem:[%s1 + $0x8] sm:$0xff]
        %s458 = scalar_lea.vmem [#allocation2], 64
        %v459 = vld [vmem:[%s458] sm:$0xff]
        %v460 = vld [vmem:[%s458 + $0x8] sm:$0xff]
        %v461 = vld [vmem:[%s458 + $0x10] sm:$0xff]
        %v462 = vld [vmem:[%s458 + $0x18] sm:$0xff]
        %v463 = vld [vmem:[%s458 + $0x20] sm:$0xff]
        %v464 = vld [vmem:[%s458 + $0x28] sm:$0xff]
        %v465 = vld [vmem:[%s458 + $0x30] sm:$0xff]
        %v466 = vld [vmem:[%s458 + $0x38] sm:$0xff]
        %467 = vmatprep.subr.mxu0 0.0
        %468 = vmatpush1.msra.mxu0 %v459
        %469 = vmatprep.subr.mxu0 0.0
        %470 = vmatpush1.msra.mxu0 %v460
        %471 = vmatprep.subr.mxu0 0.0
        %472 = vmatpush1.msra.mxu0 %v461
        %473 = vmatprep.subr.mxu0 0.0
        %474 = vmatpush1.msra.mxu0 %v462
        %475 = vmatprep.subr.mxu0 0.0
        %476 = vmatpush1.msra.mxu0 %v463
        %477 = vmatprep.subr.mxu0 0.0
        %478 = vmatpush1.msra.mxu0 %v464
        %479 = vmatprep.subr.mxu0 0.0
        %480 = vmatpush1.msra.mxu0 %v465
        %481 = vmatprep.subr.mxu0 0.0
        %482 = vmatpush1.msra.mxu0 %v466
        %483 = vmatprep.subr.mxu0 0.0
        %484 = vmatpush1.msra.mxu0 0.0
        %485 = vmatprep.subr.mxu0 0.0
        %486 = vmatpush1.msra.mxu0 0.0
        %487 = vmatprep.subr.mxu0 0.0
        %488 = vmatpush1.msra.mxu0 0.0
        %489 = vmatprep.subr.mxu0 0.0
        %490 = vmatpush1.msra.mxu0 0.0
        %491 = vmatprep.subr.mxu0 0.0
        %492 = vmatpush1.msra.mxu0 0.0
        %493 = vmatprep.subr.mxu0 0.0
        %494 = vmatpush1.msra.mxu0 0.0
        %495 = vmatprep.subr.mxu0 0.0
        %496 = vmatpush1.msra.mxu0 0.0
        %497 = vmatprep.subr.mxu0 0.0
        %498 = vmatpush1.msra.mxu0 0.0
        %499 = vmatprep.subr.mxu0 0.0
        %500 = vmatpush1.msra.mxu0 0.0
        %501 = vmatprep.subr.mxu0 0.0
        %502 = vmatpush1.msra.mxu0 0.0
        %503 = vmatprep.subr.mxu0 0.0
        %504 = vmatpush1.msra.mxu0 0.0
        %505 = vmatprep.subr.mxu0 0.0
        %506 = vmatpush1.msra.mxu0 0.0
        %507 = vmatprep.subr.mxu0 0.0
        %508 = vmatpush1.msra.mxu0 0.0
        %509 = vmatprep.subr.mxu0 0.0
        %510 = vmatpush1.msra.mxu0 0.0
        %511 = vmatprep.subr.mxu0 0.0
        %512 = vmatpush1.msra.mxu0 0.0
        %513 = vmatprep.subr.mxu0 0.0
        %514 = vmatpush1.msra.mxu0 0.0
        %515 = vmatprep.subr.mxu0 0.0
        %516 = vmatpush1.msra.mxu0 0.0
        %517 = vmatprep.subr.mxu0 0.0
        %518 = vmatpush1.msra.mxu0 0.0
        %519 = vmatprep.subr.mxu0 0.0
        %520 = vmatpush1.msra.mxu0 0.0
        %521 = vmatprep.subr.mxu0 0.0
        %522 = vmatpush1.msra.mxu0 0.0
        %523 = vmatprep.subr.mxu0 0.0
        %524 = vmatpush1.msra.mxu0 0.0
        %525 = vmatprep.subr.mxu0 0.0
        %526 = vmatpush1.msra.mxu0 0.0
        %527 = vmatprep.subr.mxu0 0.0
        %528 = vmatpush1.msra.mxu0 0.0
        %529 = vmatprep.subr.mxu0 0.0
        %530 = vmatpush1.msra.mxu0 0.0
        %531 = vmatprep.mubr.f32.mxu0 0.0
        %532 = vmatmul.mubr.f32.gmra.mrb[0].mxu0 %v376
        %v533 = vpop.f32.mrb[0].mxu0
        %v534 = vadd.f32 0.0, %v533
        %v535 = vpop.f32.mrb[0].mxu0
        %536 = vmatprep.mubr.f32.mxu0 0.0
        %537 = vmatmul.mubr.f32.gmra.mrb[0].mxu0 %v379
        %v538 = vpop.f32.mrb[0].mxu0
        %v539 = vadd.f32 0.0, %v538
        %v540 = vpop.f32.mrb[0].mxu0
        %541 = vdwg.mxu0
        %s542 = scalar_lea.vmem %s1, 16
        %v543 = vld [vmem:[%s542] sm:$0xff]
        %v544 = vld [vmem:[%s542 + $0x8] sm:$0xff]
        %vm545 = vcmask 130048
        %v547 = vsel %vm545, %v543, 0
        %v550 = vsel %vm545, %v544, 0
        %552 = vmatprep.subr.mxu0 0.0
        %553 = vmatpush1.msra.mxu0 %v534
        %554 = vmatprep.subr.mxu0 0.0
        %555 = vmatpush1.msra.mxu0 %v539
        %556 = vmatprep.subr.mxu0 0.0
        %557 = vmatpush1.msra.mxu0 0.0
        %558 = vmatprep.subr.mxu0 0.0
        %559 = vmatpush1.msra.mxu0 0.0
        %560 = vmatprep.subr.mxu0 0.0
        %561 = vmatpush1.msra.mxu0 0.0
        %562 = vmatprep.subr.mxu0 0.0
        %563 = vmatpush1.msra.mxu0 0.0
        %564 = vmatprep.subr.mxu0 0.0
        %565 = vmatpush1.msra.mxu0 0.0
        %566 = vmatprep.subr.mxu0 0.0
        %567 = vmatpush1.msra.mxu0 0.0
        %568 = vmatprep.subr.mxu0 0.0
        %569 = vmatpush1.msra.mxu0 0.0
        %570 = vmatprep.subr.mxu0 0.0
        %571 = vmatpush1.msra.mxu0 0.0
        %572 = vmatprep.subr.mxu0 0.0
        %573 = vmatpush1.msra.mxu0 0.0
        %574 = vmatprep.subr.mxu0 0.0
        %575 = vmatpush1.msra.mxu0 0.0
        %576 = vmatprep.subr.mxu0 0.0
        %577 = vmatpush1.msra.mxu0 0.0
        %578 = vmatprep.subr.mxu0 0.0
        %579 = vmatpush1.msra.mxu0 0.0
        %580 = vmatprep.subr.mxu0 0.0
        %581 = vmatpush1.msra.mxu0 0.0
        %582 = vmatprep.subr.mxu0 0.0
        %583 = vmatpush1.msra.mxu0 0.0
        %584 = vmatprep.subr.mxu0 0.0
        %585 = vmatpush1.msra.mxu0 0.0
        %586 = vmatprep.subr.mxu0 0.0
        %587 = vmatpush1.msra.mxu0 0.0
        %588 = vmatprep.subr.mxu0 0.0
        %589 = vmatpush1.msra.mxu0 0.0
        %590 = vmatprep.subr.mxu0 0.0
        %591 = vmatpush1.msra.mxu0 0.0
        %592 = vmatprep.subr.mxu0 0.0
        %593 = vmatpush1.msra.mxu0 0.0
        %594 = vmatprep.subr.mxu0 0.0
        %595 = vmatpush1.msra.mxu0 0.0
        %596 = vmatprep.subr.mxu0 0.0
        %597 = vmatpush1.msra.mxu0 0.0
        %598 = vmatprep.subr.mxu0 0.0
        %599 = vmatpush1.msra.mxu0 0.0
        %600 = vmatprep.subr.mxu0 0.0
        %601 = vmatpush1.msra.mxu0 0.0
        %602 = vmatprep.subr.mxu0 0.0
        %603 = vmatpush1.msra.mxu0 0.0
        %604 = vmatprep.subr.mxu0 0.0
        %605 = vmatpush1.msra.mxu0 0.0
        %606 = vmatprep.subr.mxu0 0.0
        %607 = vmatpush1.msra.mxu0 0.0
        %608 = vmatprep.subr.mxu0 0.0
        %609 = vmatpush1.msra.mxu0 0.0
        %610 = vmatprep.subr.mxu0 0.0
        %611 = vmatpush1.msra.mxu0 0.0
        %612 = vmatprep.subr.mxu0 0.0
        %613 = vmatpush1.msra.mxu0 0.0
        %614 = vmatprep.subr.mxu0 0.0
        %615 = vmatpush1.msra.mxu0 0.0
        %616 = vmatprep.mubr.f32.mxu0 0.0
        %617 = vmatmul.mubr.f32.gmra.mrb[0].mxu0 %v547
        %v618 = vpop.f32.mrb[0].mxu0
        %v619 = vadd.f32 0.0, %v618
        %v620 = vpop.f32.mrb[0].mxu0
        %621 = vmatprep.mubr.f32.mxu0 0.0
        %622 = vmatmul.mubr.f32.gmra.mrb[0].mxu0 %v550
        %v623 = vpop.f32.mrb[0].mxu0
        %v624 = vadd.f32 0.0, %v623
        %v625 = vpop.f32.mrb[0].mxu0
        %626 = vdwg.mxu0
        %v628 = vsel %vm545, %v456, 0
        %v631 = vsel %vm545, %v457, 0
        %633 = vmatprep.subr.mxu0 0.0
        %634 = vmatpush1.msra.mxu0 %v448
        %635 = vmatprep.subr.mxu0 0.0
        %636 = vmatpush1.msra.mxu0 %v453
        %637 = vmatprep.subr.mxu0 0.0
        %638 = vmatpush1.msra.mxu0 0.0
        %639 = vmatprep.subr.mxu0 0.0
        %640 = vmatpush1.msra.mxu0 0.0
        %641 = vmatprep.subr.mxu0 0.0
        %642 = vmatpush1.msra.mxu0 0.0
        %643 = vmatprep.subr.mxu0 0.0
        %644 = vmatpush1.msra.mxu0 0.0
        %645 = vmatprep.subr.mxu0 0.0
        %646 = vmatpush1.msra.mxu0 0.0
        %647 = vmatprep.subr.mxu0 0.0
        %648 = vmatpush1.msra.mxu0 0.0
        %649 = vmatprep.subr.mxu0 0.0
        %650 = vmatpush1.msra.mxu0 0.0
        %651 = vmatprep.subr.mxu0 0.0
        %652 = vmatpush1.msra.mxu0 0.0
        %653 = vmatprep.subr.mxu0 0.0
        %654 = vmatpush1.msra.mxu0 0.0
        %655 = vmatprep.subr.mxu0 0.0
        %656 = vmatpush1.msra.mxu0 0.0
        %657 = vmatprep.subr.mxu0 0.0
        %658 = vmatpush1.msra.mxu0 0.0
        %659 = vmatprep.subr.mxu0 0.0
        %660 = vmatpush1.msra.mxu0 0.0
        %661 = vmatprep.subr.mxu0 0.0
        %662 = vmatpush1.msra.mxu0 0.0
        %663 = vmatprep.subr.mxu0 0.0
        %664 = vmatpush1.msra.mxu0 0.0
        %665 = vmatprep.subr.mxu0 0.0
        %666 = vmatpush1.msra.mxu0 0.0
        %667 = vmatprep.subr.mxu0 0.0
        %668 = vmatpush1.msra.mxu0 0.0
        %669 = vmatprep.subr.mxu0 0.0
        %670 = vmatpush1.msra.mxu0 0.0
        %671 = vmatprep.subr.mxu0 0.0
        %672 = vmatpush1.msra.mxu0 0.0
        %673 = vmatprep.subr.mxu0 0.0
        %674 = vmatpush1.msra.mxu0 0.0
        %675 = vmatprep.subr.mxu0 0.0
        %676 = vmatpush1.msra.mxu0 0.0
        %677 = vmatprep.subr.mxu0 0.0
        %678 = vmatpush1.msra.mxu0 0.0
        %679 = vmatprep.subr.mxu0 0.0
        %680 = vmatpush1.msra.mxu0 0.0
        %681 = vmatprep.subr.mxu0 0.0
        %682 = vmatpush1.msra.mxu0 0.0
        %683 = vmatprep.subr.mxu0 0.0
        %684 = vmatpush1.msra.mxu0 0.0
        %685 = vmatprep.subr.mxu0 0.0
        %686 = vmatpush1.msra.mxu0 0.0
        %687 = vmatprep.subr.mxu0 0.0
        %688 = vmatpush1.msra.mxu0 0.0
        %689 = vmatprep.subr.mxu0 0.0
        %690 = vmatpush1.msra.mxu0 0.0
        %691 = vmatprep.subr.mxu0 0.0
        %692 = vmatpush1.msra.mxu0 0.0
        %693 = vmatprep.subr.mxu0 0.0
        %694 = vmatpush1.msra.mxu0 0.0
        %695 = vmatprep.subr.mxu0 0.0
        %696 = vmatpush1.msra.mxu0 0.0
        %697 = vmatprep.mubr.f32.mxu0 0.0
        %698 = vmatmul.mubr.f32.gmra.mrb[0].mxu0 %v628
        %v699 = vpop.f32.mrb[0].mxu0
        %v700 = vadd.f32 %v619, %v699
        %v701 = vpop.f32.mrb[0].mxu0
        %702 = vmatprep.mubr.f32.mxu0 0.0
        %703 = vmatmul.mubr.f32.gmra.mrb[0].mxu0 %v631
        %v704 = vpop.f32.mrb[0].mxu0
        %v705 = vadd.f32 %v624, %v704
        %v706 = vpop.f32.mrb[0].mxu0
        %707 = vdwg.mxu0
        %s708 = scalar_lea.vmem [#allocation2], 128
        %v709 = vld [vmem:[%s708] sm:$0xff]
        %v710 = vld [vmem:[%s708 + $0x8] sm:$0xff]
        %v711 = vld [vmem:[%s708 + $0x10] sm:$0xff]
        %v712 = vld [vmem:[%s708 + $0x18] sm:$0xff]
        %v713 = vld [vmem:[%s708 + $0x20] sm:$0xff]
        %v714 = vld [vmem:[%s708 + $0x28] sm:$0xff]
        %v715 = vld [vmem:[%s708 + $0x30] sm:$0xff]
        %v716 = vld [vmem:[%s708 + $0x38] sm:$0xff]
        %717 = vmatprep.subr.mxu0 0.0
        %718 = vmatpush1.msra.mxu0 %v709
        %719 = vmatprep.subr.mxu0 0.0
        %720 = vmatpush1.msra.mxu0 %v710
        %721 = vmatprep.subr.mxu0 0.0
        %722 = vmatpush1.msra.mxu0 %v711
        %723 = vmatprep.subr.mxu0 0.0
        %724 = vmatpush1.msra.mxu0 %v712
        %725 = vmatprep.subr.mxu0 0.0
        %726 = vmatpush1.msra.mxu0 %v713
        %727 = vmatprep.subr.mxu0 0.0
        %728 = vmatpush1.msra.mxu0 %v714
        %729 = vmatprep.subr.mxu0 0.0
        %730 = vmatpush1.msra.mxu0 %v715
        %731 = vmatprep.subr.mxu0 0.0
        %732 = vmatpush1.msra.mxu0 %v716
        %733 = vmatprep.subr.mxu0 0.0
        %734 = vmatpush1.msra.mxu0 0.0
        %735 = vmatprep.subr.mxu0 0.0
        %736 = vmatpush1.msra.mxu0 0.0
        %737 = vmatprep.subr.mxu0 0.0
        %738 = vmatpush1.msra.mxu0 0.0
        %739 = vmatprep.subr.mxu0 0.0
        %740 = vmatpush1.msra.mxu0 0.0
        %741 = vmatprep.subr.mxu0 0.0
        %742 = vmatpush1.msra.mxu0 0.0
        %743 = vmatprep.subr.mxu0 0.0
        %744 = vmatpush1.msra.mxu0 0.0
        %745 = vmatprep.subr.mxu0 0.0
        %746 = vmatpush1.msra.mxu0 0.0
        %747 = vmatprep.subr.mxu0 0.0
        %748 = vmatpush1.msra.mxu0 0.0
        %749 = vmatprep.subr.mxu0 0.0
        %750 = vmatpush1.msra.mxu0 0.0
        %751 = vmatprep.subr.mxu0 0.0
        %752 = vmatpush1.msra.mxu0 0.0
        %753 = vmatprep.subr.mxu0 0.0
        %754 = vmatpush1.msra.mxu0 0.0
        %755 = vmatprep.subr.mxu0 0.0
        %756 = vmatpush1.msra.mxu0 0.0
        %757 = vmatprep.subr.mxu0 0.0
        %758 = vmatpush1.msra.mxu0 0.0
        %759 = vmatprep.subr.mxu0 0.0
        %760 = vmatpush1.msra.mxu0 0.0
        %761 = vmatprep.subr.mxu0 0.0
        %762 = vmatpush1.msra.mxu0 0.0
        %763 = vmatprep.subr.mxu0 0.0
        %764 = vmatpush1.msra.mxu0 0.0
        %765 = vmatprep.subr.mxu0 0.0
        %766 = vmatpush1.msra.mxu0 0.0
        %767 = vmatprep.subr.mxu0 0.0
        %768 = vmatpush1.msra.mxu0 0.0
        %769 = vmatprep.subr.mxu0 0.0
        %770 = vmatpush1.msra.mxu0 0.0
        %771 = vmatprep.subr.mxu0 0.0
        %772 = vmatpush1.msra.mxu0 0.0
        %773 = vmatprep.subr.mxu0 0.0
        %774 = vmatpush1.msra.mxu0 0.0
        %775 = vmatprep.subr.mxu0 0.0
        %776 = vmatpush1.msra.mxu0 0.0
        %777 = vmatprep.subr.mxu0 0.0
        %778 = vmatpush1.msra.mxu0 0.0
        %779 = vmatprep.subr.mxu0 0.0
        %780 = vmatpush1.msra.mxu0 0.0
        %781 = vmatprep.mubr.f32.mxu0 0.0
        %782 = vmatmul.mubr.f32.gmra.mrb[0].mxu0 %v376
        %v783 = vpop.f32.mrb[0].mxu0
        %v784 = vadd.f32 0.0, %v783
        %v785 = vpop.f32.mrb[0].mxu0
        %786 = vmatprep.mubr.f32.mxu0 0.0
        %787 = vmatmul.mubr.f32.gmra.mrb[0].mxu0 %v379
        %v788 = vpop.f32.mrb[0].mxu0
        %v789 = vadd.f32 0.0, %v788
        %v790 = vpop.f32.mrb[0].mxu0
        %791 = vdwg.mxu0
        %s792 = scalar_lea.vmem %s1, 32
        %v793 = vld [vmem:[%s792] sm:$0xff]
        %v794 = vld [vmem:[%s792 + $0x8] sm:$0xff]
        %v796 = vsel %vm545, %v793, 0
        %v799 = vsel %vm545, %v794, 0
        %801 = vmatprep.subr.mxu0 0.0
        %802 = vmatpush1.msra.mxu0 %v784
        %803 = vmatprep.subr.mxu0 0.0
        %804 = vmatpush1.msra.mxu0 %v789
        %805 = vmatprep.subr.mxu0 0.0
        %806 = vmatpush1.msra.mxu0 0.0
        %807 = vmatprep.subr.mxu0 0.0
        %808 = vmatpush1.msra.mxu0 0.0
        %809 = vmatprep.subr.mxu0 0.0
        %810 = vmatpush1.msra.mxu0 0.0
        %811 = vmatprep.subr.mxu0 0.0
        %812 = vmatpush1.msra.mxu0 0.0
        %813 = vmatprep.subr.mxu0 0.0
        %814 = vmatpush1.msra.mxu0 0.0
        %815 = vmatprep.subr.mxu0 0.0
        %816 = vmatpush1.msra.mxu0 0.0
        %817 = vmatprep.subr.mxu0 0.0
        %818 = vmatpush1.msra.mxu0 0.0
        %819 = vmatprep.subr.mxu0 0.0
        %820 = vmatpush1.msra.mxu0 0.0
        %821 = vmatprep.subr.mxu0 0.0
        %822 = vmatpush1.msra.mxu0 0.0
        %823 = vmatprep.subr.mxu0 0.0
        %824 = vmatpush1.msra.mxu0 0.0
        %825 = vmatprep.subr.mxu0 0.0
        %826 = vmatpush1.msra.mxu0 0.0
        %827 = vmatprep.subr.mxu0 0.0
        %828 = vmatpush1.msra.mxu0 0.0
        %829 = vmatprep.subr.mxu0 0.0
        %830 = vmatpush1.msra.mxu0 0.0
        %831 = vmatprep.subr.mxu0 0.0
        %832 = vmatpush1.msra.mxu0 0.0
        %833 = vmatprep.subr.mxu0 0.0
        %834 = vmatpush1.msra.mxu0 0.0
        %835 = vmatprep.subr.mxu0 0.0
        %836 = vmatpush1.msra.mxu0 0.0
        %837 = vmatprep.subr.mxu0 0.0
        %838 = vmatpush1.msra.mxu0 0.0
        %839 = vmatprep.subr.mxu0 0.0
        %840 = vmatpush1.msra.mxu0 0.0
        %841 = vmatprep.subr.mxu0 0.0
        %842 = vmatpush1.msra.mxu0 0.0
        %843 = vmatprep.subr.mxu0 0.0
        %844 = vmatpush1.msra.mxu0 0.0
        %845 = vmatprep.subr.mxu0 0.0
        %846 = vmatpush1.msra.mxu0 0.0
        %847 = vmatprep.subr.mxu0 0.0
        %848 = vmatpush1.msra.mxu0 0.0
        %849 = vmatprep.subr.mxu0 0.0
        %850 = vmatpush1.msra.mxu0 0.0
        %851 = vmatprep.subr.mxu0 0.0
        %852 = vmatpush1.msra.mxu0 0.0
        %853 = vmatprep.subr.mxu0 0.0
        %854 = vmatpush1.msra.mxu0 0.0
        %855 = vmatprep.subr.mxu0 0.0
        %856 = vmatpush1.msra.mxu0 0.0
        %857 = vmatprep.subr.mxu0 0.0
        %858 = vmatpush1.msra.mxu0 0.0
        %859 = vmatprep.subr.mxu0 0.0
        %860 = vmatpush1.msra.mxu0 0.0
        %861 = vmatprep.subr.mxu0 0.0
        %862 = vmatpush1.msra.mxu0 0.0
        %863 = vmatprep.subr.mxu0 0.0
        %864 = vmatpush1.msra.mxu0 0.0
        %865 = vmatprep.mubr.f32.mxu0 0.0
        %866 = vmatmul.mubr.f32.gmra.mrb[0].mxu0 %v796
        %v867 = vpop.f32.mrb[0].mxu0
        %v868 = vadd.f32 0.0, %v867
        %v869 = vpop.f32.mrb[0].mxu0
        %870 = vmatprep.mubr.f32.mxu0 0.0
        %871 = vmatmul.mubr.f32.gmra.mrb[0].mxu0 %v799
        %v872 = vpop.f32.mrb[0].mxu0
        %v873 = vadd.f32 0.0, %v872
        %v874 = vpop.f32.mrb[0].mxu0
        %875 = vdwg.mxu0
        %v876 = vadd.f32 %v700, %v868
        %v877 = vadd.f32 %v705, %v873
        %v879 = vlaneseq
        %v880 = vshrl.u32 %v879, 7
        %v881 = vsub.s32 0, %v880
        %v882 = vrot.slane %v365, %v881
        %v884 = vadd.f32 %v876, %v882
        %v885 = vadd.f32 %v877, %v882
        %v886 = vmax.f32 %v884, 0.0
        %v887 = vmax.f32 %v885, 0.0
        %s888 = scalar_lea.vmem %s4, 1
        %v889 = vld [vmem:[%s888] sm:$0x1]
        %s890 = scalar_lea.vmem [#allocation2], 192
        %v891 = vld [vmem:[%s890] sm:$0xff]
        %v892 = vld [vmem:[%s890 + $0x8] sm:$0xff]
        %v893 = vld [vmem:[%s890 + $0x10] sm:$0xff]
        %v894 = vld [vmem:[%s890 + $0x18] sm:$0xff]
        %v895 = vld [vmem:[%s890 + $0x20] sm:$0xff]
        %v896 = vld [vmem:[%s890 + $0x28] sm:$0xff]
        %v897 = vld [vmem:[%s890 + $0x30] sm:$0xff]
        %v898 = vld [vmem:[%s890 + $0x38] sm:$0xff]
        %v900 = vsel %vm374, %v886, 0
        %v903 = vsel %vm374, %v887, 0
        %905 = vmatprep.subr.mxu0 0.0
        %906 = vmatpush1.msra.mxu0 %v891
        %907 = vmatprep.subr.mxu0 0.0
        %908 = vmatpush1.msra.mxu0 %v892
        %909 = vmatprep.subr.mxu0 0.0
        %910 = vmatpush1.msra.mxu0 %v893
        %911 = vmatprep.subr.mxu0 0.0
        %912 = vmatpush1.msra.mxu0 %v894
        %913 = vmatprep.subr.mxu0 0.0
        %914 = vmatpush1.msra.mxu0 %v895
        %915 = vmatprep.subr.mxu0 0.0
        %916 = vmatpush1.msra.mxu0 %v896
        %917 = vmatprep.subr.mxu0 0.0
        %918 = vmatpush1.msra.mxu0 %v897
        %919 = vmatprep.subr.mxu0 0.0
        %920 = vmatpush1.msra.mxu0 %v898
        %921 = vmatprep.subr.mxu0 0.0
        %922 = vmatpush1.msra.mxu0 0.0
        %923 = vmatprep.subr.mxu0 0.0
        %924 = vmatpush1.msra.mxu0 0.0
        %925 = vmatprep.subr.mxu0 0.0
        %926 = vmatpush1.msra.mxu0 0.0
        %927 = vmatprep.subr.mxu0 0.0
        %928 = vmatpush1.msra.mxu0 0.0
        %929 = vmatprep.subr.mxu0 0.0
        %930 = vmatpush1.msra.mxu0 0.0
        %931 = vmatprep.subr.mxu0 0.0
        %932 = vmatpush1.msra.mxu0 0.0
        %933 = vmatprep.subr.mxu0 0.0
        %934 = vmatpush1.msra.mxu0 0.0
        %935 = vmatprep.subr.mxu0 0.0
        %936 = vmatpush1.msra.mxu0 0.0
        %937 = vmatprep.subr.mxu0 0.0
        %938 = vmatpush1.msra.mxu0 0.0
        %939 = vmatprep.subr.mxu0 0.0
        %940 = vmatpush1.msra.mxu0 0.0
        %941 = vmatprep.subr.mxu0 0.0
        %942 = vmatpush1.msra.mxu0 0.0
        %943 = vmatprep.subr.mxu0 0.0
        %944 = vmatpush1.msra.mxu0 0.0
        %945 = vmatprep.subr.mxu0 0.0
        %946 = vmatpush1.msra.mxu0 0.0
        %947 = vmatprep.subr.mxu0 0.0
        %948 = vmatpush1.msra.mxu0 0.0
        %949 = vmatprep.subr.mxu0 0.0
        %950 = vmatpush1.msra.mxu0 0.0
        %951 = vmatprep.subr.mxu0 0.0
        %952 = vmatpush1.msra.mxu0 0.0
        %953 = vmatprep.subr.mxu0 0.0
        %954 = vmatpush1.msra.mxu0 0.0
        %955 = vmatprep.subr.mxu0 0.0
        %956 = vmatpush1.msra.mxu0 0.0
        %957 = vmatprep.subr.mxu0 0.0
        %958 = vmatpush1.msra.mxu0 0.0
        %959 = vmatprep.subr.mxu0 0.0
        %960 = vmatpush1.msra.mxu0 0.0
        %961 = vmatprep.subr.mxu0 0.0
        %962 = vmatpush1.msra.mxu0 0.0
        %963 = vmatprep.subr.mxu0 0.0
        %964 = vmatpush1.msra.mxu0 0.0
        %965 = vmatprep.subr.mxu0 0.0
        %966 = vmatpush1.msra.mxu0 0.0
        %967 = vmatprep.subr.mxu0 0.0
        %968 = vmatpush1.msra.mxu0 0.0
        %969 = vmatprep.mubr.f32.mxu0 0.0
        %970 = vmatmul.mubr.f32.gmra.mrb[0].mxu0 %v900
        %v971 = vpop.f32.mrb[0].mxu0
        %v972 = vadd.f32 0.0, %v971
        %v973 = vpop.f32.mrb[0].mxu0
        %974 = vmatprep.mubr.f32.mxu0 0.0
        %975 = vmatmul.mubr.f32.gmra.mrb[0].mxu0 %v903
        %v976 = vpop.f32.mrb[0].mxu0
        %v977 = vadd.f32 0.0, %v976
        %v978 = vpop.f32.mrb[0].mxu0
        %979 = vdwg.mxu0
        %s980 = scalar_lea.vmem [#allocation2], 256
        %v981 = vld [vmem:[%s980] sm:$0xff]
        %v982 = vld [vmem:[%s980 + $0x8] sm:$0xff]
        %v983 = vld [vmem:[%s980 + $0x10] sm:$0xff]
        %v984 = vld [vmem:[%s980 + $0x18] sm:$0xff]
        %v985 = vld [vmem:[%s980 + $0x20] sm:$0xff]
        %v986 = vld [vmem:[%s980 + $0x28] sm:$0xff]
        %v987 = vld [vmem:[%s980 + $0x30] sm:$0xff]
        %v988 = vld [vmem:[%s980 + $0x38] sm:$0xff]
        %989 = vmatprep.subr.mxu0 0.0
        %990 = vmatpush1.msra.mxu0 %v981
        %991 = vmatprep.subr.mxu0 0.0
        %992 = vmatpush1.msra.mxu0 %v982
        %993 = vmatprep.subr.mxu0 0.0
        %994 = vmatpush1.msra.mxu0 %v983
        %995 = vmatprep.subr.mxu0 0.0
        %996 = vmatpush1.msra.mxu0 %v984
        %997 = vmatprep.subr.mxu0 0.0
        %998 = vmatpush1.msra.mxu0 %v985
        %999 = vmatprep.subr.mxu0 0.0
        %1000 = vmatpush1.msra.mxu0 %v986
        %1001 = vmatprep.subr.mxu0 0.0
        %1002 = vmatpush1.msra.mxu0 %v987
        %1003 = vmatprep.subr.mxu0 0.0
        %1004 = vmatpush1.msra.mxu0 %v988
        %1005 = vmatprep.subr.mxu0 0.0
        %1006 = vmatpush1.msra.mxu0 0.0
        %1007 = vmatprep.subr.mxu0 0.0
        %1008 = vmatpush1.msra.mxu0 0.0
        %1009 = vmatprep.subr.mxu0 0.0
        %1010 = vmatpush1.msra.mxu0 0.0
        %1011 = vmatprep.subr.mxu0 0.0
        %1012 = vmatpush1.msra.mxu0 0.0
        %1013 = vmatprep.subr.mxu0 0.0
        %1014 = vmatpush1.msra.mxu0 0.0
        %1015 = vmatprep.subr.mxu0 0.0
        %1016 = vmatpush1.msra.mxu0 0.0
        %1017 = vmatprep.subr.mxu0 0.0
        %1018 = vmatpush1.msra.mxu0 0.0
        %1019 = vmatprep.subr.mxu0 0.0
        %1020 = vmatpush1.msra.mxu0 0.0
        %1021 = vmatprep.subr.mxu0 0.0
        %1022 = vmatpush1.msra.mxu0 0.0
        %1023 = vmatprep.subr.mxu0 0.0
        %1024 = vmatpush1.msra.mxu0 0.0
        %1025 = vmatprep.subr.mxu0 0.0
        %1026 = vmatpush1.msra.mxu0 0.0
        %1027 = vmatprep.subr.mxu0 0.0
        %1028 = vmatpush1.msra.mxu0 0.0
        %1029 = vmatprep.subr.mxu0 0.0
        %1030 = vmatpush1.msra.mxu0 0.0
        %1031 = vmatprep.subr.mxu0 0.0
        %1032 = vmatpush1.msra.mxu0 0.0
        %1033 = vmatprep.subr.mxu0 0.0
        %1034 = vmatpush1.msra.mxu0 0.0
        %1035 = vmatprep.subr.mxu0 0.0
        %1036 = vmatpush1.msra.mxu0 0.0
        %1037 = vmatprep.subr.mxu0 0.0
        %1038 = vmatpush1.msra.mxu0 0.0
        %1039 = vmatprep.subr.mxu0 0.0
        %1040 = vmatpush1.msra.mxu0 0.0
        %1041 = vmatprep.subr.mxu0 0.0
        %1042 = vmatpush1.msra.mxu0 0.0
        %1043 = vmatprep.subr.mxu0 0.0
        %1044 = vmatpush1.msra.mxu0 0.0
        %1045 = vmatprep.subr.mxu0 0.0
        %1046 = vmatpush1.msra.mxu0 0.0
        %1047 = vmatprep.subr.mxu0 0.0
        %1048 = vmatpush1.msra.mxu0 0.0
        %1049 = vmatprep.subr.mxu0 0.0
        %1050 = vmatpush1.msra.mxu0 0.0
        %1051 = vmatprep.subr.mxu0 0.0
        %1052 = vmatpush1.msra.mxu0 0.0
        %1053 = vmatprep.mubr.f32.mxu0 0.0
        %1054 = vmatmul.mubr.f32.gmra.mrb[0].mxu0 %v900
        %v1055 = vpop.f32.mrb[0].mxu0
        %v1056 = vadd.f32 0.0, %v1055
        %v1057 = vpop.f32.mrb[0].mxu0
        %1058 = vmatprep.mubr.f32.mxu0 0.0
        %1059 = vmatmul.mubr.f32.gmra.mrb[0].mxu0 %v903
        %v1060 = vpop.f32.mrb[0].mxu0
        %v1061 = vadd.f32 0.0, %v1060
        %v1062 = vpop.f32.mrb[0].mxu0
        %1063 = vdwg.mxu0
        %1064 = vmatprep.subr.mxu0 0.0
        %1065 = vmatpush1.msra.mxu0 %v1056
        %1066 = vmatprep.subr.mxu0 0.0
        %1067 = vmatpush1.msra.mxu0 %v1061
        %1068 = vmatprep.subr.mxu0 0.0
        %1069 = vmatpush1.msra.mxu0 0.0
        %1070 = vmatprep.subr.mxu0 0.0
        %1071 = vmatpush1.msra.mxu0 0.0
        %1072 = vmatprep.subr.mxu0 0.0
        %1073 = vmatpush1.msra.mxu0 0.0
        %1074 = vmatprep.subr.mxu0 0.0
        %1075 = vmatpush1.msra.mxu0 0.0
        %1076 = vmatprep.subr.mxu0 0.0
        %1077 = vmatpush1.msra.mxu0 0.0
        %1078 = vmatprep.subr.mxu0 0.0
        %1079 = vmatpush1.msra.mxu0 0.0
        %1080 = vmatprep.subr.mxu0 0.0
        %1081 = vmatpush1.msra.mxu0 0.0
        %1082 = vmatprep.subr.mxu0 0.0
        %1083 = vmatpush1.msra.mxu0 0.0
        %1084 = vmatprep.subr.mxu0 0.0
        %1085 = vmatpush1.msra.mxu0 0.0
        %1086 = vmatprep.subr.mxu0 0.0
        %1087 = vmatpush1.msra.mxu0 0.0
        %1088 = vmatprep.subr.mxu0 0.0
        %1089 = vmatpush1.msra.mxu0 0.0
        %1090 = vmatprep.subr.mxu0 0.0
        %1091 = vmatpush1.msra.mxu0 0.0
        %1092 = vmatprep.subr.mxu0 0.0
        %1093 = vmatpush1.msra.mxu0 0.0
        %1094 = vmatprep.subr.mxu0 0.0
        %1095 = vmatpush1.msra.mxu0 0.0
        %1096 = vmatprep.subr.mxu0 0.0
        %1097 = vmatpush1.msra.mxu0 0.0
        %1098 = vmatprep.subr.mxu0 0.0
        %1099 = vmatpush1.msra.mxu0 0.0
        %1100 = vmatprep.subr.mxu0 0.0
        %1101 = vmatpush1.msra.mxu0 0.0
        %1102 = vmatprep.subr.mxu0 0.0
        %1103 = vmatpush1.msra.mxu0 0.0
        %1104 = vmatprep.subr.mxu0 0.0
        %1105 = vmatpush1.msra.mxu0 0.0
        %1106 = vmatprep.subr.mxu0 0.0
        %1107 = vmatpush1.msra.mxu0 0.0
        %1108 = vmatprep.subr.mxu0 0.0
        %1109 = vmatpush1.msra.mxu0 0.0
        %1110 = vmatprep.subr.mxu0 0.0
        %1111 = vmatpush1.msra.mxu0 0.0
        %1112 = vmatprep.subr.mxu0 0.0
        %1113 = vmatpush1.msra.mxu0 0.0
        %1114 = vmatprep.subr.mxu0 0.0
        %1115 = vmatpush1.msra.mxu0 0.0
        %1116 = vmatprep.subr.mxu0 0.0
        %1117 = vmatpush1.msra.mxu0 0.0
        %1118 = vmatprep.subr.mxu0 0.0
        %1119 = vmatpush1.msra.mxu0 0.0
        %1120 = vmatprep.subr.mxu0 0.0
        %1121 = vmatpush1.msra.mxu0 0.0
        %1122 = vmatprep.subr.mxu0 0.0
        %1123 = vmatpush1.msra.mxu0 0.0
        %1124 = vmatprep.subr.mxu0 0.0
        %1125 = vmatpush1.msra.mxu0 0.0
        %1126 = vmatprep.subr.mxu0 0.0
        %1127 = vmatpush1.msra.mxu0 0.0
        %1128 = vmatprep.mubr.f32.mxu0 0.0
        %1129 = vmatmul.mubr.f32.gmra.mrb[0].mxu0 %v547
        %v1130 = vpop.f32.mrb[0].mxu0
        %v1131 = vadd.f32 0.0, %v1130
        %v1132 = vpop.f32.mrb[0].mxu0
        %1133 = vmatprep.mubr.f32.mxu0 0.0
        %1134 = vmatmul.mubr.f32.gmra.mrb[0].mxu0 %v550
        %v1135 = vpop.f32.mrb[0].mxu0
        %v1136 = vadd.f32 0.0, %v1135
        %v1137 = vpop.f32.mrb[0].mxu0
        %1138 = vdwg.mxu0
        %1139 = vmatprep.subr.mxu0 0.0
        %1140 = vmatpush1.msra.mxu0 %v972
        %1141 = vmatprep.subr.mxu0 0.0
        %1142 = vmatpush1.msra.mxu0 %v977
        %1143 = vmatprep.subr.mxu0 0.0
        %1144 = vmatpush1.msra.mxu0 0.0
        %1145 = vmatprep.subr.mxu0 0.0
        %1146 = vmatpush1.msra.mxu0 0.0
        %1147 = vmatprep.subr.mxu0 0.0
        %1148 = vmatpush1.msra.mxu0 0.0
        %1149 = vmatprep.subr.mxu0 0.0
        %1150 = vmatpush1.msra.mxu0 0.0
        %1151 = vmatprep.subr.mxu0 0.0
        %1152 = vmatpush1.msra.mxu0 0.0
        %1153 = vmatprep.subr.mxu0 0.0
        %1154 = vmatpush1.msra.mxu0 0.0
        %1155 = vmatprep.subr.mxu0 0.0
        %1156 = vmatpush1.msra.mxu0 0.0
        %1157 = vmatprep.subr.mxu0 0.0
        %1158 = vmatpush1.msra.mxu0 0.0
        %1159 = vmatprep.subr.mxu0 0.0
        %1160 = vmatpush1.msra.mxu0 0.0
        %1161 = vmatprep.subr.mxu0 0.0
        %1162 = vmatpush1.msra.mxu0 0.0
        %1163 = vmatprep.subr.mxu0 0.0
        %1164 = vmatpush1.msra.mxu0 0.0
        %1165 = vmatprep.subr.mxu0 0.0
        %1166 = vmatpush1.msra.mxu0 0.0
        %1167 = vmatprep.subr.mxu0 0.0
        %1168 = vmatpush1.msra.mxu0 0.0
        %1169 = vmatprep.subr.mxu0 0.0
        %1170 = vmatpush1.msra.mxu0 0.0
        %1171 = vmatprep.subr.mxu0 0.0
        %1172 = vmatpush1.msra.mxu0 0.0
        %1173 = vmatprep.subr.mxu0 0.0
        %1174 = vmatpush1.msra.mxu0 0.0
        %1175 = vmatprep.subr.mxu0 0.0
        %1176 = vmatpush1.msra.mxu0 0.0
        %1177 = vmatprep.subr.mxu0 0.0
        %1178 = vmatpush1.msra.mxu0 0.0
        %1179 = vmatprep.subr.mxu0 0.0
        %1180 = vmatpush1.msra.mxu0 0.0
        %1181 = vmatprep.subr.mxu0 0.0
        %1182 = vmatpush1.msra.mxu0 0.0
        %1183 = vmatprep.subr.mxu0 0.0
        %1184 = vmatpush1.msra.mxu0 0.0
        %1185 = vmatprep.subr.mxu0 0.0
        %1186 = vmatpush1.msra.mxu0 0.0
        %1187 = vmatprep.subr.mxu0 0.0
        %1188 = vmatpush1.msra.mxu0 0.0
        %1189 = vmatprep.subr.mxu0 0.0
        %1190 = vmatpush1.msra.mxu0 0.0
        %1191 = vmatprep.subr.mxu0 0.0
        %1192 = vmatpush1.msra.mxu0 0.0
        %1193 = vmatprep.subr.mxu0 0.0
        %1194 = vmatpush1.msra.mxu0 0.0
        %1195 = vmatprep.subr.mxu0 0.0
        %1196 = vmatpush1.msra.mxu0 0.0
        %1197 = vmatprep.subr.mxu0 0.0
        %1198 = vmatpush1.msra.mxu0 0.0
        %1199 = vmatprep.subr.mxu0 0.0
        %1200 = vmatpush1.msra.mxu0 0.0
        %1201 = vmatprep.subr.mxu0 0.0
        %1202 = vmatpush1.msra.mxu0 0.0
        %1203 = vmatprep.mubr.f32.mxu0 0.0
        %1204 = vmatmul.mubr.f32.gmra.mrb[0].mxu0 %v628
        %v1205 = vpop.f32.mrb[0].mxu0
        %v1206 = vadd.f32 %v1131, %v1205
        %v1207 = vpop.f32.mrb[0].mxu0
        %1208 = vmatprep.mubr.f32.mxu0 0.0
        %1209 = vmatmul.mubr.f32.gmra.mrb[0].mxu0 %v631
        %v1210 = vpop.f32.mrb[0].mxu0
        %v1211 = vadd.f32 %v1136, %v1210
        %v1212 = vpop.f32.mrb[0].mxu0
        %1213 = vdwg.mxu0
        %s1214 = scalar_lea.vmem [#allocation2], 320
        %v1215 = vld [vmem:[%s1214] sm:$0xff]
        %v1216 = vld [vmem:[%s1214 + $0x8] sm:$0xff]
        %v1217 = vld [vmem:[%s1214 + $0x10] sm:$0xff]
        %v1218 = vld [vmem:[%s1214 + $0x18] sm:$0xff]
        %v1219 = vld [vmem:[%s1214 + $0x20] sm:$0xff]
        %v1220 = vld [vmem:[%s1214 + $0x28] sm:$0xff]
        %v1221 = vld [vmem:[%s1214 + $0x30] sm:$0xff]
        %v1222 = vld [vmem:[%s1214 + $0x38] sm:$0xff]
        %1223 = vmatprep.subr.mxu0 0.0
        %1224 = vmatpush1.msra.mxu0 %v1215
        %1225 = vmatprep.subr.mxu0 0.0
        %1226 = vmatpush1.msra.mxu0 %v1216
        %1227 = vmatprep.subr.mxu0 0.0
        %1228 = vmatpush1.msra.mxu0 %v1217
        %1229 = vmatprep.subr.mxu0 0.0
        %1230 = vmatpush1.msra.mxu0 %v1218
        %1231 = vmatprep.subr.mxu0 0.0
        %1232 = vmatpush1.msra.mxu0 %v1219
        %1233 = vmatprep.subr.mxu0 0.0
        %1234 = vmatpush1.msra.mxu0 %v1220
        %1235 = vmatprep.subr.mxu0 0.0
        %1236 = vmatpush1.msra.mxu0 %v1221
        %1237 = vmatprep.subr.mxu0 0.0
        %1238 = vmatpush1.msra.mxu0 %v1222
        %1239 = vmatprep.subr.mxu0 0.0
        %1240 = vmatpush1.msra.mxu0 0.0
        %1241 = vmatprep.subr.mxu0 0.0
        %1242 = vmatpush1.msra.mxu0 0.0
        %1243 = vmatprep.subr.mxu0 0.0
        %1244 = vmatpush1.msra.mxu0 0.0
        %1245 = vmatprep.subr.mxu0 0.0
        %1246 = vmatpush1.msra.mxu0 0.0
        %1247 = vmatprep.subr.mxu0 0.0
        %1248 = vmatpush1.msra.mxu0 0.0
        %1249 = vmatprep.subr.mxu0 0.0
        %1250 = vmatpush1.msra.mxu0 0.0
        %1251 = vmatprep.subr.mxu0 0.0
        %1252 = vmatpush1.msra.mxu0 0.0
        %1253 = vmatprep.subr.mxu0 0.0
        %1254 = vmatpush1.msra.mxu0 0.0
        %1255 = vmatprep.subr.mxu0 0.0
        %1256 = vmatpush1.msra.mxu0 0.0
        %1257 = vmatprep.subr.mxu0 0.0
        %1258 = vmatpush1.msra.mxu0 0.0
        %1259 = vmatprep.subr.mxu0 0.0
        %1260 = vmatpush1.msra.mxu0 0.0
        %1261 = vmatprep.subr.mxu0 0.0
        %1262 = vmatpush1.msra.mxu0 0.0
        %1263 = vmatprep.subr.mxu0 0.0
        %1264 = vmatpush1.msra.mxu0 0.0
        %1265 = vmatprep.subr.mxu0 0.0
        %1266 = vmatpush1.msra.mxu0 0.0
        %1267 = vmatprep.subr.mxu0 0.0
        %1268 = vmatpush1.msra.mxu0 0.0
        %1269 = vmatprep.subr.mxu0 0.0
        %1270 = vmatpush1.msra.mxu0 0.0
        %1271 = vmatprep.subr.mxu0 0.0
        %1272 = vmatpush1.msra.mxu0 0.0
        %1273 = vmatprep.subr.mxu0 0.0
        %1274 = vmatpush1.msra.mxu0 0.0
        %1275 = vmatprep.subr.mxu0 0.0
        %1276 = vmatpush1.msra.mxu0 0.0
        %1277 = vmatprep.subr.mxu0 0.0
        %1278 = vmatpush1.msra.mxu0 0.0
        %1279 = vmatprep.subr.mxu0 0.0
        %1280 = vmatpush1.msra.mxu0 0.0
        %1281 = vmatprep.subr.mxu0 0.0
        %1282 = vmatpush1.msra.mxu0 0.0
        %1283 = vmatprep.subr.mxu0 0.0
        %1284 = vmatpush1.msra.mxu0 0.0
        %1285 = vmatprep.subr.mxu0 0.0
        %1286 = vmatpush1.msra.mxu0 0.0
        %1287 = vmatprep.mubr.f32.mxu0 0.0
        %1288 = vmatmul.mubr.f32.gmra.mrb[0].mxu0 %v900
        %v1289 = vpop.f32.mrb[0].mxu0
        %v1290 = vadd.f32 0.0, %v1289
        %v1291 = vpop.f32.mrb[0].mxu0
        %1292 = vmatprep.mubr.f32.mxu0 0.0
        %1293 = vmatmul.mubr.f32.gmra.mrb[0].mxu0 %v903
        %v1294 = vpop.f32.mrb[0].mxu0
        %v1295 = vadd.f32 0.0, %v1294
        %v1296 = vpop.f32.mrb[0].mxu0
        %1297 = vdwg.mxu0
        %1298 = vmatprep.subr.mxu0 0.0
        %1299 = vmatpush1.msra.mxu0 %v1290
        %1300 = vmatprep.subr.mxu0 0.0
        %1301 = vmatpush1.msra.mxu0 %v1295
        %1302 = vmatprep.subr.mxu0 0.0
        %1303 = vmatpush1.msra.mxu0 0.0
        %1304 = vmatprep.subr.mxu0 0.0
        %1305 = vmatpush1.msra.mxu0 0.0
        %1306 = vmatprep.subr.mxu0 0.0
        %1307 = vmatpush1.msra.mxu0 0.0
        %1308 = vmatprep.subr.mxu0 0.0
        %1309 = vmatpush1.msra.mxu0 0.0
        %1310 = vmatprep.subr.mxu0 0.0
        %1311 = vmatpush1.msra.mxu0 0.0
        %1312 = vmatprep.subr.mxu0 0.0
        %1313 = vmatpush1.msra.mxu0 0.0
        %1314 = vmatprep.subr.mxu0 0.0
        %1315 = vmatpush1.msra.mxu0 0.0
        %1316 = vmatprep.subr.mxu0 0.0
        %1317 = vmatpush1.msra.mxu0 0.0
        %1318 = vmatprep.subr.mxu0 0.0
        %1319 = vmatpush1.msra.mxu0 0.0
        %1320 = vmatprep.subr.mxu0 0.0
        %1321 = vmatpush1.msra.mxu0 0.0
        %1322 = vmatprep.subr.mxu0 0.0
        %1323 = vmatpush1.msra.mxu0 0.0
        %1324 = vmatprep.subr.mxu0 0.0
        %1325 = vmatpush1.msra.mxu0 0.0
        %1326 = vmatprep.subr.mxu0 0.0
        %1327 = vmatpush1.msra.mxu0 0.0
        %1328 = vmatprep.subr.mxu0 0.0
        %1329 = vmatpush1.msra.mxu0 0.0
        %1330 = vmatprep.subr.mxu0 0.0
        %1331 = vmatpush1.msra.mxu0 0.0
        %1332 = vmatprep.subr.mxu0 0.0
        %1333 = vmatpush1.msra.mxu0 0.0
        %1334 = vmatprep.subr.mxu0 0.0
        %1335 = vmatpush1.msra.mxu0 0.0
        %1336 = vmatprep.subr.mxu0 0.0
        %1337 = vmatpush1.msra.mxu0 0.0
        %1338 = vmatprep.subr.mxu0 0.0
        %1339 = vmatpush1.msra.mxu0 0.0
        %1340 = vmatprep.subr.mxu0 0.0
        %1341 = vmatpush1.msra.mxu0 0.0
        %1342 = vmatprep.subr.mxu0 0.0
        %1343 = vmatpush1.msra.mxu0 0.0
        %1344 = vmatprep.subr.mxu0 0.0
        %1345 = vmatpush1.msra.mxu0 0.0
        %1346 = vmatprep.subr.mxu0 0.0
        %1347 = vmatpush1.msra.mxu0 0.0
        %1348 = vmatprep.subr.mxu0 0.0
        %1349 = vmatpush1.msra.mxu0 0.0
        %1350 = vmatprep.subr.mxu0 0.0
        %1351 = vmatpush1.msra.mxu0 0.0
        %1352 = vmatprep.subr.mxu0 0.0
        %1353 = vmatpush1.msra.mxu0 0.0
        %1354 = vmatprep.subr.mxu0 0.0
        %1355 = vmatpush1.msra.mxu0 0.0
        %1356 = vmatprep.subr.mxu0 0.0
        %1357 = vmatpush1.msra.mxu0 0.0
        %1358 = vmatprep.subr.mxu0 0.0
        %1359 = vmatpush1.msra.mxu0 0.0
        %1360 = vmatprep.subr.mxu0 0.0
        %1361 = vmatpush1.msra.mxu0 0.0
        %1362 = vmatprep.mubr.f32.mxu0 0.0
        %1363 = vmatmul.mubr.f32.gmra.mrb[0].mxu0 %v796
        %v1364 = vpop.f32.mrb[0].mxu0
        %v1365 = vadd.f32 0.0, %v1364
        %v1366 = vpop.f32.mrb[0].mxu0
        %1367 = vmatprep.mubr.f32.mxu0 0.0
        %1368 = vmatmul.mubr.f32.gmra.mrb[0].mxu0 %v799
        %v1369 = vpop.f32.mrb[0].mxu0
        %v1370 = vadd.f32 0.0, %v1369
        %v1371 = vpop.f32.mrb[0].mxu0
        %1372 = vdwg.mxu0
        %v1373 = vadd.f32 %v1206, %v1365
        %v1374 = vadd.f32 %v1211, %v1370
        %v1376 = vlaneseq
        %v1377 = vshrl.u32 %v1376, 7
        %v1378 = vsub.s32 0, %v1377
        %v1379 = vrot.slane %v889, %v1378
        %v1381 = vadd.f32 %v1373, %v1379
        %v1382 = vadd.f32 %v1374, %v1379
        %v1383 = vadd.f32 %v1381, %v363
        %v1384 = vadd.f32 %v1382, %v364
        %v1385 = vmax.f32 %v1383, 0.0
        %v1386 = vmax.f32 %v1384, 0.0
        %s1387 = scalar_lea.vmem %s4, 2
        %v1388 = vld [vmem:[%s1387] sm:$0x1]
        %s1389 = scalar_lea.vmem [#allocation2], 384
        %v1390 = vld [vmem:[%s1389] sm:$0xff]
        %v1391 = vld [vmem:[%s1389 + $0x8] sm:$0xff]
        %v1392 = vld [vmem:[%s1389 + $0x10] sm:$0xff]
        %v1393 = vld [vmem:[%s1389 + $0x18] sm:$0xff]
        %v1394 = vld [vmem:[%s1389 + $0x20] sm:$0xff]
        %v1395 = vld [vmem:[%s1389 + $0x28] sm:$0xff]
        %v1396 = vld [vmem:[%s1389 + $0x30] sm:$0xff]
        %v1397 = vld [vmem:[%s1389 + $0x38] sm:$0xff]
        %v1399 = vsel %vm374, %v1385, 0
        %v1402 = vsel %vm374, %v1386, 0
        %1404 = vmatprep.subr.mxu0 0.0
        %1405 = vmatpush1.msra.mxu0 %v1390
        %1406 = vmatprep.subr.mxu0 0.0
        %1407 = vmatpush1.msra.mxu0 %v1391
        %1408 = vmatprep.subr.mxu0 0.0
        %1409 = vmatpush1.msra.mxu0 %v1392
        %1410 = vmatprep.subr.mxu0 0.0
        %1411 = vmatpush1.msra.mxu0 %v1393
        %1412 = vmatprep.subr.mxu0 0.0
        %1413 = vmatpush1.msra.mxu0 %v1394
        %1414 = vmatprep.subr.mxu0 0.0
        %1415 = vmatpush1.msra.mxu0 %v1395
        %1416 = vmatprep.subr.mxu0 0.0
        %1417 = vmatpush1.msra.mxu0 %v1396
        %1418 = vmatprep.subr.mxu0 0.0
        %1419 = vmatpush1.msra.mxu0 %v1397
        %1420 = vmatprep.subr.mxu0 0.0
        %1421 = vmatpush1.msra.mxu0 0.0
        %1422 = vmatprep.subr.mxu0 0.0
        %1423 = vmatpush1.msra.mxu0 0.0
        %1424 = vmatprep.subr.mxu0 0.0
        %1425 = vmatpush1.msra.mxu0 0.0
        %1426 = vmatprep.subr.mxu0 0.0
        %1427 = vmatpush1.msra.mxu0 0.0
        %1428 = vmatprep.subr.mxu0 0.0
        %1429 = vmatpush1.msra.mxu0 0.0
        %1430 = vmatprep.subr.mxu0 0.0
        %1431 = vmatpush1.msra.mxu0 0.0
        %1432 = vmatprep.subr.mxu0 0.0
        %1433 = vmatpush1.msra.mxu0 0.0
        %1434 = vmatprep.subr.mxu0 0.0
        %1435 = vmatpush1.msra.mxu0 0.0
        %1436 = vmatprep.subr.mxu0 0.0
        %1437 = vmatpush1.msra.mxu0 0.0
        %1438 = vmatprep.subr.mxu0 0.0
        %1439 = vmatpush1.msra.mxu0 0.0
        %1440 = vmatprep.subr.mxu0 0.0
        %1441 = vmatpush1.msra.mxu0 0.0
        %1442 = vmatprep.subr.mxu0 0.0
        %1443 = vmatpush1.msra.mxu0 0.0
        %1444 = vmatprep.subr.mxu0 0.0
        %1445 = vmatpush1.msra.mxu0 0.0
        %1446 = vmatprep.subr.mxu0 0.0
        %1447 = vmatpush1.msra.mxu0 0.0
        %1448 = vmatprep.subr.mxu0 0.0
        %1449 = vmatpush1.msra.mxu0 0.0
        %1450 = vmatprep.subr.mxu0 0.0
        %1451 = vmatpush1.msra.mxu0 0.0
        %1452 = vmatprep.subr.mxu0 0.0
        %1453 = vmatpush1.msra.mxu0 0.0
        %1454 = vmatprep.subr.mxu0 0.0
        %1455 = vmatpush1.msra.mxu0 0.0
        %1456 = vmatprep.subr.mxu0 0.0
        %1457 = vmatpush1.msra.mxu0 0.0
        %1458 = vmatprep.subr.mxu0 0.0
        %1459 = vmatpush1.msra.mxu0 0.0
        %1460 = vmatprep.subr.mxu0 0.0
        %1461 = vmatpush1.msra.mxu0 0.0
        %1462 = vmatprep.subr.mxu0 0.0
        %1463 = vmatpush1.msra.mxu0 0.0
        %1464 = vmatprep.subr.mxu0 0.0
        %1465 = vmatpush1.msra.mxu0 0.0
        %1466 = vmatprep.subr.mxu0 0.0
        %1467 = vmatpush1.msra.mxu0 0.0
        %1468 = vmatprep.mubr.f32.mxu0 0.0
        %1469 = vmatmul.mubr.f32.gmra.mrb[0].mxu0 %v1399
        %v1470 = vpop.f32.mrb[0].mxu0
        %v1471 = vadd.f32 0.0, %v1470
        %v1472 = vpop.f32.mrb[0].mxu0
        %1473 = vmatprep.mubr.f32.mxu0 0.0
        %1474 = vmatmul.mubr.f32.gmra.mrb[0].mxu0 %v1402
        %v1475 = vpop.f32.mrb[0].mxu0
        %v1476 = vadd.f32 0.0, %v1475
        %v1477 = vpop.f32.mrb[0].mxu0
        %1478 = vdwg.mxu0
        %s1479 = scalar_lea.vmem [#allocation2], 448
        %v1480 = vld [vmem:[%s1479] sm:$0xff]
        %v1481 = vld [vmem:[%s1479 + $0x8] sm:$0xff]
        %v1482 = vld [vmem:[%s1479 + $0x10] sm:$0xff]
        %v1483 = vld [vmem:[%s1479 + $0x18] sm:$0xff]
        %v1484 = vld [vmem:[%s1479 + $0x20] sm:$0xff]
        %v1485 = vld [vmem:[%s1479 + $0x28] sm:$0xff]
        %v1486 = vld [vmem:[%s1479 + $0x30] sm:$0xff]
        %v1487 = vld [vmem:[%s1479 + $0x38] sm:$0xff]
        %1488 = vmatprep.subr.mxu0 0.0
        %1489 = vmatpush1.msra.mxu0 %v1480
        %1490 = vmatprep.subr.mxu0 0.0
        %1491 = vmatpush1.msra.mxu0 %v1481
        %1492 = vmatprep.subr.mxu0 0.0
        %1493 = vmatpush1.msra.mxu0 %v1482
        %1494 = vmatprep.subr.mxu0 0.0
        %1495 = vmatpush1.msra.mxu0 %v1483
        %1496 = vmatprep.subr.mxu0 0.0
        %1497 = vmatpush1.msra.mxu0 %v1484
        %1498 = vmatprep.subr.mxu0 0.0
        %1499 = vmatpush1.msra.mxu0 %v1485
        %1500 = vmatprep.subr.mxu0 0.0
        %1501 = vmatpush1.msra.mxu0 %v1486
        %1502 = vmatprep.subr.mxu0 0.0
        %1503 = vmatpush1.msra.mxu0 %v1487
        %1504 = vmatprep.subr.mxu0 0.0
        %1505 = vmatpush1.msra.mxu0 0.0
        %1506 = vmatprep.subr.mxu0 0.0
        %1507 = vmatpush1.msra.mxu0 0.0
        %1508 = vmatprep.subr.mxu0 0.0
        %1509 = vmatpush1.msra.mxu0 0.0
        %1510 = vmatprep.subr.mxu0 0.0
        %1511 = vmatpush1.msra.mxu0 0.0
        %1512 = vmatprep.subr.mxu0 0.0
        %1513 = vmatpush1.msra.mxu0 0.0
        %1514 = vmatprep.subr.mxu0 0.0
        %1515 = vmatpush1.msra.mxu0 0.0
        %1516 = vmatprep.subr.mxu0 0.0
        %1517 = vmatpush1.msra.mxu0 0.0
        %1518 = vmatprep.subr.mxu0 0.0
        %1519 = vmatpush1.msra.mxu0 0.0
        %1520 = vmatprep.subr.mxu0 0.0
        %1521 = vmatpush1.msra.mxu0 0.0
        %1522 = vmatprep.subr.mxu0 0.0
        %1523 = vmatpush1.msra.mxu0 0.0
        %1524 = vmatprep.subr.mxu0 0.0
        %1525 = vmatpush1.msra.mxu0 0.0
        %1526 = vmatprep.subr.mxu0 0.0
        %1527 = vmatpush1.msra.mxu0 0.0
        %1528 = vmatprep.subr.mxu0 0.0
        %1529 = vmatpush1.msra.mxu0 0.0
        %1530 = vmatprep.subr.mxu0 0.0
        %1531 = vmatpush1.msra.mxu0 0.0
        %1532 = vmatprep.subr.mxu0 0.0
        %1533 = vmatpush1.msra.mxu0 0.0
        %1534 = vmatprep.subr.mxu0 0.0
        %1535 = vmatpush1.msra.mxu0 0.0
        %1536 = vmatprep.subr.mxu0 0.0
        %1537 = vmatpush1.msra.mxu0 0.0
        %1538 = vmatprep.subr.mxu0 0.0
        %1539 = vmatpush1.msra.mxu0 0.0
        %1540 = vmatprep.subr.mxu0 0.0
        %1541 = vmatpush1.msra.mxu0 0.0
        %1542 = vmatprep.subr.mxu0 0.0
        %1543 = vmatpush1.msra.mxu0 0.0
        %1544 = vmatprep.subr.mxu0 0.0
        %1545 = vmatpush1.msra.mxu0 0.0
        %1546 = vmatprep.subr.mxu0 0.0
        %1547 = vmatpush1.msra.mxu0 0.0
        %1548 = vmatprep.subr.mxu0 0.0
        %1549 = vmatpush1.msra.mxu0 0.0
        %1550 = vmatprep.subr.mxu0 0.0
        %1551 = vmatpush1.msra.mxu0 0.0
        %1552 = vmatprep.mubr.f32.mxu0 0.0
        %1553 = vmatmul.mubr.f32.gmra.mrb[0].mxu0 %v1399
        %v1554 = vpop.f32.mrb[0].mxu0
        %v1555 = vadd.f32 0.0, %v1554
        %v1556 = vpop.f32.mrb[0].mxu0
        %1557 = vmatprep.mubr.f32.mxu0 0.0
        %1558 = vmatmul.mubr.f32.gmra.mrb[0].mxu0 %v1402
        %v1559 = vpop.f32.mrb[0].mxu0
        %v1560 = vadd.f32 0.0, %v1559
        %v1561 = vpop.f32.mrb[0].mxu0
        %1562 = vdwg.mxu0
        %1563 = vmatprep.subr.mxu0 0.0
        %1564 = vmatpush1.msra.mxu0 %v1555
        %1565 = vmatprep.subr.mxu0 0.0
        %1566 = vmatpush1.msra.mxu0 %v1560
        %1567 = vmatprep.subr.mxu0 0.0
        %1568 = vmatpush1.msra.mxu0 0.0
        %1569 = vmatprep.subr.mxu0 0.0
        %1570 = vmatpush1.msra.mxu0 0.0
        %1571 = vmatprep.subr.mxu0 0.0
        %1572 = vmatpush1.msra.mxu0 0.0
        %1573 = vmatprep.subr.mxu0 0.0
        %1574 = vmatpush1.msra.mxu0 0.0
        %1575 = vmatprep.subr.mxu0 0.0
        %1576 = vmatpush1.msra.mxu0 0.0
        %1577 = vmatprep.subr.mxu0 0.0
        %1578 = vmatpush1.msra.mxu0 0.0
        %1579 = vmatprep.subr.mxu0 0.0
        %1580 = vmatpush1.msra.mxu0 0.0
        %1581 = vmatprep.subr.mxu0 0.0
        %1582 = vmatpush1.msra.mxu0 0.0
        %1583 = vmatprep.subr.mxu0 0.0
        %1584 = vmatpush1.msra.mxu0 0.0
        %1585 = vmatprep.subr.mxu0 0.0
        %1586 = vmatpush1.msra.mxu0 0.0
        %1587 = vmatprep.subr.mxu0 0.0
        %1588 = vmatpush1.msra.mxu0 0.0
        %1589 = vmatprep.subr.mxu0 0.0
        %1590 = vmatpush1.msra.mxu0 0.0
        %1591 = vmatprep.subr.mxu0 0.0
        %1592 = vmatpush1.msra.mxu0 0.0
        %1593 = vmatprep.subr.mxu0 0.0
        %1594 = vmatpush1.msra.mxu0 0.0
        %1595 = vmatprep.subr.mxu0 0.0
        %1596 = vmatpush1.msra.mxu0 0.0
        %1597 = vmatprep.subr.mxu0 0.0
        %1598 = vmatpush1.msra.mxu0 0.0
        %1599 = vmatprep.subr.mxu0 0.0
        %1600 = vmatpush1.msra.mxu0 0.0
        %1601 = vmatprep.subr.mxu0 0.0
        %1602 = vmatpush1.msra.mxu0 0.0
        %1603 = vmatprep.subr.mxu0 0.0
        %1604 = vmatpush1.msra.mxu0 0.0
        %1605 = vmatprep.subr.mxu0 0.0
        %1606 = vmatpush1.msra.mxu0 0.0
        %1607 = vmatprep.subr.mxu0 0.0
        %1608 = vmatpush1.msra.mxu0 0.0
        %1609 = vmatprep.subr.mxu0 0.0
        %1610 = vmatpush1.msra.mxu0 0.0
        %1611 = vmatprep.subr.mxu0 0.0
        %1612 = vmatpush1.msra.mxu0 0.0
        %1613 = vmatprep.subr.mxu0 0.0
        %1614 = vmatpush1.msra.mxu0 0.0
        %1615 = vmatprep.subr.mxu0 0.0
        %1616 = vmatpush1.msra.mxu0 0.0
        %1617 = vmatprep.subr.mxu0 0.0
        %1618 = vmatpush1.msra.mxu0 0.0
        %1619 = vmatprep.subr.mxu0 0.0
        %1620 = vmatpush1.msra.mxu0 0.0
        %1621 = vmatprep.subr.mxu0 0.0
        %1622 = vmatpush1.msra.mxu0 0.0
        %1623 = vmatprep.subr.mxu0 0.0
        %1624 = vmatpush1.msra.mxu0 0.0
        %1625 = vmatprep.subr.mxu0 0.0
        %1626 = vmatpush1.msra.mxu0 0.0
        %1627 = vmatprep.mubr.f32.mxu0 0.0
        %1628 = vmatmul.mubr.f32.gmra.mrb[0].mxu0 %v547
        %v1629 = vpop.f32.mrb[0].mxu0
        %v1630 = vadd.f32 0.0, %v1629
        %v1631 = vpop.f32.mrb[0].mxu0
        %1632 = vmatprep.mubr.f32.mxu0 0.0
        %1633 = vmatmul.mubr.f32.gmra.mrb[0].mxu0 %v550
        %v1634 = vpop.f32.mrb[0].mxu0
        %v1635 = vadd.f32 0.0, %v1634
        %v1636 = vpop.f32.mrb[0].mxu0
        %1637 = vdwg.mxu0
        %1638 = vmatprep.subr.mxu0 0.0
        %1639 = vmatpush1.msra.mxu0 %v1471
        %1640 = vmatprep.subr.mxu0 0.0
        %1641 = vmatpush1.msra.mxu0 %v1476
        %1642 = vmatprep.subr.mxu0 0.0
        %1643 = vmatpush1.msra.mxu0 0.0
        %1644 = vmatprep.subr.mxu0 0.0
        %1645 = vmatpush1.msra.mxu0 0.0
        %1646 = vmatprep.subr.mxu0 0.0
        %1647 = vmatpush1.msra.mxu0 0.0
        %1648 = vmatprep.subr.mxu0 0.0
        %1649 = vmatpush1.msra.mxu0 0.0
        %1650 = vmatprep.subr.mxu0 0.0
        %1651 = vmatpush1.msra.mxu0 0.0
        %1652 = vmatprep.subr.mxu0 0.0
        %1653 = vmatpush1.msra.mxu0 0.0
        %1654 = vmatprep.subr.mxu0 0.0
        %1655 = vmatpush1.msra.mxu0 0.0
        %1656 = vmatprep.subr.mxu0 0.0
        %1657 = vmatpush1.msra.mxu0 0.0
        %1658 = vmatprep.subr.mxu0 0.0
        %1659 = vmatpush1.msra.mxu0 0.0
        %1660 = vmatprep.subr.mxu0 0.0
        %1661 = vmatpush1.msra.mxu0 0.0
        %1662 = vmatprep.subr.mxu0 0.0
        %1663 = vmatpush1.msra.mxu0 0.0
        %1664 = vmatprep.subr.mxu0 0.0
        %1665 = vmatpush1.msra.mxu0 0.0
        %1666 = vmatprep.subr.mxu0 0.0
        %1667 = vmatpush1.msra.mxu0 0.0
        %1668 = vmatprep.subr.mxu0 0.0
        %1669 = vmatpush1.msra.mxu0 0.0
        %1670 = vmatprep.subr.mxu0 0.0
        %1671 = vmatpush1.msra.mxu0 0.0
        %1672 = vmatprep.subr.mxu0 0.0
        %1673 = vmatpush1.msra.mxu0 0.0
        %1674 = vmatprep.subr.mxu0 0.0
        %1675 = vmatpush1.msra.mxu0 0.0
        %1676 = vmatprep.subr.mxu0 0.0
        %1677 = vmatpush1.msra.mxu0 0.0
        %1678 = vmatprep.subr.mxu0 0.0
        %1679 = vmatpush1.msra.mxu0 0.0
        %1680 = vmatprep.subr.mxu0 0.0
        %1681 = vmatpush1.msra.mxu0 0.0
        %1682 = vmatprep.subr.mxu0 0.0
        %1683 = vmatpush1.msra.mxu0 0.0
        %1684 = vmatprep.subr.mxu0 0.0
        %1685 = vmatpush1.msra.mxu0 0.0
        %1686 = vmatprep.subr.mxu0 0.0
        %1687 = vmatpush1.msra.mxu0 0.0
        %1688 = vmatprep.subr.mxu0 0.0
        %1689 = vmatpush1.msra.mxu0 0.0
        %1690 = vmatprep.subr.mxu0 0.0
        %1691 = vmatpush1.msra.mxu0 0.0
        %1692 = vmatprep.subr.mxu0 0.0
        %1693 = vmatpush1.msra.mxu0 0.0
        %1694 = vmatprep.subr.mxu0 0.0
        %1695 = vmatpush1.msra.mxu0 0.0
        %1696 = vmatprep.subr.mxu0 0.0
        %1697 = vmatpush1.msra.mxu0 0.0
        %1698 = vmatprep.subr.mxu0 0.0
        %1699 = vmatpush1.msra.mxu0 0.0
        %1700 = vmatprep.subr.mxu0 0.0
        %1701 = vmatpush1.msra.mxu0 0.0
        %1702 = vmatprep.mubr.f32.mxu0 0.0
        %1703 = vmatmul.mubr.f32.gmra.mrb[0].mxu0 %v628
        %v1704 = vpop.f32.mrb[0].mxu0
        %v1705 = vadd.f32 %v1630, %v1704
        %v1706 = vpop.f32.mrb[0].mxu0
        %1707 = vmatprep.mubr.f32.mxu0 0.0
        %1708 = vmatmul.mubr.f32.gmra.mrb[0].mxu0 %v631
        %v1709 = vpop.f32.mrb[0].mxu0
        %v1710 = vadd.f32 %v1635, %v1709
        %v1711 = vpop.f32.mrb[0].mxu0
        %1712 = vdwg.mxu0
        %s1713 = scalar_lea.vmem [#allocation2], 512
        %v1714 = vld [vmem:[%s1713] sm:$0xff]
        %v1715 = vld [vmem:[%s1713 + $0x8] sm:$0xff]
        %v1716 = vld [vmem:[%s1713 + $0x10] sm:$0xff]
        %v1717 = vld [vmem:[%s1713 + $0x18] sm:$0xff]
        %v1718 = vld [vmem:[%s1713 + $0x20] sm:$0xff]
        %v1719 = vld [vmem:[%s1713 + $0x28] sm:$0xff]
        %v1720 = vld [vmem:[%s1713 + $0x30] sm:$0xff]
        %v1721 = vld [vmem:[%s1713 + $0x38] sm:$0xff]
        %1722 = vmatprep.subr.mxu0 0.0
        %1723 = vmatpush1.msra.mxu0 %v1714
        %1724 = vmatprep.subr.mxu0 0.0
        %1725 = vmatpush1.msra.mxu0 %v1715
        %1726 = vmatprep.subr.mxu0 0.0
        %1727 = vmatpush1.msra.mxu0 %v1716
        %1728 = vmatprep.subr.mxu0 0.0
        %1729 = vmatpush1.msra.mxu0 %v1717
        %1730 = vmatprep.subr.mxu0 0.0
        %1731 = vmatpush1.msra.mxu0 %v1718
        %1732 = vmatprep.subr.mxu0 0.0
        %1733 = vmatpush1.msra.mxu0 %v1719
        %1734 = vmatprep.subr.mxu0 0.0
        %1735 = vmatpush1.msra.mxu0 %v1720
        %1736 = vmatprep.subr.mxu0 0.0
        %1737 = vmatpush1.msra.mxu0 %v1721
        %1738 = vmatprep.subr.mxu0 0.0
        %1739 = vmatpush1.msra.mxu0 0.0
        %1740 = vmatprep.subr.mxu0 0.0
        %1741 = vmatpush1.msra.mxu0 0.0
        %1742 = vmatprep.subr.mxu0 0.0
        %1743 = vmatpush1.msra.mxu0 0.0
        %1744 = vmatprep.subr.mxu0 0.0
        %1745 = vmatpush1.msra.mxu0 0.0
        %1746 = vmatprep.subr.mxu0 0.0
        %1747 = vmatpush1.msra.mxu0 0.0
        %1748 = vmatprep.subr.mxu0 0.0
        %1749 = vmatpush1.msra.mxu0 0.0
        %1750 = vmatprep.subr.mxu0 0.0
        %1751 = vmatpush1.msra.mxu0 0.0
        %1752 = vmatprep.subr.mxu0 0.0
        %1753 = vmatpush1.msra.mxu0 0.0
        %1754 = vmatprep.subr.mxu0 0.0
        %1755 = vmatpush1.msra.mxu0 0.0
        %1756 = vmatprep.subr.mxu0 0.0
        %1757 = vmatpush1.msra.mxu0 0.0
        %1758 = vmatprep.subr.mxu0 0.0
        %1759 = vmatpush1.msra.mxu0 0.0
        %1760 = vmatprep.subr.mxu0 0.0
        %1761 = vmatpush1.msra.mxu0 0.0
        %1762 = vmatprep.subr.mxu0 0.0
        %1763 = vmatpush1.msra.mxu0 0.0
        %1764 = vmatprep.subr.mxu0 0.0
        %1765 = vmatpush1.msra.mxu0 0.0
        %1766 = vmatprep.subr.mxu0 0.0
        %1767 = vmatpush1.msra.mxu0 0.0
        %1768 = vmatprep.subr.mxu0 0.0
        %1769 = vmatpush1.msra.mxu0 0.0
        %1770 = vmatprep.subr.mxu0 0.0
        %1771 = vmatpush1.msra.mxu0 0.0
        %1772 = vmatprep.subr.mxu0 0.0
        %1773 = vmatpush1.msra.mxu0 0.0
        %1774 = vmatprep.subr.mxu0 0.0
        %1775 = vmatpush1.msra.mxu0 0.0
        %1776 = vmatprep.subr.mxu0 0.0
        %1777 = vmatpush1.msra.mxu0 0.0
        %1778 = vmatprep.subr.mxu0 0.0
        %1779 = vmatpush1.msra.mxu0 0.0
        %1780 = vmatprep.subr.mxu0 0.0
        %1781 = vmatpush1.msra.mxu0 0.0
        %1782 = vmatprep.subr.mxu0 0.0
        %1783 = vmatpush1.msra.mxu0 0.0
        %1784 = vmatprep.subr.mxu0 0.0
        %1785 = vmatpush1.msra.mxu0 0.0
        %1786 = vmatprep.mubr.f32.mxu0 0.0
        %1787 = vmatmul.mubr.f32.gmra.mrb[0].mxu0 %v1399
        %v1788 = vpop.f32.mrb[0].mxu0
        %v1789 = vadd.f32 0.0, %v1788
        %v1790 = vpop.f32.mrb[0].mxu0
        %1791 = vmatprep.mubr.f32.mxu0 0.0
        %1792 = vmatmul.mubr.f32.gmra.mrb[0].mxu0 %v1402
        %v1793 = vpop.f32.mrb[0].mxu0
        %v1794 = vadd.f32 0.0, %v1793
        %v1795 = vpop.f32.mrb[0].mxu0
        %1796 = vdwg.mxu0
        %1797 = vmatprep.subr.mxu0 0.0
        %1798 = vmatpush1.msra.mxu0 %v1789
        %1799 = vmatprep.subr.mxu0 0.0
        %1800 = vmatpush1.msra.mxu0 %v1794
        %1801 = vmatprep.subr.mxu0 0.0
        %1802 = vmatpush1.msra.mxu0 0.0
        %1803 = vmatprep.subr.mxu0 0.0
        %1804 = vmatpush1.msra.mxu0 0.0
        %1805 = vmatprep.subr.mxu0 0.0
        %1806 = vmatpush1.msra.mxu0 0.0
        %1807 = vmatprep.subr.mxu0 0.0
        %1808 = vmatpush1.msra.mxu0 0.0
        %1809 = vmatprep.subr.mxu0 0.0
        %1810 = vmatpush1.msra.mxu0 0.0
        %1811 = vmatprep.subr.mxu0 0.0
        %1812 = vmatpush1.msra.mxu0 0.0
        %1813 = vmatprep.subr.mxu0 0.0
        %1814 = vmatpush1.msra.mxu0 0.0
        %1815 = vmatprep.subr.mxu0 0.0
        %1816 = vmatpush1.msra.mxu0 0.0
        %1817 = vmatprep.subr.mxu0 0.0
        %1818 = vmatpush1.msra.mxu0 0.0
        %1819 = vmatprep.subr.mxu0 0.0
        %1820 = vmatpush1.msra.mxu0 0.0
        %1821 = vmatprep.subr.mxu0 0.0
        %1822 = vmatpush1.msra.mxu0 0.0
        %1823 = vmatprep.subr.mxu0 0.0
        %1824 = vmatpush1.msra.mxu0 0.0
        %1825 = vmatprep.subr.mxu0 0.0
        %1826 = vmatpush1.msra.mxu0 0.0
        %1827 = vmatprep.subr.mxu0 0.0
        %1828 = vmatpush1.msra.mxu0 0.0
        %1829 = vmatprep.subr.mxu0 0.0
        %1830 = vmatpush1.msra.mxu0 0.0
        %1831 = vmatprep.subr.mxu0 0.0
        %1832 = vmatpush1.msra.mxu0 0.0
        %1833 = vmatprep.subr.mxu0 0.0
        %1834 = vmatpush1.msra.mxu0 0.0
        %1835 = vmatprep.subr.mxu0 0.0
        %1836 = vmatpush1.msra.mxu0 0.0
        %1837 = vmatprep.subr.mxu0 0.0
        %1838 = vmatpush1.msra.mxu0 0.0
        %1839 = vmatprep.subr.mxu0 0.0
        %1840 = vmatpush1.msra.mxu0 0.0
        %1841 = vmatprep.subr.mxu0 0.0
        %1842 = vmatpush1.msra.mxu0 0.0
        %1843 = vmatprep.subr.mxu0 0.0
        %1844 = vmatpush1.msra.mxu0 0.0
        %1845 = vmatprep.subr.mxu0 0.0
        %1846 = vmatpush1.msra.mxu0 0.0
        %1847 = vmatprep.subr.mxu0 0.0
        %1848 = vmatpush1.msra.mxu0 0.0
        %1849 = vmatprep.subr.mxu0 0.0
        %1850 = vmatpush1.msra.mxu0 0.0
        %1851 = vmatprep.subr.mxu0 0.0
        %1852 = vmatpush1.msra.mxu0 0.0
        %1853 = vmatprep.subr.mxu0 0.0
        %1854 = vmatpush1.msra.mxu0 0.0
        %1855 = vmatprep.subr.mxu0 0.0
        %1856 = vmatpush1.msra.mxu0 0.0
        %1857 = vmatprep.subr.mxu0 0.0
        %1858 = vmatpush1.msra.mxu0 0.0
        %1859 = vmatprep.subr.mxu0 0.0
        %1860 = vmatpush1.msra.mxu0 0.0
        %1861 = vmatprep.mubr.f32.mxu0 0.0
        %1862 = vmatmul.mubr.f32.gmra.mrb[0].mxu0 %v796
        %v1863 = vpop.f32.mrb[0].mxu0
        %v1864 = vadd.f32 0.0, %v1863
        %v1865 = vpop.f32.mrb[0].mxu0
        %1866 = vmatprep.mubr.f32.mxu0 0.0
        %1867 = vmatmul.mubr.f32.gmra.mrb[0].mxu0 %v799
        %v1868 = vpop.f32.mrb[0].mxu0
        %v1869 = vadd.f32 0.0, %v1868
        %v1870 = vpop.f32.mrb[0].mxu0
        %1871 = vdwg.mxu0
        %v1872 = vadd.f32 %v1705, %v1864
        %v1873 = vadd.f32 %v1710, %v1869
        %v1875 = vlaneseq
        %v1876 = vshrl.u32 %v1875, 7
        %v1877 = vsub.s32 0, %v1876
        %v1878 = vrot.slane %v1388, %v1877
        %v1880 = vadd.f32 %v1872, %v1878
        %v1881 = vadd.f32 %v1873, %v1878
        %v1882 = vmax.f32 %v1880, 0.0
        %v1883 = vmax.f32 %v1881, 0.0
        %s1884 = scalar_lea.vmem %s4, 3
        %v1885 = vld [vmem:[%s1884] sm:$0x1]
        %s1886 = scalar_lea.vmem [#allocation2], 576
        %v1887 = vld [vmem:[%s1886] sm:$0xff]
        %v1888 = vld [vmem:[%s1886 + $0x8] sm:$0xff]
        %v1889 = vld [vmem:[%s1886 + $0x10] sm:$0xff]
        %v1890 = vld [vmem:[%s1886 + $0x18] sm:$0xff]
        %v1891 = vld [vmem:[%s1886 + $0x20] sm:$0xff]
        %v1892 = vld [vmem:[%s1886 + $0x28] sm:$0xff]
        %v1893 = vld [vmem:[%s1886 + $0x30] sm:$0xff]
        %v1894 = vld [vmem:[%s1886 + $0x38] sm:$0xff]
        %v1896 = vsel %vm374, %v1882, 0
        %v1899 = vsel %vm374, %v1883, 0
        %1901 = vmatprep.subr.mxu0 0.0
        %1902 = vmatpush1.msra.mxu0 %v1887
        %1903 = vmatprep.subr.mxu0 0.0
        %1904 = vmatpush1.msra.mxu0 %v1888
        %1905 = vmatprep.subr.mxu0 0.0
        %1906 = vmatpush1.msra.mxu0 %v1889
        %1907 = vmatprep.subr.mxu0 0.0
        %1908 = vmatpush1.msra.mxu0 %v1890
        %1909 = vmatprep.subr.mxu0 0.0
        %1910 = vmatpush1.msra.mxu0 %v1891
        %1911 = vmatprep.subr.mxu0 0.0
        %1912 = vmatpush1.msra.mxu0 %v1892
        %1913 = vmatprep.subr.mxu0 0.0
        %1914 = vmatpush1.msra.mxu0 %v1893
        %1915 = vmatprep.subr.mxu0 0.0
        %1916 = vmatpush1.msra.mxu0 %v1894
        %1917 = vmatprep.subr.mxu0 0.0
        %1918 = vmatpush1.msra.mxu0 0.0
        %1919 = vmatprep.subr.mxu0 0.0
        %1920 = vmatpush1.msra.mxu0 0.0
        %1921 = vmatprep.subr.mxu0 0.0
        %1922 = vmatpush1.msra.mxu0 0.0
        %1923 = vmatprep.subr.mxu0 0.0
        %1924 = vmatpush1.msra.mxu0 0.0
        %1925 = vmatprep.subr.mxu0 0.0
        %1926 = vmatpush1.msra.mxu0 0.0
        %1927 = vmatprep.subr.mxu0 0.0
        %1928 = vmatpush1.msra.mxu0 0.0
        %1929 = vmatprep.subr.mxu0 0.0
        %1930 = vmatpush1.msra.mxu0 0.0
        %1931 = vmatprep.subr.mxu0 0.0
        %1932 = vmatpush1.msra.mxu0 0.0
        %1933 = vmatprep.subr.mxu0 0.0
        %1934 = vmatpush1.msra.mxu0 0.0
        %1935 = vmatprep.subr.mxu0 0.0
        %1936 = vmatpush1.msra.mxu0 0.0
        %1937 = vmatprep.subr.mxu0 0.0
        %1938 = vmatpush1.msra.mxu0 0.0
        %1939 = vmatprep.subr.mxu0 0.0
        %1940 = vmatpush1.msra.mxu0 0.0
        %1941 = vmatprep.subr.mxu0 0.0
        %1942 = vmatpush1.msra.mxu0 0.0
        %1943 = vmatprep.subr.mxu0 0.0
        %1944 = vmatpush1.msra.mxu0 0.0
        %1945 = vmatprep.subr.mxu0 0.0
        %1946 = vmatpush1.msra.mxu0 0.0
        %1947 = vmatprep.subr.mxu0 0.0
        %1948 = vmatpush1.msra.mxu0 0.0
        %1949 = vmatprep.subr.mxu0 0.0
        %1950 = vmatpush1.msra.mxu0 0.0
        %1951 = vmatprep.subr.mxu0 0.0
        %1952 = vmatpush1.msra.mxu0 0.0
        %1953 = vmatprep.subr.mxu0 0.0
        %1954 = vmatpush1.msra.mxu0 0.0
        %1955 = vmatprep.subr.mxu0 0.0
        %1956 = vmatpush1.msra.mxu0 0.0
        %1957 = vmatprep.subr.mxu0 0.0
        %1958 = vmatpush1.msra.mxu0 0.0
        %1959 = vmatprep.subr.mxu0 0.0
        %1960 = vmatpush1.msra.mxu0 0.0
        %1961 = vmatprep.subr.mxu0 0.0
        %1962 = vmatpush1.msra.mxu0 0.0
        %1963 = vmatprep.subr.mxu0 0.0
        %1964 = vmatpush1.msra.mxu0 0.0
        %1965 = vmatprep.mubr.f32.mxu0 0.0
        %1966 = vmatmul.mubr.f32.gmra.mrb[0].mxu0 %v1896
        %v1967 = vpop.f32.mrb[0].mxu0
        %v1968 = vadd.f32 0.0, %v1967
        %v1969 = vpop.f32.mrb[0].mxu0
        %1970 = vmatprep.mubr.f32.mxu0 0.0
        %1971 = vmatmul.mubr.f32.gmra.mrb[0].mxu0 %v1899
        %v1972 = vpop.f32.mrb[0].mxu0
        %v1973 = vadd.f32 0.0, %v1972
        %v1974 = vpop.f32.mrb[0].mxu0
        %1975 = vdwg.mxu0
        %s1976 = scalar_lea.vmem [#allocation2], 640
        %v1977 = vld [vmem:[%s1976] sm:$0xff]
        %v1978 = vld [vmem:[%s1976 + $0x8] sm:$0xff]
        %v1979 = vld [vmem:[%s1976 + $0x10] sm:$0xff]
        %v1980 = vld [vmem:[%s1976 + $0x18] sm:$0xff]
        %v1981 = vld [vmem:[%s1976 + $0x20] sm:$0xff]
        %v1982 = vld [vmem:[%s1976 + $0x28] sm:$0xff]
        %v1983 = vld [vmem:[%s1976 + $0x30] sm:$0xff]
        %v1984 = vld [vmem:[%s1976 + $0x38] sm:$0xff]
        %1985 = vmatprep.subr.mxu0 0.0
        %1986 = vmatpush1.msra.mxu0 %v1977
        %1987 = vmatprep.subr.mxu0 0.0
        %1988 = vmatpush1.msra.mxu0 %v1978
        %1989 = vmatprep.subr.mxu0 0.0
        %1990 = vmatpush1.msra.mxu0 %v1979
        %1991 = vmatprep.subr.mxu0 0.0
        %1992 = vmatpush1.msra.mxu0 %v1980
        %1993 = vmatprep.subr.mxu0 0.0
        %1994 = vmatpush1.msra.mxu0 %v1981
        %1995 = vmatprep.subr.mxu0 0.0
        %1996 = vmatpush1.msra.mxu0 %v1982
        %1997 = vmatprep.subr.mxu0 0.0
        %1998 = vmatpush1.msra.mxu0 %v1983
        %1999 = vmatprep.subr.mxu0 0.0
        %2000 = vmatpush1.msra.mxu0 %v1984
        %2001 = vmatprep.subr.mxu0 0.0
        %2002 = vmatpush1.msra.mxu0 0.0
        %2003 = vmatprep.subr.mxu0 0.0
        %2004 = vmatpush1.msra.mxu0 0.0
        %2005 = vmatprep.subr.mxu0 0.0
        %2006 = vmatpush1.msra.mxu0 0.0
        %2007 = vmatprep.subr.mxu0 0.0
        %2008 = vmatpush1.msra.mxu0 0.0
        %2009 = vmatprep.subr.mxu0 0.0
        %2010 = vmatpush1.msra.mxu0 0.0
        %2011 = vmatprep.subr.mxu0 0.0
        %2012 = vmatpush1.msra.mxu0 0.0
        %2013 = vmatprep.subr.mxu0 0.0
        %2014 = vmatpush1.msra.mxu0 0.0
        %2015 = vmatprep.subr.mxu0 0.0
        %2016 = vmatpush1.msra.mxu0 0.0
        %2017 = vmatprep.subr.mxu0 0.0
        %2018 = vmatpush1.msra.mxu0 0.0
        %2019 = vmatprep.subr.mxu0 0.0
        %2020 = vmatpush1.msra.mxu0 0.0
        %2021 = vmatprep.subr.mxu0 0.0
        %2022 = vmatpush1.msra.mxu0 0.0
        %2023 = vmatprep.subr.mxu0 0.0
        %2024 = vmatpush1.msra.mxu0 0.0
        %2025 = vmatprep.subr.mxu0 0.0
        %2026 = vmatpush1.msra.mxu0 0.0
        %2027 = vmatprep.subr.mxu0 0.0
        %2028 = vmatpush1.msra.mxu0 0.0
        %2029 = vmatprep.subr.mxu0 0.0
        %2030 = vmatpush1.msra.mxu0 0.0
        %2031 = vmatprep.subr.mxu0 0.0
        %2032 = vmatpush1.msra.mxu0 0.0
        %2033 = vmatprep.subr.mxu0 0.0
        %2034 = vmatpush1.msra.mxu0 0.0
        %2035 = vmatprep.subr.mxu0 0.0
        %2036 = vmatpush1.msra.mxu0 0.0
        %2037 = vmatprep.subr.mxu0 0.0
        %2038 = vmatpush1.msra.mxu0 0.0
        %2039 = vmatprep.subr.mxu0 0.0
        %2040 = vmatpush1.msra.mxu0 0.0
        %2041 = vmatprep.subr.mxu0 0.0
        %2042 = vmatpush1.msra.mxu0 0.0
        %2043 = vmatprep.subr.mxu0 0.0
        %2044 = vmatpush1.msra.mxu0 0.0
        %2045 = vmatprep.subr.mxu0 0.0
        %2046 = vmatpush1.msra.mxu0 0.0
        %2047 = vmatprep.subr.mxu0 0.0
        %2048 = vmatpush1.msra.mxu0 0.0
        %2049 = vmatprep.mubr.f32.mxu0 0.0
        %2050 = vmatmul.mubr.f32.gmra.mrb[0].mxu0 %v1896
        %v2051 = vpop.f32.mrb[0].mxu0
        %v2052 = vadd.f32 0.0, %v2051
        %v2053 = vpop.f32.mrb[0].mxu0
        %2054 = vmatprep.mubr.f32.mxu0 0.0
        %2055 = vmatmul.mubr.f32.gmra.mrb[0].mxu0 %v1899
        %v2056 = vpop.f32.mrb[0].mxu0
        %v2057 = vadd.f32 0.0, %v2056
        %v2058 = vpop.f32.mrb[0].mxu0
        %2059 = vdwg.mxu0
        %2060 = vmatprep.subr.mxu0 0.0
        %2061 = vmatpush1.msra.mxu0 %v2052
        %2062 = vmatprep.subr.mxu0 0.0
        %2063 = vmatpush1.msra.mxu0 %v2057
        %2064 = vmatprep.subr.mxu0 0.0
        %2065 = vmatpush1.msra.mxu0 0.0
        %2066 = vmatprep.subr.mxu0 0.0
        %2067 = vmatpush1.msra.mxu0 0.0
        %2068 = vmatprep.subr.mxu0 0.0
        %2069 = vmatpush1.msra.mxu0 0.0
        %2070 = vmatprep.subr.mxu0 0.0
        %2071 = vmatpush1.msra.mxu0 0.0
        %2072 = vmatprep.subr.mxu0 0.0
        %2073 = vmatpush1.msra.mxu0 0.0
        %2074 = vmatprep.subr.mxu0 0.0
        %2075 = vmatpush1.msra.mxu0 0.0
        %2076 = vmatprep.subr.mxu0 0.0
        %2077 = vmatpush1.msra.mxu0 0.0
        %2078 = vmatprep.subr.mxu0 0.0
        %2079 = vmatpush1.msra.mxu0 0.0
        %2080 = vmatprep.subr.mxu0 0.0
        %2081 = vmatpush1.msra.mxu0 0.0
        %2082 = vmatprep.subr.mxu0 0.0
        %2083 = vmatpush1.msra.mxu0 0.0
        %2084 = vmatprep.subr.mxu0 0.0
        %2085 = vmatpush1.msra.mxu0 0.0
        %2086 = vmatprep.subr.mxu0 0.0
        %2087 = vmatpush1.msra.mxu0 0.0
        %2088 = vmatprep.subr.mxu0 0.0
        %2089 = vmatpush1.msra.mxu0 0.0
        %2090 = vmatprep.subr.mxu0 0.0
        %2091 = vmatpush1.msra.mxu0 0.0
        %2092 = vmatprep.subr.mxu0 0.0
        %2093 = vmatpush1.msra.mxu0 0.0
        %2094 = vmatprep.subr.mxu0 0.0
        %2095 = vmatpush1.msra.mxu0 0.0
        %2096 = vmatprep.subr.mxu0 0.0
        %2097 = vmatpush1.msra.mxu0 0.0
        %2098 = vmatprep.subr.mxu0 0.0
        %2099 = vmatpush1.msra.mxu0 0.0
        %2100 = vmatprep.subr.mxu0 0.0
        %2101 = vmatpush1.msra.mxu0 0.0
        %2102 = vmatprep.subr.mxu0 0.0
        %2103 = vmatpush1.msra.mxu0 0.0
        %2104 = vmatprep.subr.mxu0 0.0
        %2105 = vmatpush1.msra.mxu0 0.0
        %2106 = vmatprep.subr.mxu0 0.0
        %2107 = vmatpush1.msra.mxu0 0.0
        %2108 = vmatprep.subr.mxu0 0.0
        %2109 = vmatpush1.msra.mxu0 0.0
        %2110 = vmatprep.subr.mxu0 0.0
        %2111 = vmatpush1.msra.mxu0 0.0
        %2112 = vmatprep.subr.mxu0 0.0
        %2113 = vmatpush1.msra.mxu0 0.0
        %2114 = vmatprep.subr.mxu0 0.0
        %2115 = vmatpush1.msra.mxu0 0.0
        %2116 = vmatprep.subr.mxu0 0.0
        %2117 = vmatpush1.msra.mxu0 0.0
        %2118 = vmatprep.subr.mxu0 0.0
        %2119 = vmatpush1.msra.mxu0 0.0
        %2120 = vmatprep.subr.mxu0 0.0
        %2121 = vmatpush1.msra.mxu0 0.0
        %2122 = vmatprep.subr.mxu0 0.0
        %2123 = vmatpush1.msra.mxu0 0.0
        %2124 = vmatprep.mubr.f32.mxu0 0.0
        %2125 = vmatmul.mubr.f32.gmra.mrb[0].mxu0 %v547
        %v2126 = vpop.f32.mrb[0].mxu0
        %v2127 = vadd.f32 0.0, %v2126
        %v2128 = vpop.f32.mrb[0].mxu0
        %2129 = vmatprep.mubr.f32.mxu0 0.0
        %2130 = vmatmul.mubr.f32.gmra.mrb[0].mxu0 %v550
        %v2131 = vpop.f32.mrb[0].mxu0
        %v2132 = vadd.f32 0.0, %v2131
        %v2133 = vpop.f32.mrb[0].mxu0
        %2134 = vdwg.mxu0
        %2135 = vmatprep.subr.mxu0 0.0
        %2136 = vmatpush1.msra.mxu0 %v1968
        %2137 = vmatprep.subr.mxu0 0.0
        %2138 = vmatpush1.msra.mxu0 %v1973
        %2139 = vmatprep.subr.mxu0 0.0
        %2140 = vmatpush1.msra.mxu0 0.0
        %2141 = vmatprep.subr.mxu0 0.0
        %2142 = vmatpush1.msra.mxu0 0.0
        %2143 = vmatprep.subr.mxu0 0.0
        %2144 = vmatpush1.msra.mxu0 0.0
        %2145 = vmatprep.subr.mxu0 0.0
        %2146 = vmatpush1.msra.mxu0 0.0
        %2147 = vmatprep.subr.mxu0 0.0
        %2148 = vmatpush1.msra.mxu0 0.0
        %2149 = vmatprep.subr.mxu0 0.0
        %2150 = vmatpush1.msra.mxu0 0.0
        %2151 = vmatprep.subr.mxu0 0.0
        %2152 = vmatpush1.msra.mxu0 0.0
        %2153 = vmatprep.subr.mxu0 0.0
        %2154 = vmatpush1.msra.mxu0 0.0
        %2155 = vmatprep.subr.mxu0 0.0
        %2156 = vmatpush1.msra.mxu0 0.0
        %2157 = vmatprep.subr.mxu0 0.0
        %2158 = vmatpush1.msra.mxu0 0.0
        %2159 = vmatprep.subr.mxu0 0.0
        %2160 = vmatpush1.msra.mxu0 0.0
        %2161 = vmatprep.subr.mxu0 0.0
        %2162 = vmatpush1.msra.mxu0 0.0
        %2163 = vmatprep.subr.mxu0 0.0
        %2164 = vmatpush1.msra.mxu0 0.0
        %2165 = vmatprep.subr.mxu0 0.0
        %2166 = vmatpush1.msra.mxu0 0.0
        %2167 = vmatprep.subr.mxu0 0.0
        %2168 = vmatpush1.msra.mxu0 0.0
        %2169 = vmatprep.subr.mxu0 0.0
        %2170 = vmatpush1.msra.mxu0 0.0
        %2171 = vmatprep.subr.mxu0 0.0
        %2172 = vmatpush1.msra.mxu0 0.0
        %2173 = vmatprep.subr.mxu0 0.0
        %2174 = vmatpush1.msra.mxu0 0.0
        %2175 = vmatprep.subr.mxu0 0.0
        %2176 = vmatpush1.msra.mxu0 0.0
        %2177 = vmatprep.subr.mxu0 0.0
        %2178 = vmatpush1.msra.mxu0 0.0
        %2179 = vmatprep.subr.mxu0 0.0
        %2180 = vmatpush1.msra.mxu0 0.0
        %2181 = vmatprep.subr.mxu0 0.0
        %2182 = vmatpush1.msra.mxu0 0.0
        %2183 = vmatprep.subr.mxu0 0.0
        %2184 = vmatpush1.msra.mxu0 0.0
        %2185 = vmatprep.subr.mxu0 0.0
        %2186 = vmatpush1.msra.mxu0 0.0
        %2187 = vmatprep.subr.mxu0 0.0
        %2188 = vmatpush1.msra.mxu0 0.0
        %2189 = vmatprep.subr.mxu0 0.0
        %2190 = vmatpush1.msra.mxu0 0.0
        %2191 = vmatprep.subr.mxu0 0.0
        %2192 = vmatpush1.msra.mxu0 0.0
        %2193 = vmatprep.subr.mxu0 0.0
        %2194 = vmatpush1.msra.mxu0 0.0
        %2195 = vmatprep.subr.mxu0 0.0
        %2196 = vmatpush1.msra.mxu0 0.0
        %2197 = vmatprep.subr.mxu0 0.0
        %2198 = vmatpush1.msra.mxu0 0.0
        %2199 = vmatprep.mubr.f32.mxu0 0.0
        %2200 = vmatmul.mubr.f32.gmra.mrb[0].mxu0 %v628
        %v2201 = vpop.f32.mrb[0].mxu0
        %v2202 = vadd.f32 %v2127, %v2201
        %v2203 = vpop.f32.mrb[0].mxu0
        %2204 = vmatprep.mubr.f32.mxu0 0.0
        %2205 = vmatmul.mubr.f32.gmra.mrb[0].mxu0 %v631
        %v2206 = vpop.f32.mrb[0].mxu0
        %v2207 = vadd.f32 %v2132, %v2206
        %v2208 = vpop.f32.mrb[0].mxu0
        %2209 = vdwg.mxu0
        %s2210 = scalar_lea.vmem [#allocation2], 704
        %v2211 = vld [vmem:[%s2210] sm:$0xff]
        %v2212 = vld [vmem:[%s2210 + $0x8] sm:$0xff]
        %v2213 = vld [vmem:[%s2210 + $0x10] sm:$0xff]
        %v2214 = vld [vmem:[%s2210 + $0x18] sm:$0xff]
        %v2215 = vld [vmem:[%s2210 + $0x20] sm:$0xff]
        %v2216 = vld [vmem:[%s2210 + $0x28] sm:$0xff]
        %v2217 = vld [vmem:[%s2210 + $0x30] sm:$0xff]
        %v2218 = vld [vmem:[%s2210 + $0x38] sm:$0xff]
        %2219 = vmatprep.subr.mxu0 0.0
        %2220 = vmatpush1.msra.mxu0 %v2211
        %2221 = vmatprep.subr.mxu0 0.0
        %2222 = vmatpush1.msra.mxu0 %v2212
        %2223 = vmatprep.subr.mxu0 0.0
        %2224 = vmatpush1.msra.mxu0 %v2213
        %2225 = vmatprep.subr.mxu0 0.0
        %2226 = vmatpush1.msra.mxu0 %v2214
        %2227 = vmatprep.subr.mxu0 0.0
        %2228 = vmatpush1.msra.mxu0 %v2215
        %2229 = vmatprep.subr.mxu0 0.0
        %2230 = vmatpush1.msra.mxu0 %v2216
        %2231 = vmatprep.subr.mxu0 0.0
        %2232 = vmatpush1.msra.mxu0 %v2217
        %2233 = vmatprep.subr.mxu0 0.0
        %2234 = vmatpush1.msra.mxu0 %v2218
        %2235 = vmatprep.subr.mxu0 0.0
        %2236 = vmatpush1.msra.mxu0 0.0
        %2237 = vmatprep.subr.mxu0 0.0
        %2238 = vmatpush1.msra.mxu0 0.0
        %2239 = vmatprep.subr.mxu0 0.0
        %2240 = vmatpush1.msra.mxu0 0.0
        %2241 = vmatprep.subr.mxu0 0.0
        %2242 = vmatpush1.msra.mxu0 0.0
        %2243 = vmatprep.subr.mxu0 0.0
        %2244 = vmatpush1.msra.mxu0 0.0
        %2245 = vmatprep.subr.mxu0 0.0
        %2246 = vmatpush1.msra.mxu0 0.0
        %2247 = vmatprep.subr.mxu0 0.0
        %2248 = vmatpush1.msra.mxu0 0.0
        %2249 = vmatprep.subr.mxu0 0.0
        %2250 = vmatpush1.msra.mxu0 0.0
        %2251 = vmatprep.subr.mxu0 0.0
        %2252 = vmatpush1.msra.mxu0 0.0
        %2253 = vmatprep.subr.mxu0 0.0
        %2254 = vmatpush1.msra.mxu0 0.0
        %2255 = vmatprep.subr.mxu0 0.0
        %2256 = vmatpush1.msra.mxu0 0.0
        %2257 = vmatprep.subr.mxu0 0.0
        %2258 = vmatpush1.msra.mxu0 0.0
        %2259 = vmatprep.subr.mxu0 0.0
        %2260 = vmatpush1.msra.mxu0 0.0
        %2261 = vmatprep.subr.mxu0 0.0
        %2262 = vmatpush1.msra.mxu0 0.0
        %2263 = vmatprep.subr.mxu0 0.0
        %2264 = vmatpush1.msra.mxu0 0.0
        %2265 = vmatprep.subr.mxu0 0.0
        %2266 = vmatpush1.msra.mxu0 0.0
        %2267 = vmatprep.subr.mxu0 0.0
        %2268 = vmatpush1.msra.mxu0 0.0
        %2269 = vmatprep.subr.mxu0 0.0
        %2270 = vmatpush1.msra.mxu0 0.0
        %2271 = vmatprep.subr.mxu0 0.0
        %2272 = vmatpush1.msra.mxu0 0.0
        %2273 = vmatprep.subr.mxu0 0.0
        %2274 = vmatpush1.msra.mxu0 0.0
        %2275 = vmatprep.subr.mxu0 0.0
        %2276 = vmatpush1.msra.mxu0 0.0
        %2277 = vmatprep.subr.mxu0 0.0
        %2278 = vmatpush1.msra.mxu0 0.0
        %2279 = vmatprep.subr.mxu0 0.0
        %2280 = vmatpush1.msra.mxu0 0.0
        %2281 = vmatprep.subr.mxu0 0.0
        %2282 = vmatpush1.msra.mxu0 0.0
        %2283 = vmatprep.mubr.f32.mxu0 0.0
        %2284 = vmatmul.mubr.f32.gmra.mrb[0].mxu0 %v1896
        %v2285 = vpop.f32.mrb[0].mxu0
        %v2286 = vadd.f32 0.0, %v2285
        %v2287 = vpop.f32.mrb[0].mxu0
        %2288 = vmatprep.mubr.f32.mxu0 0.0
        %2289 = vmatmul.mubr.f32.gmra.mrb[0].mxu0 %v1899
        %v2290 = vpop.f32.mrb[0].mxu0
        %v2291 = vadd.f32 0.0, %v2290
        %v2292 = vpop.f32.mrb[0].mxu0
        %2293 = vdwg.mxu0
        %2294 = vmatprep.subr.mxu0 0.0
        %2295 = vmatpush1.msra.mxu0 %v2286
        %2296 = vmatprep.subr.mxu0 0.0
        %2297 = vmatpush1.msra.mxu0 %v2291
        %2298 = vmatprep.subr.mxu0 0.0
        %2299 = vmatpush1.msra.mxu0 0.0
        %2300 = vmatprep.subr.mxu0 0.0
        %2301 = vmatpush1.msra.mxu0 0.0
        %2302 = vmatprep.subr.mxu0 0.0
        %2303 = vmatpush1.msra.mxu0 0.0
        %2304 = vmatprep.subr.mxu0 0.0
        %2305 = vmatpush1.msra.mxu0 0.0
        %2306 = vmatprep.subr.mxu0 0.0
        %2307 = vmatpush1.msra.mxu0 0.0
        %2308 = vmatprep.subr.mxu0 0.0
        %2309 = vmatpush1.msra.mxu0 0.0
        %2310 = vmatprep.subr.mxu0 0.0
        %2311 = vmatpush1.msra.mxu0 0.0
        %2312 = vmatprep.subr.mxu0 0.0
        %2313 = vmatpush1.msra.mxu0 0.0
        %2314 = vmatprep.subr.mxu0 0.0
        %2315 = vmatpush1.msra.mxu0 0.0
        %2316 = vmatprep.subr.mxu0 0.0
        %2317 = vmatpush1.msra.mxu0 0.0
        %2318 = vmatprep.subr.mxu0 0.0
        %2319 = vmatpush1.msra.mxu0 0.0
        %2320 = vmatprep.subr.mxu0 0.0
        %2321 = vmatpush1.msra.mxu0 0.0
        %2322 = vmatprep.subr.mxu0 0.0
        %2323 = vmatpush1.msra.mxu0 0.0
        %2324 = vmatprep.subr.mxu0 0.0
        %2325 = vmatpush1.msra.mxu0 0.0
        %2326 = vmatprep.subr.mxu0 0.0
        %2327 = vmatpush1.msra.mxu0 0.0
        %2328 = vmatprep.subr.mxu0 0.0
        %2329 = vmatpush1.msra.mxu0 0.0
        %2330 = vmatprep.subr.mxu0 0.0
        %2331 = vmatpush1.msra.mxu0 0.0
        %2332 = vmatprep.subr.mxu0 0.0
        %2333 = vmatpush1.msra.mxu0 0.0
        %2334 = vmatprep.subr.mxu0 0.0
        %2335 = vmatpush1.msra.mxu0 0.0
        %2336 = vmatprep.subr.mxu0 0.0
        %2337 = vmatpush1.msra.mxu0 0.0
        %2338 = vmatprep.subr.mxu0 0.0
        %2339 = vmatpush1.msra.mxu0 0.0
        %2340 = vmatprep.subr.mxu0 0.0
        %2341 = vmatpush1.msra.mxu0 0.0
        %2342 = vmatprep.subr.mxu0 0.0
        %2343 = vmatpush1.msra.mxu0 0.0
        %2344 = vmatprep.subr.mxu0 0.0
        %2345 = vmatpush1.msra.mxu0 0.0
        %2346 = vmatprep.subr.mxu0 0.0
        %2347 = vmatpush1.msra.mxu0 0.0
        %2348 = vmatprep.subr.mxu0 0.0
        %2349 = vmatpush1.msra.mxu0 0.0
        %2350 = vmatprep.subr.mxu0 0.0
        %2351 = vmatpush1.msra.mxu0 0.0
        %2352 = vmatprep.subr.mxu0 0.0
        %2353 = vmatpush1.msra.mxu0 0.0
        %2354 = vmatprep.subr.mxu0 0.0
        %2355 = vmatpush1.msra.mxu0 0.0
        %2356 = vmatprep.subr.mxu0 0.0
        %2357 = vmatpush1.msra.mxu0 0.0
        %2358 = vmatprep.mubr.f32.mxu0 0.0
        %2359 = vmatmul.mubr.f32.gmra.mrb[0].mxu0 %v796
        %v2360 = vpop.f32.mrb[0].mxu0
        %v2361 = vadd.f32 0.0, %v2360
        %v2362 = vpop.f32.mrb[0].mxu0
        %2363 = vmatprep.mubr.f32.mxu0 0.0
        %2364 = vmatmul.mubr.f32.gmra.mrb[0].mxu0 %v799
        %v2365 = vpop.f32.mrb[0].mxu0
        %v2366 = vadd.f32 0.0, %v2365
        %v2367 = vpop.f32.mrb[0].mxu0
        %2368 = vdwg.mxu0
        %v2369 = vadd.f32 %v2202, %v2361
        %v2370 = vadd.f32 %v2207, %v2366
        %v2372 = vlaneseq
        %v2373 = vshrl.u32 %v2372, 7
        %v2374 = vsub.s32 0, %v2373
        %v2375 = vrot.slane %v1885, %v2374
        %v2377 = vadd.f32 %v2369, %v2375
        %v2378 = vadd.f32 %v2370, %v2375
        %v2379 = vadd.f32 %v2377, %v1385
        %v2380 = vadd.f32 %v2378, %v1386
        %v2381 = vmax.f32 %v2379, 0.0
        %v2382 = vmax.f32 %v2380, 0.0
        %v2383 = vld [vmem:[%s5] sm:$0xff]
        %v2384 = vld [vmem:[%s5 + $0x8] sm:$0xff]
        %v2385 = vld [vmem:[%s5 + $0x10] sm:$0xff]
        %v2386 = vld [vmem:[%s5 + $0x18] sm:$0xff]
        %v2388 = vsel %vm545, %v2383, 0
        %v2391 = vsel %vm545, %v2384, 0
        %v2394 = vsel %vm545, %v2385, 0
        %v2397 = vsel %vm545, %v2386, 0
        %2399 = vmatprep.subr.mxu0 0.0
        %2400 = vmatpush1.msra.mxu0 %v2381
        %2401 = vmatprep.subr.mxu0 0.0
        %2402 = vmatpush1.msra.mxu0 %v2382
        %2403 = vmatprep.subr.mxu0 0.0
        %2404 = vmatpush1.msra.mxu0 0.0
        %2405 = vmatprep.subr.mxu0 0.0
        %2406 = vmatpush1.msra.mxu0 0.0
        %2407 = vmatprep.subr.mxu0 0.0
        %2408 = vmatpush1.msra.mxu0 0.0
        %2409 = vmatprep.subr.mxu0 0.0
        %2410 = vmatpush1.msra.mxu0 0.0
        %2411 = vmatprep.subr.mxu0 0.0
        %2412 = vmatpush1.msra.mxu0 0.0
        %2413 = vmatprep.subr.mxu0 0.0
        %2414 = vmatpush1.msra.mxu0 0.0
        %2415 = vmatprep.subr.mxu0 0.0
        %2416 = vmatpush1.msra.mxu0 0.0
        %2417 = vmatprep.subr.mxu0 0.0
        %2418 = vmatpush1.msra.mxu0 0.0
        %2419 = vmatprep.subr.mxu0 0.0
        %2420 = vmatpush1.msra.mxu0 0.0
        %2421 = vmatprep.subr.mxu0 0.0
        %2422 = vmatpush1.msra.mxu0 0.0
        %2423 = vmatprep.subr.mxu0 0.0
        %2424 = vmatpush1.msra.mxu0 0.0
        %2425 = vmatprep.subr.mxu0 0.0
        %2426 = vmatpush1.msra.mxu0 0.0
        %2427 = vmatprep.subr.mxu0 0.0
        %2428 = vmatpush1.msra.mxu0 0.0
        %2429 = vmatprep.subr.mxu0 0.0
        %2430 = vmatpush1.msra.mxu0 0.0
        %2431 = vmatprep.subr.mxu0 0.0
        %2432 = vmatpush1.msra.mxu0 0.0
        %2433 = vmatprep.subr.mxu0 0.0
        %2434 = vmatpush1.msra.mxu0 0.0
        %2435 = vmatprep.subr.mxu0 0.0
        %2436 = vmatpush1.msra.mxu0 0.0
        %2437 = vmatprep.subr.mxu0 0.0
        %2438 = vmatpush1.msra.mxu0 0.0
        %2439 = vmatprep.subr.mxu0 0.0
        %2440 = vmatpush1.msra.mxu0 0.0
        %2441 = vmatprep.subr.mxu0 0.0
        %2442 = vmatpush1.msra.mxu0 0.0
        %2443 = vmatprep.subr.mxu0 0.0
        %2444 = vmatpush1.msra.mxu0 0.0
        %2445 = vmatprep.subr.mxu0 0.0
        %2446 = vmatpush1.msra.mxu0 0.0
        %2447 = vmatprep.subr.mxu0 0.0
        %2448 = vmatpush1.msra.mxu0 0.0
        %2449 = vmatprep.subr.mxu0 0.0
        %2450 = vmatpush1.msra.mxu0 0.0
        %2451 = vmatprep.subr.mxu0 0.0
        %2452 = vmatpush1.msra.mxu0 0.0
        %2453 = vmatprep.subr.mxu0 0.0
        %2454 = vmatpush1.msra.mxu0 0.0
        %2455 = vmatprep.subr.mxu0 0.0
        %2456 = vmatpush1.msra.mxu0 0.0
        %2457 = vmatprep.subr.mxu0 0.0
        %2458 = vmatpush1.msra.mxu0 0.0
        %2459 = vmatprep.subr.mxu0 0.0
        %2460 = vmatpush1.msra.mxu0 0.0
        %2461 = vmatprep.subr.mxu0 0.0
        %2462 = vmatpush1.msra.mxu0 0.0
        %2463 = vmatprep.mubr.f32.mxu0 0.0
        %2464 = vmatmul.mubr.f32.gmra.mrb[0].mxu0 %v2388
        %v2465 = vpop.f32.mrb[0].mxu0
        %v2466 = vadd.f32 0.0, %v2465
        %v2467 = vpop.f32.mrb[0].mxu0
        %2468 = vmatprep.mubr.f32.mxu0 0.0
        %2469 = vmatmul.mubr.f32.gmra.mrb[0].mxu0 %v2391
        %v2470 = vpop.f32.mrb[0].mxu0
        %v2471 = vadd.f32 0.0, %v2470
        %v2472 = vpop.f32.mrb[0].mxu0
        %2473 = vmatprep.mubr.f32.mxu0 0.0
        %2474 = vmatmul.mubr.f32.gmra.mrb[0].mxu0 %v2394
        %v2475 = vpop.f32.mrb[0].mxu0
        %v2476 = vadd.f32 0.0, %v2475
        %v2477 = vpop.f32.mrb[0].mxu0
        %2478 = vmatprep.mubr.f32.mxu0 0.0
        %2479 = vmatmul.mubr.f32.gmra.mrb[0].mxu0 %v2397
        %v2480 = vpop.f32.mrb[0].mxu0
        %v2481 = vadd.f32 0.0, %v2480
        %v2482 = vpop.f32.mrb[0].mxu0
        %2483 = vdwg.mxu0
        %v2484 = vld [vmem:[%s6] sm:$0xff]
        %v2485 = vld [vmem:[%s6 + $0x8] sm:$0xff]
        %v2486 = vld [vmem:[%s6 + $0x10] sm:$0xff]
        %v2487 = vld [vmem:[%s6 + $0x18] sm:$0xff]
        %v2488 = vld [vmem:[%s6 + $0x20] sm:$0xff]
        %v2489 = vld [vmem:[%s6 + $0x28] sm:$0xff]
        %v2490 = vld [vmem:[%s6 + $0x30] sm:$0xff]
        %v2491 = vld [vmem:[%s6 + $0x38] sm:$0xff]
        %v2493 = vsel %vm374, %v2466, 0
        %v2496 = vsel %vm374, %v2471, 0
        %v2499 = vsel %vm374, %v2476, 0
        %v2502 = vsel %vm374, %v2481, 0
        %2504 = vmatprep.subr.mxu0 0.0
        %2505 = vmatpush1.msra.mxu0 %v2484
        %2506 = vmatprep.subr.mxu0 0.0
        %2507 = vmatpush1.msra.mxu0 %v2485
        %2508 = vmatprep.subr.mxu0 0.0
        %2509 = vmatpush1.msra.mxu0 %v2486
        %2510 = vmatprep.subr.mxu0 0.0
        %2511 = vmatpush1.msra.mxu0 %v2487
        %2512 = vmatprep.subr.mxu0 0.0
        %2513 = vmatpush1.msra.mxu0 %v2488
        %2514 = vmatprep.subr.mxu0 0.0
        %2515 = vmatpush1.msra.mxu0 %v2489
        %2516 = vmatprep.subr.mxu0 0.0
        %2517 = vmatpush1.msra.mxu0 %v2490
        %2518 = vmatprep.subr.mxu0 0.0
        %2519 = vmatpush1.msra.mxu0 %v2491
        %2520 = vmatprep.subr.mxu0 0.0
        %2521 = vmatpush1.msra.mxu0 0.0
        %2522 = vmatprep.subr.mxu0 0.0
        %2523 = vmatpush1.msra.mxu0 0.0
        %2524 = vmatprep.subr.mxu0 0.0
        %2525 = vmatpush1.msra.mxu0 0.0
        %2526 = vmatprep.subr.mxu0 0.0
        %2527 = vmatpush1.msra.mxu0 0.0
        %2528 = vmatprep.subr.mxu0 0.0
        %2529 = vmatpush1.msra.mxu0 0.0
        %2530 = vmatprep.subr.mxu0 0.0
        %2531 = vmatpush1.msra.mxu0 0.0
        %2532 = vmatprep.subr.mxu0 0.0
        %2533 = vmatpush1.msra.mxu0 0.0
        %2534 = vmatprep.subr.mxu0 0.0
        %2535 = vmatpush1.msra.mxu0 0.0
        %2536 = vmatprep.subr.mxu0 0.0
        %2537 = vmatpush1.msra.mxu0 0.0
        %2538 = vmatprep.subr.mxu0 0.0
        %2539 = vmatpush1.msra.mxu0 0.0
        %2540 = vmatprep.subr.mxu0 0.0
        %2541 = vmatpush1.msra.mxu0 0.0
        %2542 = vmatprep.subr.mxu0 0.0
        %2543 = vmatpush1.msra.mxu0 0.0
        %2544 = vmatprep.subr.mxu0 0.0
        %2545 = vmatpush1.msra.mxu0 0.0
        %2546 = vmatprep.subr.mxu0 0.0
        %2547 = vmatpush1.msra.mxu0 0.0
        %2548 = vmatprep.subr.mxu0 0.0
        %2549 = vmatpush1.msra.mxu0 0.0
        %2550 = vmatprep.subr.mxu0 0.0
        %2551 = vmatpush1.msra.mxu0 0.0
        %2552 = vmatprep.subr.mxu0 0.0
        %2553 = vmatpush1.msra.mxu0 0.0
        %2554 = vmatprep.subr.mxu0 0.0
        %2555 = vmatpush1.msra.mxu0 0.0
        %2556 = vmatprep.subr.mxu0 0.0
        %2557 = vmatpush1.msra.mxu0 0.0
        %2558 = vmatprep.subr.mxu0 0.0
        %2559 = vmatpush1.msra.mxu0 0.0
        %2560 = vmatprep.subr.mxu0 0.0
        %2561 = vmatpush1.msra.mxu0 0.0
        %2562 = vmatprep.subr.mxu0 0.0
        %2563 = vmatpush1.msra.mxu0 0.0
        %2564 = vmatprep.subr.mxu0 0.0
        %2565 = vmatpush1.msra.mxu0 0.0
        %2566 = vmatprep.subr.mxu0 0.0
        %2567 = vmatpush1.msra.mxu0 0.0
        %2568 = vmatprep.mubr.f32.mxu0 0.0
        %2569 = vmatmul.mubr.f32.gmra.mrb[0].mxu0 %v2493
        %v2570 = vpop.f32.mrb[0].mxu0
        %v2571 = vadd.f32 0.0, %v2570
        %v2572 = vpop.f32.mrb[0].mxu0
        %2573 = vmatprep.mubr.f32.mxu0 0.0
        %2574 = vmatmul.mubr.f32.gmra.mrb[0].mxu0 %v2496
        %v2575 = vpop.f32.mrb[0].mxu0
        %v2576 = vadd.f32 0.0, %v2575
        %v2577 = vpop.f32.mrb[0].mxu0
        %2578 = vmatprep.mubr.f32.mxu0 0.0
        %2579 = vmatmul.mubr.f32.gmra.mrb[0].mxu0 %v2499
        %v2580 = vpop.f32.mrb[0].mxu0
        %v2581 = vadd.f32 0.0, %v2580
        %v2582 = vpop.f32.mrb[0].mxu0
        %2583 = vmatprep.mubr.f32.mxu0 0.0
        %2584 = vmatmul.mubr.f32.gmra.mrb[0].mxu0 %v2502
        %v2585 = vpop.f32.mrb[0].mxu0
        %v2586 = vadd.f32 0.0, %v2585
        %v2587 = vpop.f32.mrb[0].mxu0
        %2588 = vdwg.mxu0
        %v2589 = vld [vmem:[%s8] sm:$0x3]
        %v2590 = vld [vmem:[#allocation4] sm:$0xff]
        %v2591 = vld [vmem:[#allocation4 + $0x8] sm:$0xff]
        %v2592 = vld [vmem:[#allocation4 + $0x10] sm:$0xff]
        %v2593 = vld [vmem:[#allocation4 + $0x18] sm:$0xff]
        %v2594 = vld [vmem:[#allocation4 + $0x20] sm:$0xff]
        %v2595 = vld [vmem:[#allocation4 + $0x28] sm:$0xff]
        %v2596 = vld [vmem:[#allocation4 + $0x30] sm:$0xff]
        %v2597 = vld [vmem:[#allocation4 + $0x38] sm:$0xff]
        %v2598 = vld [vmem:[#allocation4 + $0x40] sm:$0xff]
        %v2599 = vld [vmem:[#allocation4 + $0x48] sm:$0xff]
        %v2600 = vld [vmem:[#allocation4 + $0x50] sm:$0xff]
        %v2601 = vld [vmem:[#allocation4 + $0x58] sm:$0xff]
        %v2602 = vld [vmem:[#allocation4 + $0x60] sm:$0xff]
        %v2603 = vld [vmem:[#allocation4 + $0x68] sm:$0xff]
        %v2604 = vld [vmem:[#allocation4 + $0x70] sm:$0xff]
        %v2605 = vld [vmem:[#allocation4 + $0x78] sm:$0xff]
        %v2606 = vld [vmem:[#allocation4 + $0x80] sm:$0xff]
        %v2607 = vld [vmem:[#allocation4 + $0x88] sm:$0xff]
        %v2608 = vld [vmem:[#allocation4 + $0x90] sm:$0xff]
        %v2609 = vld [vmem:[#allocation4 + $0x98] sm:$0xff]
        %v2610 = vld [vmem:[#allocation4 + $0xa0] sm:$0xff]
        %v2611 = vld [vmem:[#allocation4 + $0xa8] sm:$0xff]
        %v2612 = vld [vmem:[#allocation4 + $0xb0] sm:$0xff]
        %v2613 = vld [vmem:[#allocation4 + $0xb8] sm:$0xff]
        %v2614 = vld [vmem:[#allocation4 + $0xc0] sm:$0xff]
        %v2615 = vld [vmem:[#allocation4 + $0xc8] sm:$0xff]
        %v2616 = vld [vmem:[#allocation4 + $0xd0] sm:$0xff]
        %v2617 = vld [vmem:[#allocation4 + $0xd8] sm:$0xff]
        %v2618 = vld [vmem:[#allocation4 + $0xe0] sm:$0xff]
        %v2619 = vld [vmem:[#allocation4 + $0xe8] sm:$0xff]
        %v2620 = vld [vmem:[#allocation4 + $0xf0] sm:$0xff]
        %v2621 = vld [vmem:[#allocation4 + $0xf8] sm:$0xff]
        %2622 = vmatprep.subr.mxu0 %v2591
        %2623 = vmatpush1.msra.mxu0 %v2590
        %2624 = vmatprep.subr.mxu0 %v2593
        %2625 = vmatpush1.msra.mxu0 %v2592
        %2626 = vmatprep.subr.mxu0 %v2595
        %2627 = vmatpush1.msra.mxu0 %v2594
        %2628 = vmatprep.subr.mxu0 %v2597
        %2629 = vmatpush1.msra.mxu0 %v2596
        %2630 = vmatprep.subr.mxu0 %v2599
        %2631 = vmatpush1.msra.mxu0 %v2598
        %2632 = vmatprep.subr.mxu0 %v2601
        %2633 = vmatpush1.msra.mxu0 %v2600
        %2634 = vmatprep.subr.mxu0 %v2603
        %2635 = vmatpush1.msra.mxu0 %v2602
        %2636 = vmatprep.subr.mxu0 %v2605
        %2637 = vmatpush1.msra.mxu0 %v2604
        %2638 = vmatprep.subr.mxu0 %v2607
        %2639 = vmatpush1.msra.mxu0 %v2606
        %2640 = vmatprep.subr.mxu0 %v2609
        %2641 = vmatpush1.msra.mxu0 %v2608
        %2642 = vmatprep.subr.mxu0 %v2611
        %2643 = vmatpush1.msra.mxu0 %v2610
        %2644 = vmatprep.subr.mxu0 %v2613
        %2645 = vmatpush1.msra.mxu0 %v2612
        %2646 = vmatprep.subr.mxu0 %v2615
        %2647 = vmatpush1.msra.mxu0 %v2614
        %2648 = vmatprep.subr.mxu0 %v2617
        %2649 = vmatpush1.msra.mxu0 %v2616
        %2650 = vmatprep.subr.mxu0 %v2619
        %2651 = vmatpush1.msra.mxu0 %v2618
        %2652 = vmatprep.subr.mxu0 %v2621
        %2653 = vmatpush1.msra.mxu0 %v2620
        %2654 = vmatprep.subr.mxu0 0.0
        %2655 = vmatpush1.msra.mxu0 0.0
        %2656 = vmatprep.subr.mxu0 0.0
        %2657 = vmatpush1.msra.mxu0 0.0
        %2658 = vmatprep.subr.mxu0 0.0
        %2659 = vmatpush1.msra.mxu0 0.0
        %2660 = vmatprep.subr.mxu0 0.0
        %2661 = vmatpush1.msra.mxu0 0.0
        %2662 = vmatprep.subr.mxu0 0.0
        %2663 = vmatpush1.msra.mxu0 0.0
        %2664 = vmatprep.subr.mxu0 0.0
        %2665 = vmatpush1.msra.mxu0 0.0
        %2666 = vmatprep.subr.mxu0 0.0
        %2667 = vmatpush1.msra.mxu0 0.0
        %2668 = vmatprep.subr.mxu0 0.0
        %2669 = vmatpush1.msra.mxu0 0.0
        %2670 = vmatprep.subr.mxu0 0.0
        %2671 = vmatpush1.msra.mxu0 0.0
        %2672 = vmatprep.subr.mxu0 0.0
        %2673 = vmatpush1.msra.mxu0 0.0
        %2674 = vmatprep.subr.mxu0 0.0
        %2675 = vmatpush1.msra.mxu0 0.0
        %2676 = vmatprep.subr.mxu0 0.0
        %2677 = vmatpush1.msra.mxu0 0.0
        %2678 = vmatprep.subr.mxu0 0.0
        %2679 = vmatpush1.msra.mxu0 0.0
        %2680 = vmatprep.subr.mxu0 0.0
        %2681 = vmatpush1.msra.mxu0 0.0
        %2682 = vmatprep.subr.mxu0 0.0
        %2683 = vmatpush1.msra.mxu0 0.0
        %2684 = vmatprep.subr.mxu0 0.0
        %2685 = vmatpush1.msra.mxu0 0.0
        %2686 = vmatprep.mubr.f32.mxu0 0.0
        %2687 = vmatmul.mubr.f32.gmra.mrb[0].mxu0 %v2571
        %v2688 = vpop.f32.mrb[0].mxu0
        %v2689 = vadd.f32 0.0, %v2688
        %v2690 = vpop.f32.mrb[0].mxu0
        %v2691 = vadd.f32 0.0, %v2690
        %2692 = vmatprep.mubr.f32.mxu0 0.0
        %2693 = vmatmul.mubr.f32.gmra.mrb[0].mxu0 %v2576
        %v2694 = vpop.f32.mrb[0].mxu0
        %v2695 = vadd.f32 0.0, %v2694
        %v2696 = vpop.f32.mrb[0].mxu0
        %v2697 = vadd.f32 0.0, %v2696
        %2698 = vmatprep.mubr.f32.mxu0 0.0
        %2699 = vmatmul.mubr.f32.gmra.mrb[0].mxu0 %v2581
        %v2700 = vpop.f32.mrb[0].mxu0
        %v2701 = vadd.f32 0.0, %v2700
        %v2702 = vpop.f32.mrb[0].mxu0
        %v2703 = vadd.f32 0.0, %v2702
        %2704 = vmatprep.mubr.f32.mxu0 0.0
        %2705 = vmatmul.mubr.f32.gmra.mrb[0].mxu0 %v2586
        %v2706 = vpop.f32.mrb[0].mxu0
        %v2707 = vadd.f32 0.0, %v2706
        %v2708 = vpop.f32.mrb[0].mxu0
        %v2709 = vadd.f32 0.0, %v2708
        %2710 = vdwg.mxu0
        %v2711 = vld [vmem:[%s2] sm:$0xff]
        %v2712 = vld [vmem:[%s2 + $0x8] sm:$0xff]
        %v2713 = vld [vmem:[%s2 + $0x10] sm:$0xff]
        %v2714 = vld [vmem:[%s2 + $0x18] sm:$0xff]
        %s2715 = scalar_lea.vmem [#allocation4], 256
        %v2716 = vld [vmem:[%s2715] sm:$0xff]
        %v2717 = vld [vmem:[%s2715 + $0x8] sm:$0xff]
        %v2718 = vld [vmem:[%s2715 + $0x10] sm:$0xff]
        %v2719 = vld [vmem:[%s2715 + $0x18] sm:$0xff]
        %v2720 = vld [vmem:[%s2715 + $0x20] sm:$0xff]
        %v2721 = vld [vmem:[%s2715 + $0x28] sm:$0xff]
        %v2722 = vld [vmem:[%s2715 + $0x30] sm:$0xff]
        %v2723 = vld [vmem:[%s2715 + $0x38] sm:$0xff]
        %v2724 = vld [vmem:[%s2715 + $0x40] sm:$0xff]
        %v2725 = vld [vmem:[%s2715 + $0x48] sm:$0xff]
        %v2726 = vld [vmem:[%s2715 + $0x50] sm:$0xff]
        %v2727 = vld [vmem:[%s2715 + $0x58] sm:$0xff]
        %v2728 = vld [vmem:[%s2715 + $0x60] sm:$0xff]
        %v2729 = vld [vmem:[%s2715 + $0x68] sm:$0xff]
        %v2730 = vld [vmem:[%s2715 + $0x70] sm:$0xff]
        %v2731 = vld [vmem:[%s2715 + $0x78] sm:$0xff]
        %v2732 = vld [vmem:[%s2715 + $0x80] sm:$0xff]
        %v2733 = vld [vmem:[%s2715 + $0x88] sm:$0xff]
        %v2734 = vld [vmem:[%s2715 + $0x90] sm:$0xff]
        %v2735 = vld [vmem:[%s2715 + $0x98] sm:$0xff]
        %v2736 = vld [vmem:[%s2715 + $0xa0] sm:$0xff]
        %v2737 = vld [vmem:[%s2715 + $0xa8] sm:$0xff]
        %v2738 = vld [vmem:[%s2715 + $0xb0] sm:$0xff]
        %v2739 = vld [vmem:[%s2715 + $0xb8] sm:$0xff]
        %v2740 = vld [vmem:[%s2715 + $0xc0] sm:$0xff]
        %v2741 = vld [vmem:[%s2715 + $0xc8] sm:$0xff]
        %v2742 = vld [vmem:[%s2715 + $0xd0] sm:$0xff]
        %v2743 = vld [vmem:[%s2715 + $0xd8] sm:$0xff]
        %v2744 = vld [vmem:[%s2715 + $0xe0] sm:$0xff]
        %v2745 = vld [vmem:[%s2715 + $0xe8] sm:$0xff]
        %v2746 = vld [vmem:[%s2715 + $0xf0] sm:$0xff]
        %v2747 = vld [vmem:[%s2715 + $0xf8] sm:$0xff]
        %2748 = vmatprep.subr.mxu0 %v2717
        %2749 = vmatpush1.msra.mxu0 %v2716
        %2750 = vmatprep.subr.mxu0 %v2719
        %2751 = vmatpush1.msra.mxu0 %v2718
        %2752 = vmatprep.subr.mxu0 %v2721
        %2753 = vmatpush1.msra.mxu0 %v2720
        %2754 = vmatprep.subr.mxu0 %v2723
        %2755 = vmatpush1.msra.mxu0 %v2722
        %2756 = vmatprep.subr.mxu0 %v2725
        %2757 = vmatpush1.msra.mxu0 %v2724
        %2758 = vmatprep.subr.mxu0 %v2727
        %2759 = vmatpush1.msra.mxu0 %v2726
        %2760 = vmatprep.subr.mxu0 %v2729
        %2761 = vmatpush1.msra.mxu0 %v2728
        %2762 = vmatprep.subr.mxu0 %v2731
        %2763 = vmatpush1.msra.mxu0 %v2730
        %2764 = vmatprep.subr.mxu0 %v2733
        %2765 = vmatpush1.msra.mxu0 %v2732
        %2766 = vmatprep.subr.mxu0 %v2735
        %2767 = vmatpush1.msra.mxu0 %v2734
        %2768 = vmatprep.subr.mxu0 %v2737
        %2769 = vmatpush1.msra.mxu0 %v2736
        %2770 = vmatprep.subr.mxu0 %v2739
        %2771 = vmatpush1.msra.mxu0 %v2738
        %2772 = vmatprep.subr.mxu0 %v2741
        %2773 = vmatpush1.msra.mxu0 %v2740
        %2774 = vmatprep.subr.mxu0 %v2743
        %2775 = vmatpush1.msra.mxu0 %v2742
        %2776 = vmatprep.subr.mxu0 %v2745
        %2777 = vmatpush1.msra.mxu0 %v2744
        %2778 = vmatprep.subr.mxu0 %v2747
        %2779 = vmatpush1.msra.mxu0 %v2746
        %2780 = vmatprep.subr.mxu0 0.0
        %2781 = vmatpush1.msra.mxu0 0.0
        %2782 = vmatprep.subr.mxu0 0.0
        %2783 = vmatpush1.msra.mxu0 0.0
        %2784 = vmatprep.subr.mxu0 0.0
        %2785 = vmatpush1.msra.mxu0 0.0
        %2786 = vmatprep.subr.mxu0 0.0
        %2787 = vmatpush1.msra.mxu0 0.0
        %2788 = vmatprep.subr.mxu0 0.0
        %2789 = vmatpush1.msra.mxu0 0.0
        %2790 = vmatprep.subr.mxu0 0.0
        %2791 = vmatpush1.msra.mxu0 0.0
        %2792 = vmatprep.subr.mxu0 0.0
        %2793 = vmatpush1.msra.mxu0 0.0
        %2794 = vmatprep.subr.mxu0 0.0
        %2795 = vmatpush1.msra.mxu0 0.0
        %2796 = vmatprep.subr.mxu0 0.0
        %2797 = vmatpush1.msra.mxu0 0.0
        %2798 = vmatprep.subr.mxu0 0.0
        %2799 = vmatpush1.msra.mxu0 0.0
        %2800 = vmatprep.subr.mxu0 0.0
        %2801 = vmatpush1.msra.mxu0 0.0
        %2802 = vmatprep.subr.mxu0 0.0
        %2803 = vmatpush1.msra.mxu0 0.0
        %2804 = vmatprep.subr.mxu0 0.0
        %2805 = vmatpush1.msra.mxu0 0.0
        %2806 = vmatprep.subr.mxu0 0.0
        %2807 = vmatpush1.msra.mxu0 0.0
        %2808 = vmatprep.subr.mxu0 0.0
        %2809 = vmatpush1.msra.mxu0 0.0
        %2810 = vmatprep.subr.mxu0 0.0
        %2811 = vmatpush1.msra.mxu0 0.0
        %2812 = vmatprep.mubr.f32.mxu0 0.0
        %2813 = vmatmul.mubr.f32.gmra.mrb[0].mxu0 %v2571
        %v2814 = vpop.f32.mrb[0].mxu0
        %v2815 = vadd.f32 0.0, %v2814
        %v2816 = vpop.f32.mrb[0].mxu0
        %v2817 = vadd.f32 0.0, %v2816
        %2818 = vmatprep.mubr.f32.mxu0 0.0
        %2819 = vmatmul.mubr.f32.gmra.mrb[0].mxu0 %v2576
        %v2820 = vpop.f32.mrb[0].mxu0
        %v2821 = vadd.f32 0.0, %v2820
        %v2822 = vpop.f32.mrb[0].mxu0
        %v2823 = vadd.f32 0.0, %v2822
        %2824 = vmatprep.mubr.f32.mxu0 0.0
        %2825 = vmatmul.mubr.f32.gmra.mrb[0].mxu0 %v2581
        %v2826 = vpop.f32.mrb[0].mxu0
        %v2827 = vadd.f32 0.0, %v2826
        %v2828 = vpop.f32.mrb[0].mxu0
        %v2829 = vadd.f32 0.0, %v2828
        %2830 = vmatprep.mubr.f32.mxu0 0.0
        %2831 = vmatmul.mubr.f32.gmra.mrb[0].mxu0 %v2586
        %v2832 = vpop.f32.mrb[0].mxu0
        %v2833 = vadd.f32 0.0, %v2832
        %v2834 = vpop.f32.mrb[0].mxu0
        %v2835 = vadd.f32 0.0, %v2834
        %2836 = vdwg.mxu0
        %s2837 = scalar_lea.vmem %s2, 32
        %v2838 = vld [vmem:[%s2837] sm:$0xff]
        %v2839 = vld [vmem:[%s2837 + $0x8] sm:$0xff]
        %v2840 = vld [vmem:[%s2837 + $0x10] sm:$0xff]
        %v2841 = vld [vmem:[%s2837 + $0x18] sm:$0xff]
        %vm2842 = vcmask 261120
        %v2844 = vsel %vm2842, %v2838, 0
        %v2847 = vsel %vm2842, %v2839, 0
        %v2850 = vsel %vm2842, %v2840, 0
        %v2853 = vsel %vm2842, %v2841, 0
        %2855 = vmatprep.subr.mxu0 %v2817
        %2856 = vmatpush1.msra.mxu0 %v2815
        %2857 = vmatprep.subr.mxu0 %v2823
        %2858 = vmatpush1.msra.mxu0 %v2821
        %2859 = vmatprep.subr.mxu0 %v2829
        %2860 = vmatpush1.msra.mxu0 %v2827
        %2861 = vmatprep.subr.mxu0 %v2835
        %2862 = vmatpush1.msra.mxu0 %v2833
        %2863 = vmatprep.subr.mxu0 0.0
        %2864 = vmatpush1.msra.mxu0 0.0
        %2865 = vmatprep.subr.mxu0 0.0
        %2866 = vmatpush1.msra.mxu0 0.0
        %2867 = vmatprep.subr.mxu0 0.0
        %2868 = vmatpush1.msra.mxu0 0.0
        %2869 = vmatprep.subr.mxu0 0.0
        %2870 = vmatpush1.msra.mxu0 0.0
        %2871 = vmatprep.subr.mxu0 0.0
        %2872 = vmatpush1.msra.mxu0 0.0
        %2873 = vmatprep.subr.mxu0 0.0
        %2874 = vmatpush1.msra.mxu0 0.0
        %2875 = vmatprep.subr.mxu0 0.0
        %2876 = vmatpush1.msra.mxu0 0.0
        %2877 = vmatprep.subr.mxu0 0.0
        %2878 = vmatpush1.msra.mxu0 0.0
        %2879 = vmatprep.subr.mxu0 0.0
        %2880 = vmatpush1.msra.mxu0 0.0
        %2881 = vmatprep.subr.mxu0 0.0
        %2882 = vmatpush1.msra.mxu0 0.0
        %2883 = vmatprep.subr.mxu0 0.0
        %2884 = vmatpush1.msra.mxu0 0.0
        %2885 = vmatprep.subr.mxu0 0.0
        %2886 = vmatpush1.msra.mxu0 0.0
        %2887 = vmatprep.subr.mxu0 0.0
        %2888 = vmatpush1.msra.mxu0 0.0
        %2889 = vmatprep.subr.mxu0 0.0
        %2890 = vmatpush1.msra.mxu0 0.0
        %2891 = vmatprep.subr.mxu0 0.0
        %2892 = vmatpush1.msra.mxu0 0.0
        %2893 = vmatprep.subr.mxu0 0.0
        %2894 = vmatpush1.msra.mxu0 0.0
        %2895 = vmatprep.subr.mxu0 0.0
        %2896 = vmatpush1.msra.mxu0 0.0
        %2897 = vmatprep.subr.mxu0 0.0
        %2898 = vmatpush1.msra.mxu0 0.0
        %2899 = vmatprep.subr.mxu0 0.0
        %2900 = vmatpush1.msra.mxu0 0.0
        %2901 = vmatprep.subr.mxu0 0.0
        %2902 = vmatpush1.msra.mxu0 0.0
        %2903 = vmatprep.subr.mxu0 0.0
        %2904 = vmatpush1.msra.mxu0 0.0
        %2905 = vmatprep.subr.mxu0 0.0
        %2906 = vmatpush1.msra.mxu0 0.0
        %2907 = vmatprep.subr.mxu0 0.0
        %2908 = vmatpush1.msra.mxu0 0.0
        %2909 = vmatprep.subr.mxu0 0.0
        %2910 = vmatpush1.msra.mxu0 0.0
        %2911 = vmatprep.subr.mxu0 0.0
        %2912 = vmatpush1.msra.mxu0 0.0
        %2913 = vmatprep.subr.mxu0 0.0
        %2914 = vmatpush1.msra.mxu0 0.0
        %2915 = vmatprep.subr.mxu0 0.0
        %2916 = vmatpush1.msra.mxu0 0.0
        %2917 = vmatprep.subr.mxu0 0.0
        %2918 = vmatpush1.msra.mxu0 0.0
        %2919 = vmatprep.mubr.f32.mxu0 0.0
        %2920 = vmatmul.mubr.f32.gmra.mrb[0].mxu0 %v2844
        %v2921 = vpop.f32.mrb[0].mxu0
        %v2922 = vadd.f32 0.0, %v2921
        %v2923 = vpop.f32.mrb[0].mxu0
        %v2924 = vadd.f32 0.0, %v2923
        %2925 = vmatprep.mubr.f32.mxu0 0.0
        %2926 = vmatmul.mubr.f32.gmra.mrb[0].mxu0 %v2847
        %v2927 = vpop.f32.mrb[0].mxu0
        %v2928 = vadd.f32 0.0, %v2927
        %v2929 = vpop.f32.mrb[0].mxu0
        %v2930 = vadd.f32 0.0, %v2929
        %2931 = vmatprep.mubr.f32.mxu0 0.0
        %2932 = vmatmul.mubr.f32.gmra.mrb[0].mxu0 %v2850
        %v2933 = vpop.f32.mrb[0].mxu0
        %v2934 = vadd.f32 0.0, %v2933
        %v2935 = vpop.f32.mrb[0].mxu0
        %v2936 = vadd.f32 0.0, %v2935
        %2937 = vmatprep.mubr.f32.mxu0 0.0
        %2938 = vmatmul.mubr.f32.gmra.mrb[0].mxu0 %v2853
        %v2939 = vpop.f32.mrb[0].mxu0
        %v2940 = vadd.f32 0.0, %v2939
        %v2941 = vpop.f32.mrb[0].mxu0
        %v2942 = vadd.f32 0.0, %v2941
        %2943 = vdwg.mxu0
        %v2945 = vsel %vm2842, %v2711, 0
        %v2948 = vsel %vm2842, %v2712, 0
        %v2951 = vsel %vm2842, %v2713, 0
        %v2954 = vsel %vm2842, %v2714, 0
        %2956 = vmatprep.subr.mxu0 %v2691
        %2957 = vmatpush1.msra.mxu0 %v2689
        %2958 = vmatprep.subr.mxu0 %v2697
        %2959 = vmatpush1.msra.mxu0 %v2695
        %2960 = vmatprep.subr.mxu0 %v2703
        %2961 = vmatpush1.msra.mxu0 %v2701
        %2962 = vmatprep.subr.mxu0 %v2709
        %2963 = vmatpush1.msra.mxu0 %v2707
        %2964 = vmatprep.subr.mxu0 0.0
        %2965 = vmatpush1.msra.mxu0 0.0
        %2966 = vmatprep.subr.mxu0 0.0
        %2967 = vmatpush1.msra.mxu0 0.0
        %2968 = vmatprep.subr.mxu0 0.0
        %2969 = vmatpush1.msra.mxu0 0.0
        %2970 = vmatprep.subr.mxu0 0.0
        %2971 = vmatpush1.msra.mxu0 0.0
        %2972 = vmatprep.subr.mxu0 0.0
        %2973 = vmatpush1.msra.mxu0 0.0
        %2974 = vmatprep.subr.mxu0 0.0
        %2975 = vmatpush1.msra.mxu0 0.0
        %2976 = vmatprep.subr.mxu0 0.0
        %2977 = vmatpush1.msra.mxu0 0.0
        %2978 = vmatprep.subr.mxu0 0.0
        %2979 = vmatpush1.msra.mxu0 0.0
        %2980 = vmatprep.subr.mxu0 0.0
        %2981 = vmatpush1.msra.mxu0 0.0
        %2982 = vmatprep.subr.mxu0 0.0
        %2983 = vmatpush1.msra.mxu0 0.0
        %2984 = vmatprep.subr.mxu0 0.0
        %2985 = vmatpush1.msra.mxu0 0.0
        %2986 = vmatprep.subr.mxu0 0.0
        %2987 = vmatpush1.msra.mxu0 0.0
        %2988 = vmatprep.subr.mxu0 0.0
        %2989 = vmatpush1.msra.mxu0 0.0
        %2990 = vmatprep.subr.mxu0 0.0
        %2991 = vmatpush1.msra.mxu0 0.0
        %2992 = vmatprep.subr.mxu0 0.0
        %2993 = vmatpush1.msra.mxu0 0.0
        %2994 = vmatprep.subr.mxu0 0.0
        %2995 = vmatpush1.msra.mxu0 0.0
        %2996 = vmatprep.subr.mxu0 0.0
        %2997 = vmatpush1.msra.mxu0 0.0
        %2998 = vmatprep.subr.mxu0 0.0
        %2999 = vmatpush1.msra.mxu0 0.0
        %3000 = vmatprep.subr.mxu0 0.0
        %3001 = vmatpush1.msra.mxu0 0.0
        %3002 = vmatprep.subr.mxu0 0.0
        %3003 = vmatpush1.msra.mxu0 0.0
        %3004 = vmatprep.subr.mxu0 0.0
        %3005 = vmatpush1.msra.mxu0 0.0
        %3006 = vmatprep.subr.mxu0 0.0
        %3007 = vmatpush1.msra.mxu0 0.0
        %3008 = vmatprep.subr.mxu0 0.0
        %3009 = vmatpush1.msra.mxu0 0.0
        %3010 = vmatprep.subr.mxu0 0.0
        %3011 = vmatpush1.msra.mxu0 0.0
        %3012 = vmatprep.subr.mxu0 0.0
        %3013 = vmatpush1.msra.mxu0 0.0
        %3014 = vmatprep.subr.mxu0 0.0
        %3015 = vmatpush1.msra.mxu0 0.0
        %3016 = vmatprep.subr.mxu0 0.0
        %3017 = vmatpush1.msra.mxu0 0.0
        %3018 = vmatprep.subr.mxu0 0.0
        %3019 = vmatpush1.msra.mxu0 0.0
        %3020 = vmatprep.mubr.f32.mxu0 0.0
        %3021 = vmatmul.mubr.f32.gmra.mrb[0].mxu0 %v2945
        %v3022 = vpop.f32.mrb[0].mxu0
        %v3023 = vadd.f32 %v2922, %v3022
        %v3024 = vpop.f32.mrb[0].mxu0
        %v3025 = vadd.f32 %v2924, %v3024
        %3026 = vmatprep.mubr.f32.mxu0 0.0
        %3027 = vmatmul.mubr.f32.gmra.mrb[0].mxu0 %v2948
        %v3028 = vpop.f32.mrb[0].mxu0
        %v3029 = vadd.f32 %v2928, %v3028
        %v3030 = vpop.f32.mrb[0].mxu0
        %v3031 = vadd.f32 %v2930, %v3030
        %3032 = vmatprep.mubr.f32.mxu0 0.0
        %3033 = vmatmul.mubr.f32.gmra.mrb[0].mxu0 %v2951
        %v3034 = vpop.f32.mrb[0].mxu0
        %v3035 = vadd.f32 %v2934, %v3034
        %v3036 = vpop.f32.mrb[0].mxu0
        %v3037 = vadd.f32 %v2936, %v3036
        %3038 = vmatprep.mubr.f32.mxu0 0.0
        %3039 = vmatmul.mubr.f32.gmra.mrb[0].mxu0 %v2954
        %v3040 = vpop.f32.mrb[0].mxu0
        %v3041 = vadd.f32 %v2940, %v3040
        %v3042 = vpop.f32.mrb[0].mxu0
        %v3043 = vadd.f32 %v2942, %v3042
        %3044 = vdwg.mxu0
        %s3045 = scalar_lea.vmem [#allocation4], 512
        %v3046 = vld [vmem:[%s3045] sm:$0xff]
        %v3047 = vld [vmem:[%s3045 + $0x8] sm:$0xff]
        %v3048 = vld [vmem:[%s3045 + $0x10] sm:$0xff]
        %v3049 = vld [vmem:[%s3045 + $0x18] sm:$0xff]
        %v3050 = vld [vmem:[%s3045 + $0x20] sm:$0xff]
        %v3051 = vld [vmem:[%s3045 + $0x28] sm:$0xff]
        %v3052 = vld [vmem:[%s3045 + $0x30] sm:$0xff]
        %v3053 = vld [vmem:[%s3045 + $0x38] sm:$0xff]
        %v3054 = vld [vmem:[%s3045 + $0x40] sm:$0xff]
        %v3055 = vld [vmem:[%s3045 + $0x48] sm:$0xff]
        %v3056 = vld [vmem:[%s3045 + $0x50] sm:$0xff]
        %v3057 = vld [vmem:[%s3045 + $0x58] sm:$0xff]
        %v3058 = vld [vmem:[%s3045 + $0x60] sm:$0xff]
        %v3059 = vld [vmem:[%s3045 + $0x68] sm:$0xff]
        %v3060 = vld [vmem:[%s3045 + $0x70] sm:$0xff]
        %v3061 = vld [vmem:[%s3045 + $0x78] sm:$0xff]
        %v3062 = vld [vmem:[%s3045 + $0x80] sm:$0xff]
        %v3063 = vld [vmem:[%s3045 + $0x88] sm:$0xff]
        %v3064 = vld [vmem:[%s3045 + $0x90] sm:$0xff]
        %v3065 = vld [vmem:[%s3045 + $0x98] sm:$0xff]
        %v3066 = vld [vmem:[%s3045 + $0xa0] sm:$0xff]
        %v3067 = vld [vmem:[%s3045 + $0xa8] sm:$0xff]
        %v3068 = vld [vmem:[%s3045 + $0xb0] sm:$0xff]
        %v3069 = vld [vmem:[%s3045 + $0xb8] sm:$0xff]
        %v3070 = vld [vmem:[%s3045 + $0xc0] sm:$0xff]
        %v3071 = vld [vmem:[%s3045 + $0xc8] sm:$0xff]
        %v3072 = vld [vmem:[%s3045 + $0xd0] sm:$0xff]
        %v3073 = vld [vmem:[%s3045 + $0xd8] sm:$0xff]
        %v3074 = vld [vmem:[%s3045 + $0xe0] sm:$0xff]
        %v3075 = vld [vmem:[%s3045 + $0xe8] sm:$0xff]
        %v3076 = vld [vmem:[%s3045 + $0xf0] sm:$0xff]
        %v3077 = vld [vmem:[%s3045 + $0xf8] sm:$0xff]
        %3078 = vmatprep.subr.mxu0 %v3047
        %3079 = vmatpush1.msra.mxu0 %v3046
        %3080 = vmatprep.subr.mxu0 %v3049
        %3081 = vmatpush1.msra.mxu0 %v3048
        %3082 = vmatprep.subr.mxu0 %v3051
        %3083 = vmatpush1.msra.mxu0 %v3050
        %3084 = vmatprep.subr.mxu0 %v3053
        %3085 = vmatpush1.msra.mxu0 %v3052
        %3086 = vmatprep.subr.mxu0 %v3055
        %3087 = vmatpush1.msra.mxu0 %v3054
        %3088 = vmatprep.subr.mxu0 %v3057
        %3089 = vmatpush1.msra.mxu0 %v3056
        %3090 = vmatprep.subr.mxu0 %v3059
        %3091 = vmatpush1.msra.mxu0 %v3058
        %3092 = vmatprep.subr.mxu0 %v3061
        %3093 = vmatpush1.msra.mxu0 %v3060
        %3094 = vmatprep.subr.mxu0 %v3063
        %3095 = vmatpush1.msra.mxu0 %v3062
        %3096 = vmatprep.subr.mxu0 %v3065
        %3097 = vmatpush1.msra.mxu0 %v3064
        %3098 = vmatprep.subr.mxu0 %v3067
        %3099 = vmatpush1.msra.mxu0 %v3066
        %3100 = vmatprep.subr.mxu0 %v3069
        %3101 = vmatpush1.msra.mxu0 %v3068
        %3102 = vmatprep.subr.mxu0 %v3071
        %3103 = vmatpush1.msra.mxu0 %v3070
        %3104 = vmatprep.subr.mxu0 %v3073
        %3105 = vmatpush1.msra.mxu0 %v3072
        %3106 = vmatprep.subr.mxu0 %v3075
        %3107 = vmatpush1.msra.mxu0 %v3074
        %3108 = vmatprep.subr.mxu0 %v3077
        %3109 = vmatpush1.msra.mxu0 %v3076
        %3110 = vmatprep.subr.mxu0 0.0
        %3111 = vmatpush1.msra.mxu0 0.0
        %3112 = vmatprep.subr.mxu0 0.0
        %3113 = vmatpush1.msra.mxu0 0.0
        %3114 = vmatprep.subr.mxu0 0.0
        %3115 = vmatpush1.msra.mxu0 0.0
        %3116 = vmatprep.subr.mxu0 0.0
        %3117 = vmatpush1.msra.mxu0 0.0
        %3118 = vmatprep.subr.mxu0 0.0
        %3119 = vmatpush1.msra.mxu0 0.0
        %3120 = vmatprep.subr.mxu0 0.0
        %3121 = vmatpush1.msra.mxu0 0.0
        %3122 = vmatprep.subr.mxu0 0.0
        %3123 = vmatpush1.msra.mxu0 0.0
        %3124 = vmatprep.subr.mxu0 0.0
        %3125 = vmatpush1.msra.mxu0 0.0
        %3126 = vmatprep.subr.mxu0 0.0
        %3127 = vmatpush1.msra.mxu0 0.0
        %3128 = vmatprep.subr.mxu0 0.0
        %3129 = vmatpush1.msra.mxu0 0.0
        %3130 = vmatprep.subr.mxu0 0.0
        %3131 = vmatpush1.msra.mxu0 0.0
        %3132 = vmatprep.subr.mxu0 0.0
        %3133 = vmatpush1.msra.mxu0 0.0
        %3134 = vmatprep.subr.mxu0 0.0
        %3135 = vmatpush1.msra.mxu0 0.0
        %3136 = vmatprep.subr.mxu0 0.0
        %3137 = vmatpush1.msra.mxu0 0.0
        %3138 = vmatprep.subr.mxu0 0.0
        %3139 = vmatpush1.msra.mxu0 0.0
        %3140 = vmatprep.subr.mxu0 0.0
        %3141 = vmatpush1.msra.mxu0 0.0
        %3142 = vmatprep.mubr.f32.mxu0 0.0
        %3143 = vmatmul.mubr.f32.gmra.mrb[0].mxu0 %v2571
        %v3144 = vpop.f32.mrb[0].mxu0
        %v3145 = vadd.f32 0.0, %v3144
        %v3146 = vpop.f32.mrb[0].mxu0
        %v3147 = vadd.f32 0.0, %v3146
        %3148 = vmatprep.mubr.f32.mxu0 0.0
        %3149 = vmatmul.mubr.f32.gmra.mrb[0].mxu0 %v2576
        %v3150 = vpop.f32.mrb[0].mxu0
        %v3151 = vadd.f32 0.0, %v3150
        %v3152 = vpop.f32.mrb[0].mxu0
        %v3153 = vadd.f32 0.0, %v3152
        %3154 = vmatprep.mubr.f32.mxu0 0.0
        %3155 = vmatmul.mubr.f32.gmra.mrb[0].mxu0 %v2581
        %v3156 = vpop.f32.mrb[0].mxu0
        %v3157 = vadd.f32 0.0, %v3156
        %v3158 = vpop.f32.mrb[0].mxu0
        %v3159 = vadd.f32 0.0, %v3158
        %3160 = vmatprep.mubr.f32.mxu0 0.0
        %3161 = vmatmul.mubr.f32.gmra.mrb[0].mxu0 %v2586
        %v3162 = vpop.f32.mrb[0].mxu0
        %v3163 = vadd.f32 0.0, %v3162
        %v3164 = vpop.f32.mrb[0].mxu0
        %v3165 = vadd.f32 0.0, %v3164
        %3166 = vdwg.mxu0
        %s3167 = scalar_lea.vmem %s2, 64
        %v3168 = vld [vmem:[%s3167] sm:$0xff]
        %v3169 = vld [vmem:[%s3167 + $0x8] sm:$0xff]
        %v3170 = vld [vmem:[%s3167 + $0x10] sm:$0xff]
        %v3171 = vld [vmem:[%s3167 + $0x18] sm:$0xff]
        %v3173 = vsel %vm2842, %v3168, 0
        %v3176 = vsel %vm2842, %v3169, 0
        %v3179 = vsel %vm2842, %v3170, 0
        %v3182 = vsel %vm2842, %v3171, 0
        %3184 = vmatprep.subr.mxu0 %v3147
        %3185 = vmatpush1.msra.mxu0 %v3145
        %3186 = vmatprep.subr.mxu0 %v3153
        %3187 = vmatpush1.msra.mxu0 %v3151
        %3188 = vmatprep.subr.mxu0 %v3159
        %3189 = vmatpush1.msra.mxu0 %v3157
        %3190 = vmatprep.subr.mxu0 %v3165
        %3191 = vmatpush1.msra.mxu0 %v3163
        %3192 = vmatprep.subr.mxu0 0.0
        %3193 = vmatpush1.msra.mxu0 0.0
        %3194 = vmatprep.subr.mxu0 0.0
        %3195 = vmatpush1.msra.mxu0 0.0
        %3196 = vmatprep.subr.mxu0 0.0
        %3197 = vmatpush1.msra.mxu0 0.0
        %3198 = vmatprep.subr.mxu0 0.0
        %3199 = vmatpush1.msra.mxu0 0.0
        %3200 = vmatprep.subr.mxu0 0.0
        %3201 = vmatpush1.msra.mxu0 0.0
        %3202 = vmatprep.subr.mxu0 0.0
        %3203 = vmatpush1.msra.mxu0 0.0
        %3204 = vmatprep.subr.mxu0 0.0
        %3205 = vmatpush1.msra.mxu0 0.0
        %3206 = vmatprep.subr.mxu0 0.0
        %3207 = vmatpush1.msra.mxu0 0.0
        %3208 = vmatprep.subr.mxu0 0.0
        %3209 = vmatpush1.msra.mxu0 0.0
        %3210 = vmatprep.subr.mxu0 0.0
        %3211 = vmatpush1.msra.mxu0 0.0
        %3212 = vmatprep.subr.mxu0 0.0
        %3213 = vmatpush1.msra.mxu0 0.0
        %3214 = vmatprep.subr.mxu0 0.0
        %3215 = vmatpush1.msra.mxu0 0.0
        %3216 = vmatprep.subr.mxu0 0.0
        %3217 = vmatpush1.msra.mxu0 0.0
        %3218 = vmatprep.subr.mxu0 0.0
        %3219 = vmatpush1.msra.mxu0 0.0
        %3220 = vmatprep.subr.mxu0 0.0
        %3221 = vmatpush1.msra.mxu0 0.0
        %3222 = vmatprep.subr.mxu0 0.0
        %3223 = vmatpush1.msra.mxu0 0.0
        %3224 = vmatprep.subr.mxu0 0.0
        %3225 = vmatpush1.msra.mxu0 0.0
        %3226 = vmatprep.subr.mxu0 0.0
        %3227 = vmatpush1.msra.mxu0 0.0
        %3228 = vmatprep.subr.mxu0 0.0
        %3229 = vmatpush1.msra.mxu0 0.0
        %3230 = vmatprep.subr.mxu0 0.0
        %3231 = vmatpush1.msra.mxu0 0.0
        %3232 = vmatprep.subr.mxu0 0.0
        %3233 = vmatpush1.msra.mxu0 0.0
        %3234 = vmatprep.subr.mxu0 0.0
        %3235 = vmatpush1.msra.mxu0 0.0
        %3236 = vmatprep.subr.mxu0 0.0
        %3237 = vmatpush1.msra.mxu0 0.0
        %3238 = vmatprep.subr.mxu0 0.0
        %3239 = vmatpush1.msra.mxu0 0.0
        %3240 = vmatprep.subr.mxu0 0.0
        %3241 = vmatpush1.msra.mxu0 0.0
        %3242 = vmatprep.subr.mxu0 0.0
        %3243 = vmatpush1.msra.mxu0 0.0
        %3244 = vmatprep.subr.mxu0 0.0
        %3245 = vmatpush1.msra.mxu0 0.0
        %3246 = vmatprep.subr.mxu0 0.0
        %3247 = vmatpush1.msra.mxu0 0.0
        %3248 = vmatprep.mubr.f32.mxu0 0.0
        %3249 = vmatmul.mubr.f32.gmra.mrb[0].mxu0 %v3173
        %v3250 = vpop.f32.mrb[0].mxu0
        %v3251 = vadd.f32 0.0, %v3250
        %v3252 = vpop.f32.mrb[0].mxu0
        %v3253 = vadd.f32 0.0, %v3252
        %3254 = vmatprep.mubr.f32.mxu0 0.0
        %3255 = vmatmul.mubr.f32.gmra.mrb[0].mxu0 %v3176
        %v3256 = vpop.f32.mrb[0].mxu0
        %v3257 = vadd.f32 0.0, %v3256
        %v3258 = vpop.f32.mrb[0].mxu0
        %v3259 = vadd.f32 0.0, %v3258
        %3260 = vmatprep.mubr.f32.mxu0 0.0
        %3261 = vmatmul.mubr.f32.gmra.mrb[0].mxu0 %v3179
        %v3262 = vpop.f32.mrb[0].mxu0
        %v3263 = vadd.f32 0.0, %v3262
        %v3264 = vpop.f32.mrb[0].mxu0
        %v3265 = vadd.f32 0.0, %v3264
        %3266 = vmatprep.mubr.f32.mxu0 0.0
        %3267 = vmatmul.mubr.f32.gmra.mrb[0].mxu0 %v3182
        %v3268 = vpop.f32.mrb[0].mxu0
        %v3269 = vadd.f32 0.0, %v3268
        %v3270 = vpop.f32.mrb[0].mxu0
        %v3271 = vadd.f32 0.0, %v3270
        %3272 = vdwg.mxu0
        %v3273 = vadd.f32 %v3023, %v3251
        %v3274 = vadd.f32 %v3025, %v3253
        %v3275 = vadd.f32 %v3029, %v3257
        %v3276 = vadd.f32 %v3031, %v3259
        %v3277 = vadd.f32 %v3035, %v3263
        %v3278 = vadd.f32 %v3037, %v3265
        %v3279 = vadd.f32 %v3041, %v3269
        %v3280 = vadd.f32 %v3043, %v3271
        %v3282 = vlaneseq
        %v3283 = vshrl.u32 %v3282, 7
        %v3284 = vsub.s32 0, %v3283
        %v3285 = vrot.slane %v2589, %v3284
        %v3286 = vlaneseq
        %v3287 = vshrl.u32 %v3286, 7
        %v3288 = vsub.s32 1, %v3287
        %v3289 = vrot.slane %v2589, %v3288
        %v3292 = vadd.f32 %v3273, %v3285
        %v3293 = vadd.f32 %v3274, %v3289
        %v3294 = vadd.f32 %v3275, %v3285
        %v3295 = vadd.f32 %v3276, %v3289
        %v3296 = vadd.f32 %v3277, %v3285
        %v3297 = vadd.f32 %v3278, %v3289
        %v3298 = vadd.f32 %v3279, %v3285
        %v3299 = vadd.f32 %v3280, %v3289
        %v3300 = vmax.f32 %v3292, 0.0
        %v3301 = vmax.f32 %v3293, 0.0
        %v3302 = vmax.f32 %v3294, 0.0
        %v3303 = vmax.f32 %v3295, 0.0
        %v3304 = vmax.f32 %v3296, 0.0
        %v3305 = vmax.f32 %v3297, 0.0
        %v3306 = vmax.f32 %v3298, 0.0
        %v3307 = vmax.f32 %v3299, 0.0
        %3308 = vst [vmem:[%s362] sm:$0xff] %v3300
        %3309 = vst [vmem:[%s362 + $0x8] sm:$0xff] %v3301
        %3310 = vst [vmem:[%s362 + $0x10] sm:$0xff] %v3302
        %3311 = vst [vmem:[%s362 + $0x18] sm:$0xff] %v3303
        %3312 = vst [vmem:[%s362 + $0x20] sm:$0xff] %v3304
        %3313 = vst [vmem:[%s362 + $0x28] sm:$0xff] %v3305
        %3314 = vst [vmem:[%s362 + $0x30] sm:$0xff] %v3306
        %3315 = vst [vmem:[%s362 + $0x38] sm:$0xff] %v3307
        %p3316 = scmp.lt.s32.totalorder %s22, 1
        %s3317 = scalar_select %p3316, %s22, 1
        %s3318 = smul.addr %s3317, 8
        %s3319 = smul.addr %s3318, 8
        %s3320 = scalar_lea.vmem %s9, %s3319
        // Predicated region
        $region65: #{_lambda_.1} parent=55 // pred_check
          %p3321 = pneg %p234
        $region66: #{_lambda_.1} parent=55 // pred_check_branch
          %3323 = sbr.rel (%p3321) target = $region68
        $region67: #{_lambda_.1} parent=55 // pred_region
          _
        $region68: #{_lambda_.1} parent=55 // pred_fallthru
          _
      $region56: #{_lambda_.1} parent=5 // pred_fallthru
        _
      %p3324 = scmp.le.s32.totalorder 2, %s17
      // Predicated region
      $region69: #{_lambda_.1} parent=5 // pred_check
        %p3325 = pneg %p3324
      $region70: #{_lambda_.1} parent=5 // pred_check_branch
        %3327 = sbr.rel (%p3325) target = $region72
      $region71: #{_lambda_.1} parent=5 // pred_region
        %s3328 = ssub.s32 %s17, 2
        // Predicated region
        $region73: #{_lambda_.1} parent=71 // pred_check
          %p3329 = pneg %p240
        $region74: #{_lambda_.1} parent=71 // pred_check_branch
          %3331 = sbr.rel (%p3329) target = $region76
        $region75: #{_lambda_.1} parent=71 // pred_region
          %p3332 = scmp.lt.s32.totalorder %s23, 1
          %s3333 = scalar_select %p3332, %s23, 1
          %s3334 = smul.addr %s3333, 8
          %s3335 = smul.addr %s3334, 8
          %s3336 = scalar_lea.vmem %s9, %s3335
        $region76: #{_lambda_.1} parent=71 // pred_fallthru
          _
      $region72: #{_lambda_.1} parent=5 // pred_fallthru
        _
    $region6: #{_lambda_.1} parent=1 // loop_footer
      %s21 = sadd.s32 1, %s17
    $region7: #{_lambda_.1} parent=1 // loop_footer_branch
      %16 = sbr.rel target = $region3
    $region8: #{_lambda_.1} parent=1 // loop_exit
      _
    %3337 = vsyncpa [#allocation3], 1
    %s3338 = scalar_lea.sflag [#allocation3], 1
    %3339 = vsyncpa %s3338, 1
    %3340 = vsyncpa [#allocation5], 1

</llo_original>
